<compile_context>
chip_gen: v5e
topology: v5e:2x2
jax: 0.10.0
libtpu: 0.0.40
codegen_flags: <defaults>
</compile_context>

<pallas_src>
import jax
import jax.numpy as jnp
from jax.experimental import pallas as pl
from jax.experimental.pallas import tpu as pltpu

# ----------------------------- sizes -----------------------------
B = 2      # batch
T = 8      # dec_seq_len
L = 8      # enc_seq_len
V = 64     # num_words
D = 32     # dim_word
H = 32     # hidden_size
A = 32     # attn_input_size (must equal hidden_size for BUTD)
S = 32     # attn_size
NEG = -1e18


# ----------------------------- kernel -----------------------------
def butd_kernel(inp_ref, emb_ref, glob_ref, mem_ref, mask_ref,
                wctx_ref, vs_ref,
                wa_cat_ref, wa_e_ref, wa_g_ref, ba_ref,
                wfused_ref, wlm_ref, bl_ref,
                wfc_ref, bfc_ref,
                out_ref):
    f32 = jnp.float32
    bf16 = jnp.bfloat16

    # ---------------- hoisted, once per invocation ----------------
    mem = mem_ref[...]                                             # (B, L, A) f32 (values)
    # gen_memory_key_value: memory_keys = attn_linear_context(enc_memories)
    mk = jnp.dot(mem.reshape(B * L, A).astype(bf16), wctx_ref[...],
                 preferred_element_type=f32).reshape(B, L, S)      # (B, L, S)
    # additive softmax mask bias (replaces per-step compare+select)
    mask_bias = jnp.where(mask_ref[...] == 0.0, NEG, 0.0)          # (B, L)
    vs = vs_ref[...]                                               # (1, S)

    # In-kernel embedding gather (word ids from SMEM, table in VMEM), then one
    # batched (T*B, D) @ (D, 4H) projection for all steps (time-major rows).
    rows = []
    for t in range(T):
        for b in range(B):
            rows.append(emb_ref[pl.ds(inp_ref[b, t], 1), :])       # (1, D)
    emb_g = jnp.concatenate(rows, axis=0).astype(bf16)             # (T*B, D)
    emb_proj = jnp.dot(emb_g, wa_e_ref[...],
                       preferred_element_type=f32)                 # (T*B, 4H)

    # time-invariant attn-LSTM bias: enc_globals @ W_g + (b_ih + b_hh)
    glob_bias = jnp.dot(glob_ref[...].astype(bf16), wa_g_ref[...],
                        preferred_element_type=f32) + ba_ref[...]  # (B, 4H)

    wa_cat = wa_cat_ref[...]                                       # (2H, 4H)   bf16
    wfused = wfused_ref[...]                                       # (2H, 4H+S) bf16
    wlm = wlm_ref[...]                                             # (A, 4H)    bf16
    bl = bl_ref[...]                                               # (1, 4H)    f32

    # Single-tanh gate activation: lanes [2H,3H) (the 'g' gate) get tanh(x);
    # the i/f/o lanes use sigmoid(x) = 0.5*tanh(x/2) + 0.5. Constants hoisted.
    lane = jax.lax.broadcasted_iota(jnp.int32, (B, 4 * H), 1)
    g_lane = jnp.logical_and(lane >= 2 * H, lane < 3 * H)
    gscale = jnp.where(g_lane, 1.0, 0.5).astype(f32)               # pre- and post-scale
    gbias = jnp.where(g_lane, 0.0, 0.5).astype(f32)

    def gate_act(x):
        return jnp.tanh(x * gscale) * gscale + gbias

    # init_dec_state: zeros for both LSTM cells' (h, c)
    h_a = jnp.zeros((B, H), f32); c_a = jnp.zeros((B, H), f32)
    h_l = jnp.zeros((B, H), f32); c_l = jnp.zeros((B, H), f32)

    hs = []
    for t in range(T):   # static unroll, T = 8
        # ---- attention LSTM: input = cat([h_lang_prev, enc_globals, embed_t]) ----
        xa = jnp.concatenate([h_l, h_a], axis=1).astype(bf16)      # (B, 2H)
        ga = (jnp.dot(xa, wa_cat, preferred_element_type=f32)
              + emb_proj[t * B:(t + 1) * B] + glob_bias)           # (B, 4H)
        act = gate_act(ga)
        c_a = act[:, H:2 * H] * c_a + act[:, 0:H] * act[:, 2 * H:3 * H]
        h_a = act[:, 3 * H:] * jnp.tanh(c_a)

        # ---- fused dot: [lang-LSTM h-dependent gates | attention query] ----
        hx = jnp.concatenate([h_a, h_l], axis=1).astype(bf16)      # (B, 2H)
        fused = jnp.dot(hx, wfused, preferred_element_type=f32)    # (B, 4H+S)
        glh = fused[:, :4 * H]                                     # h_a@wl_h + h_l@wl_hh
        q = fused[:, 4 * H:]                                       # h_a@w_q       (B, S)

        # ---- GlobalAttention (mlp): v^T tanh(Wq q + key), masked softmax ----
        hid = jnp.tanh(q[:, None, :] + mk)                         # (B, L, S)
        scores = jnp.sum(hid * vs[None, :, :], axis=-1) + mask_bias   # (B, L)
        m = jnp.max(scores, axis=1, keepdims=True)
        e = jnp.exp(scores - m)
        p = e * pl.reciprocal(jnp.sum(e, axis=1, keepdims=True), approx=True)
        attn_mem = jnp.sum(p[:, :, None] * mem, axis=1)            # (B, A) f32

        # ---- language LSTM: add attn_memory-dependent gate part + bias ----
        gl = (glh + jnp.dot(attn_mem.astype(bf16), wlm,
                            preferred_element_type=f32) + bl)      # (B, 4H)
        act2 = gate_act(gl)
        c_l = act2[:, H:2 * H] * c_l + act2[:, 0:H] * act2[:, 2 * H:3 * H]
        h_l = act2[:, 3 * H:] * jnp.tanh(c_l)
        hs.append(h_l)

    # ---- calc_logits_with_rnn_outs for all steps, rows in (b, t) order so the
    #      kernel output IS the module output (no wrapper transpose needed). ----
    h_all = jnp.concatenate(
        [jnp.concatenate([hs[t][b:b + 1, :] for t in range(T)], axis=0)
         for b in range(B)], axis=0).astype(bf16)                  # (B*T, H)
    out_ref[...] = (jnp.dot(h_all, wfc_ref[...], preferred_element_type=f32)
                    + bfc_ref[...])                                # (B*T, V)


# ----------------------------- wrapper -----------------------------
def prepare_butd_params(params):
    """One-time parameter plumbing (weight concat + bf16 cast); runs outside jit."""
    bf16 = jnp.bfloat16
    # Fused lang-LSTM-h / attention-query weight: [[wl_h | w_q], [wl_hh | 0]].
    w_fused = jnp.concatenate(
        [jnp.concatenate([params["wl_h"], params["w_q"]], axis=1),
         jnp.concatenate([params["wl_hh"], jnp.zeros((H, S), jnp.float32)], axis=1)],
        axis=0)                                                    # (2H, 4H+S)
    return {
        "emb":     params["emb"],                                  # f32 for dynamic row gather
        "w_ctx":   params["w_ctx"].astype(bf16),
        "v_s":     params["v_s"],
        "wa_cat":  jnp.concatenate([params["wa_hl"], params["wa_hh"]], axis=0).astype(bf16),
        "wa_e":    params["wa_e"].astype(bf16),
        "wa_g":    params["wa_g"].astype(bf16),
        "ba":      params["ba"],
        "w_fused": w_fused.astype(bf16),
        "wl_m":    params["wl_m"].astype(bf16),
        "bl":      params["bl"],
        "w_fc":    params["w_fc"].astype(bf16),
        "b_fc":    params["b_fc"],
    }


def butd_forward(prepped, inputs, enc_globals, enc_memories, enc_masks):
    smem = pl.BlockSpec(memory_space=pltpu.MemorySpace.SMEM)   # word ids (scalars)
    vmem = pl.BlockSpec(memory_space=pltpu.MemorySpace.VMEM)   # everything else, whole-array
    # Single grid-less invocation; output rows already in (b*T + t) order.
    # TODO(synk): on v7x a leading 'parallel' grid axis over batch would use
    # both TensorCores, but at B=2 there is nothing worth sharding.
    return pl.pallas_call(
        butd_kernel,
        out_shape=jax.ShapeDtypeStruct((B * T, V), jnp.float32),
        in_specs=[smem] + [vmem] * 15,
        out_specs=vmem,
    )(inputs, prepped["emb"], enc_globals, enc_memories, enc_masks,
      prepped["w_ctx"], prepped["v_s"],
      prepped["wa_cat"], prepped["wa_e"], prepped["wa_g"], prepped["ba"],
      prepped["w_fused"], prepped["wl_m"], prepped["bl"],
      prepped["w_fc"], prepped["b_fc"])


# ----------------------------- pure-JAX reference -----------------------------
def butd_reference(params, inputs, enc_globals, enc_memories, enc_masks):
    # Ground truth at explicit HIGHEST matmul precision (full f32 dots).
    P = jax.lax.Precision.HIGHEST

    def dot(a, b):
        return jnp.dot(a, b, precision=P)

    mk = jnp.einsum("bla,as->bls", enc_memories, params["w_ctx"], precision=P)
    h_a = jnp.zeros((B, H)); c_a = jnp.zeros((B, H))
    h_l = jnp.zeros((B, H)); c_l = jnp.zeros((B, H))
    outs = []
    for t in range(T):
        embed = params["emb"][inputs[:, t]]
        gates = (dot(h_l, params["wa_hl"]) + dot(enc_globals, params["wa_g"])
                 + dot(embed, params["wa_e"]) + dot(h_a, params["wa_hh"]) + params["ba"])
        i_g = jax.nn.sigmoid(gates[:, :H]); f_g = jax.nn.sigmoid(gates[:, H:2 * H])
        g_g = jnp.tanh(gates[:, 2 * H:3 * H]); o_g = jax.nn.sigmoid(gates[:, 3 * H:])
        c_a = f_g * c_a + i_g * g_g
        h_a = o_g * jnp.tanh(c_a)
        q = dot(h_a, params["w_q"])
        hid = jnp.tanh(q[:, None, :] + mk)
        scores = jnp.sum(hid * params["v_s"][None, :, :], axis=-1)
        scores = jnp.where(enc_masks == 0.0, NEG, scores)
        p = jax.nn.softmax(scores, axis=1)
        attn_mem = jnp.sum(p[:, :, None] * enc_memories, axis=1)
        gates2 = (dot(h_a, params["wl_h"]) + dot(attn_mem, params["wl_m"])
                  + dot(h_l, params["wl_hh"]) + params["bl"])
        i2 = jax.nn.sigmoid(gates2[:, :H]); f2 = jax.nn.sigmoid(gates2[:, H:2 * H])
        g2 = jnp.tanh(gates2[:, 2 * H:3 * H]); o2 = jax.nn.sigmoid(gates2[:, 3 * H:])
        c_l = f2 * c_l + i2 * g2
        h_l = o2 * jnp.tanh(c_l)
        outs.append(dot(h_l, params["w_fc"]) + params["b_fc"])
    return jnp.stack(outs, 1).reshape(B * T, V)


# ----------------------------- main -----------------------------
if __name__ == "__main__":
    key = jax.random.PRNGKey(0)
    ks = jax.random.split(key, 20)

    def rn(k, shape, scale=0.1):
        return scale * jax.random.normal(k, shape, jnp.float32)

    # Deterministic synthetic parameters. LSTM weights use small random normals
    # (in place of orthogonal init); per init_rnn_weights, bias_ih has the
    # forget-gate slice set to 1, bias_hh is folded in as 0.
    params = {
        "emb":   rn(ks[0], (V, D)),
        "w_ctx": rn(ks[1], (A, S)),          # attn_linear_context (no bias)
        "w_q":   rn(ks[2], (H, S)),          # GlobalAttention query proj (no bias)
        "v_s":   rn(ks[3], (1, S)),          # GlobalAttention score vector (no bias)
        "wa_hl": rn(ks[4], (H, 4 * H)),      # attn_lstm W_ih (h_lang segment)
        "wa_g":  rn(ks[5], (H, 4 * H)),      # attn_lstm W_ih (enc_globals segment)
        "wa_e":  rn(ks[6], (D, 4 * H)),      # attn_lstm W_ih (embed segment)
        "wa_hh": rn(ks[7], (H, 4 * H)),      # attn_lstm W_hh
        "ba":    jnp.zeros((1, 4 * H), jnp.float32).at[:, H:2 * H].set(1.0),
        "wl_h":  rn(ks[8], (H, 4 * H)),      # lang_lstm W_ih (h_attn segment)
        "wl_m":  rn(ks[9], (A, 4 * H)),      # lang_lstm W_ih (attn_memory segment)
        "wl_hh": rn(ks[10], (H, 4 * H)),     # lang_lstm W_hh
        "bl":    jnp.zeros((1, 4 * H), jnp.float32).at[:, H:2 * H].set(1.0),
        "w_fc":  rn(ks[11], (H, V)),
        "b_fc":  rn(ks[12], (1, V), 0.01),
    }

    inputs = jax.random.randint(ks[13], (B, T), 0, V, dtype=jnp.int32)
    enc_globals = rn(ks[14], (B, H), 0.5)
    enc_memories = rn(ks[15], (B, L, A), 0.5)
    enc_masks = jnp.ones((B, L), jnp.float32).at[1, L - 3:].set(0.0)

    # TODO(synk): schedule_sampling branch (torch.multinomial resampling) and
    # dropout randomness are not implemented; dropout is identity (eval mode).

    prepped = prepare_butd_params(params)

    logits = jax.block_until_ready(
        jax.jit(butd_forward)(prepped, inputs, enc_globals, enc_memories, enc_masks))
    ref = butd_reference(params, inputs, enc_globals, enc_memories, enc_masks)

    assert logits.shape == (B * T, V)
    # Tolerance covers explicit-bf16 MXU dots (and the approx reciprocal) in
    # the kernel vs. the HIGHEST-precision f32 reference; the 8-step recurrence
    # compounds per-dot rounding, so 3e-2 keeps a comfortable margin while
    # still catching real bugs (gate order / mask / reorder errors are O(0.1)).
    err = float(jnp.max(jnp.abs(logits - ref)))
    assert jnp.allclose(logits, ref, rtol=3e-2, atol=3e-2), err
    print("KERNEL_OK")
</pallas_src>

<mosaic_0001>
module attributes {stable_mosaic.version = 11 : i64} {
  func.func @butd_kernel(%arg0: memref<2x8xi32, #tpu.memory_space<smem>>, %arg1: memref<64x32xf32, #tpu.memory_space<vmem>>, %arg2: memref<2x32xf32, #tpu.memory_space<vmem>>, %arg3: memref<2x8x32xf32, #tpu.memory_space<vmem>>, %arg4: memref<2x8xf32, #tpu.memory_space<vmem>>, %arg5: memref<32x32xbf16, #tpu.memory_space<vmem>>, %arg6: memref<1x32xf32, #tpu.memory_space<vmem>>, %arg7: memref<64x128xbf16, #tpu.memory_space<vmem>>, %arg8: memref<32x128xbf16, #tpu.memory_space<vmem>>, %arg9: memref<32x128xbf16, #tpu.memory_space<vmem>>, %arg10: memref<1x128xf32, #tpu.memory_space<vmem>>, %arg11: memref<64x160xbf16, #tpu.memory_space<vmem>>, %arg12: memref<32x128xbf16, #tpu.memory_space<vmem>>, %arg13: memref<1x128xf32, #tpu.memory_space<vmem>>, %arg14: memref<32x64xbf16, #tpu.memory_space<vmem>>, %arg15: memref<1x64xf32, #tpu.memory_space<vmem>>, %arg16: memref<16x64xf32, #tpu.memory_space<vmem>>) attributes {dimension_semantics = [], scalar_prefetch = 0 : i64, scratch_operands = 0 : i64, tpu.core_type = #tpu.core_type<tc>} {
    %c0 = arith.constant 0 : index
    %c0_0 = arith.constant 0 : index
    %c0_1 = arith.constant 0 : index
    %0 = vector.load %arg3[%c0, %c0_0, %c0_1] : memref<2x8x32xf32, #tpu.memory_space<vmem>>, vector<2x8x32xf32>
    %1 = vector.shape_cast %0 : vector<2x8x32xf32> to vector<16x32xf32>
    %2 = arith.truncf %1 : vector<16x32xf32> to vector<16x32xbf16>
    %c0_2 = arith.constant 0 : index
    %c0_3 = arith.constant 0 : index
    %3 = vector.load %arg5[%c0_2, %c0_3] : memref<32x32xbf16, #tpu.memory_space<vmem>>, vector<32x32xbf16>
    %cst = arith.constant dense<0.000000e+00> : vector<16x32xf32>
    %4 = tpu.matmul %2, %3, %cst {dimension_numbers = #tpu.dot_dimension_numbers<[1], [0], [0], [1], [0, 0, 1, 1], [], []>} : vector<16x32xbf16>, vector<32x32xbf16>, vector<16x32xf32> -> vector<16x32xf32>
    %5 = vector.shape_cast %4 : vector<16x32xf32> to vector<2x8x32xf32>
    %c0_4 = arith.constant 0 : index
    %c0_5 = arith.constant 0 : index
    %6 = vector.load %arg4[%c0_4, %c0_5] : memref<2x8xf32, #tpu.memory_space<vmem>>, vector<2x8xf32>
    %cst_6 = arith.constant 0.000000e+00 : f32
    %7 = vector.broadcast %cst_6 : f32 to vector<2x8xf32>
    %8 = arith.cmpf oeq, %6, %7 : vector<2x8xf32>
    %cst_7 = arith.constant -9.99999984E+17 : f32
    %cst_8 = arith.constant 0.000000e+00 : f32
    %9 = vector.broadcast %cst_7 : f32 to vector<2x8xf32>
    %10 = vector.broadcast %cst_8 : f32 to vector<2x8xf32>
    %11 = arith.select %8, %9, %10 : vector<2x8xi1>, vector<2x8xf32>
    %c0_9 = arith.constant 0 : index
    %c0_10 = arith.constant 0 : index
    %12 = vector.load %arg6[%c0_9, %c0_10] : memref<1x32xf32, #tpu.memory_space<vmem>>, vector<1x32xf32>
    %c0_11 = arith.constant 0 : index
    %c0_12 = arith.constant 0 : index
    %13 = memref.load %arg0[%c0_11, %c0_12] : memref<2x8xi32, #tpu.memory_space<smem>>
    %14 = arith.index_cast %13 : i32 to index
    %c0_13 = arith.constant 0 : index
    %15 = vector.load %arg1[%14, %c0_13] : memref<64x32xf32, #tpu.memory_space<vmem>>, vector<1x32xf32>
    %c1 = arith.constant 1 : index
    %c0_14 = arith.constant 0 : index
    %16 = memref.load %arg0[%c1, %c0_14] : memref<2x8xi32, #tpu.memory_space<smem>>
    %17 = arith.index_cast %16 : i32 to index
    %c0_15 = arith.constant 0 : index
    %18 = vector.load %arg1[%17, %c0_15] : memref<64x32xf32, #tpu.memory_space<vmem>>, vector<1x32xf32>
    %c0_16 = arith.constant 0 : index
    %c1_17 = arith.constant 1 : index
    %19 = memref.load %arg0[%c0_16, %c1_17] : memref<2x8xi32, #tpu.memory_space<smem>>
    %20 = arith.index_cast %19 : i32 to index
    %c0_18 = arith.constant 0 : index
    %21 = vector.load %arg1[%20, %c0_18] : memref<64x32xf32, #tpu.memory_space<vmem>>, vector<1x32xf32>
    %c1_19 = arith.constant 1 : index
    %c1_20 = arith.constant 1 : index
    %22 = memref.load %arg0[%c1_19, %c1_20] : memref<2x8xi32, #tpu.memory_space<smem>>
    %23 = arith.index_cast %22 : i32 to index
    %c0_21 = arith.constant 0 : index
    %24 = vector.load %arg1[%23, %c0_21] : memref<64x32xf32, #tpu.memory_space<vmem>>, vector<1x32xf32>
    %c0_22 = arith.constant 0 : index
    %c2 = arith.constant 2 : index
    %25 = memref.load %arg0[%c0_22, %c2] : memref<2x8xi32, #tpu.memory_space<smem>>
    %26 = arith.index_cast %25 : i32 to index
    %c0_23 = arith.constant 0 : index
    %27 = vector.load %arg1[%26, %c0_23] : memref<64x32xf32, #tpu.memory_space<vmem>>, vector<1x32xf32>
    %c1_24 = arith.constant 1 : index
    %c2_25 = arith.constant 2 : index
    %28 = memref.load %arg0[%c1_24, %c2_25] : memref<2x8xi32, #tpu.memory_space<smem>>
    %29 = arith.index_cast %28 : i32 to index
    %c0_26 = arith.constant 0 : index
    %30 = vector.load %arg1[%29, %c0_26] : memref<64x32xf32, #tpu.memory_space<vmem>>, vector<1x32xf32>
    %c0_27 = arith.constant 0 : index
    %c3 = arith.constant 3 : index
    %31 = memref.load %arg0[%c0_27, %c3] : memref<2x8xi32, #tpu.memory_space<smem>>
    %32 = arith.index_cast %31 : i32 to index
    %c0_28 = arith.constant 0 : index
    %33 = vector.load %arg1[%32, %c0_28] : memref<64x32xf32, #tpu.memory_space<vmem>>, vector<1x32xf32>
    %c1_29 = arith.constant 1 : index
    %c3_30 = arith.constant 3 : index
    %34 = memref.load %arg0[%c1_29, %c3_30] : memref<2x8xi32, #tpu.memory_space<smem>>
    %35 = arith.index_cast %34 : i32 to index
    %c0_31 = arith.constant 0 : index
    %36 = vector.load %arg1[%35, %c0_31] : memref<64x32xf32, #tpu.memory_space<vmem>>, vector<1x32xf32>
    %c0_32 = arith.constant 0 : index
    %c4 = arith.constant 4 : index
    %37 = memref.load %arg0[%c0_32, %c4] : memref<2x8xi32, #tpu.memory_space<smem>>
    %38 = arith.index_cast %37 : i32 to index
    %c0_33 = arith.constant 0 : index
    %39 = vector.load %arg1[%38, %c0_33] : memref<64x32xf32, #tpu.memory_space<vmem>>, vector<1x32xf32>
    %c1_34 = arith.constant 1 : index
    %c4_35 = arith.constant 4 : index
    %40 = memref.load %arg0[%c1_34, %c4_35] : memref<2x8xi32, #tpu.memory_space<smem>>
    %41 = arith.index_cast %40 : i32 to index
    %c0_36 = arith.constant 0 : index
    %42 = vector.load %arg1[%41, %c0_36] : memref<64x32xf32, #tpu.memory_space<vmem>>, vector<1x32xf32>
    %c0_37 = arith.constant 0 : index
    %c5 = arith.constant 5 : index
    %43 = memref.load %arg0[%c0_37, %c5] : memref<2x8xi32, #tpu.memory_space<smem>>
    %44 = arith.index_cast %43 : i32 to index
    %c0_38 = arith.constant 0 : index
    %45 = vector.load %arg1[%44, %c0_38] : memref<64x32xf32, #tpu.memory_space<vmem>>, vector<1x32xf32>
    %c1_39 = arith.constant 1 : index
    %c5_40 = arith.constant 5 : index
    %46 = memref.load %arg0[%c1_39, %c5_40] : memref<2x8xi32, #tpu.memory_space<smem>>
    %47 = arith.index_cast %46 : i32 to index
    %c0_41 = arith.constant 0 : index
    %48 = vector.load %arg1[%47, %c0_41] : memref<64x32xf32, #tpu.memory_space<vmem>>, vector<1x32xf32>
    %c0_42 = arith.constant 0 : index
    %c6 = arith.constant 6 : index
    %49 = memref.load %arg0[%c0_42, %c6] : memref<2x8xi32, #tpu.memory_space<smem>>
    %50 = arith.index_cast %49 : i32 to index
    %c0_43 = arith.constant 0 : index
    %51 = vector.load %arg1[%50, %c0_43] : memref<64x32xf32, #tpu.memory_space<vmem>>, vector<1x32xf32>
    %c1_44 = arith.constant 1 : index
    %c6_45 = arith.constant 6 : index
    %52 = memref.load %arg0[%c1_44, %c6_45] : memref<2x8xi32, #tpu.memory_space<smem>>
    %53 = arith.index_cast %52 : i32 to index
    %c0_46 = arith.constant 0 : index
    %54 = vector.load %arg1[%53, %c0_46] : memref<64x32xf32, #tpu.memory_space<vmem>>, vector<1x32xf32>
    %c0_47 = arith.constant 0 : index
    %c7 = arith.constant 7 : index
    %55 = memref.load %arg0[%c0_47, %c7] : memref<2x8xi32, #tpu.memory_space<smem>>
    %56 = arith.index_cast %55 : i32 to index
    %c0_48 = arith.constant 0 : index
    %57 = vector.load %arg1[%56, %c0_48] : memref<64x32xf32, #tpu.memory_space<vmem>>, vector<1x32xf32>
    %c1_49 = arith.constant 1 : index
    %c7_50 = arith.constant 7 : index
    %58 = memref.load %arg0[%c1_49, %c7_50] : memref<2x8xi32, #tpu.memory_space<smem>>
    %59 = arith.index_cast %58 : i32 to index
    %c0_51 = arith.constant 0 : index
    %60 = vector.load %arg1[%59, %c0_51] : memref<64x32xf32, #tpu.memory_space<vmem>>, vector<1x32xf32>
    %61 = tpu.concatenate %15, %18, %21, %24, %27, %30, %33, %36, %39, %42, %45, %48, %51, %54, %57, %60 in 0 : vector<1x32xf32>, vector<1x32xf32>, vector<1x32xf32>, vector<1x32xf32>, vector<1x32xf32>, vector<1x32xf32>, vector<1x32xf32>, vector<1x32xf32>, vector<1x32xf32>, vector<1x32xf32>, vector<1x32xf32>, vector<1x32xf32>, vector<1x32xf32>, vector<1x32xf32>, vector<1x32xf32>, vector<1x32xf32> -> vector<16x32xf32>
    %62 = arith.truncf %61 : vector<16x32xf32> to vector<16x32xbf16>
    %c0_52 = arith.constant 0 : index
    %c0_53 = arith.constant 0 : index
    %63 = vector.load %arg8[%c0_52, %c0_53] : memref<32x128xbf16, #tpu.memory_space<vmem>>, vector<32x128xbf16>
    %cst_54 = arith.constant dense<0.000000e+00> : vector<16x128xf32>
    %64 = tpu.matmul %62, %63, %cst_54 {dimension_numbers = #tpu.dot_dimension_numbers<[1], [0], [0], [1], [0, 0, 1, 1], [], []>} : vector<16x32xbf16>, vector<32x128xbf16>, vector<16x128xf32> -> vector<16x128xf32>
    %c0_55 = arith.constant 0 : index
    %c0_56 = arith.constant 0 : index
    %65 = vector.load %arg2[%c0_55, %c0_56] : memref<2x32xf32, #tpu.memory_space<vmem>>, vector<2x32xf32>
    %66 = arith.truncf %65 : vector<2x32xf32> to vector<2x32xbf16>
    %c0_57 = arith.constant 0 : index
    %c0_58 = arith.constant 0 : index
    %67 = vector.load %arg9[%c0_57, %c0_58] : memref<32x128xbf16, #tpu.memory_space<vmem>>, vector<32x128xbf16>
    %cst_59 = arith.constant dense<0.000000e+00> : vector<2x128xf32>
    %68 = tpu.matmul %66, %67, %cst_59 {dimension_numbers = #tpu.dot_dimension_numbers<[1], [0], [0], [1], [0, 0, 1, 1], [], []>} : vector<2x32xbf16>, vector<32x128xbf16>, vector<2x128xf32> -> vector<2x128xf32>
    %c0_60 = arith.constant 0 : index
    %c0_61 = arith.constant 0 : index
    %69 = vector.load %arg10[%c0_60, %c0_61] : memref<1x128xf32, #tpu.memory_space<vmem>>, vector<1x128xf32>
    %70 = vector.broadcast %69 : vector<1x128xf32> to vector<2x128xf32>
    %71 = arith.addf %68, %70 : vector<2x128xf32>
    %c0_62 = arith.constant 0 : index
    %c0_63 = arith.constant 0 : index
    %72 = vector.load %arg7[%c0_62, %c0_63] : memref<64x128xbf16, #tpu.memory_space<vmem>>, vector<64x128xbf16>
    %c0_64 = arith.constant 0 : index
    %c0_65 = arith.constant 0 : index
    %73 = vector.load %arg11[%c0_64, %c0_65] : memref<64x160xbf16, #tpu.memory_space<vmem>>, vector<64x160xbf16>
    %c0_66 = arith.constant 0 : index
    %c0_67 = arith.constant 0 : index
    %74 = vector.load %arg12[%c0_66, %c0_67] : memref<32x128xbf16, #tpu.memory_space<vmem>>, vector<32x128xbf16>
    %c0_68 = arith.constant 0 : index
    %c0_69 = arith.constant 0 : index
    %75 = vector.load %arg13[%c0_68, %c0_69] : memref<1x128xf32, #tpu.memory_space<vmem>>, vector<1x128xf32>
    %76 = tpu.iota {dimensions = array<i32: 1>} : vector<2x128xi32>
    %c64_i32 = arith.constant 64 : i32
    %77 = vector.broadcast %c64_i32 : i32 to vector<2x128xi32>
    %78 = arith.cmpi sge, %76, %77 : vector<2x128xi32>
    %c96_i32 = arith.constant 96 : i32
    %79 = vector.broadcast %c96_i32 : i32 to vector<2x128xi32>
    %80 = arith.cmpi slt, %76, %79 : vector<2x128xi32>
    %81 = arith.andi %78, %80 : vector<2x128xi1>
    %cst_70 = arith.constant 1.000000e+00 : f32
    %cst_71 = arith.constant 5.000000e-01 : f32
    %82 = vector.broadcast %cst_70 : f32 to vector<2x128xf32>
    %83 = vector.broadcast %cst_71 : f32 to vector<2x128xf32>
    %84 = arith.select %81, %82, %83 : vector<2x128xi1>, vector<2x128xf32>
    %cst_72 = arith.constant 0.000000e+00 : f32
    %cst_73 = arith.constant 5.000000e-01 : f32
    %85 = vector.broadcast %cst_72 : f32 to vector<2x128xf32>
    %86 = vector.broadcast %cst_73 : f32 to vector<2x128xf32>
    %87 = arith.select %81, %85, %86 : vector<2x128xi1>, vector<2x128xf32>
    %cst_74 = arith.constant 0.000000e+00 : f32
    %88 = vector.broadcast %cst_74 : f32 to vector<2x32xf32>
    %cst_75 = arith.constant 0.000000e+00 : f32
    %89 = vector.broadcast %cst_75 : f32 to vector<2x32xf32>
    %cst_76 = arith.constant 0.000000e+00 : f32
    %90 = vector.broadcast %cst_76 : f32 to vector<2x32xf32>
    %cst_77 = arith.constant 0.000000e+00 : f32
    %91 = vector.broadcast %cst_77 : f32 to vector<2x32xf32>
    %92 = tpu.concatenate %90, %88 in 1 : vector<2x32xf32>, vector<2x32xf32> -> vector<2x64xf32>
    %93 = arith.truncf %92 : vector<2x64xf32> to vector<2x64xbf16>
    %cst_78 = arith.constant dense<0.000000e+00> : vector<2x128xf32>
    %94 = tpu.matmul %93, %72, %cst_78 {dimension_numbers = #tpu.dot_dimension_numbers<[1], [0], [0], [1], [0, 0, 1, 1], [], []>} : vector<2x64xbf16>, vector<64x128xbf16>, vector<2x128xf32> -> vector<2x128xf32>
    %95 = vector.extract_strided_slice %64 {offsets = [0, 0], sizes = [2, 128], strides = [1, 1]} : vector<16x128xf32> to vector<2x128xf32>
    %96 = arith.addf %94, %95 : vector<2x128xf32>
    %97 = arith.addf %96, %71 : vector<2x128xf32>
    %98 = arith.mulf %97, %84 : vector<2x128xf32>
    %99 = math.tanh %98 : vector<2x128xf32>
    %100 = arith.mulf %99, %84 : vector<2x128xf32>
    %101 = arith.addf %100, %87 : vector<2x128xf32>
    %102 = vector.extract_strided_slice %101 {offsets = [0, 32], sizes = [2, 32], strides = [1, 1]} : vector<2x128xf32> to vector<2x32xf32>
    %103 = arith.mulf %102, %89 : vector<2x32xf32>
    %104 = vector.extract_strided_slice %101 {offsets = [0, 0], sizes = [2, 32], strides = [1, 1]} : vector<2x128xf32> to vector<2x32xf32>
    %105 = vector.extract_strided_slice %101 {offsets = [0, 64], sizes = [2, 32], strides = [1, 1]} : vector<2x128xf32> to vector<2x32xf32>
    %106 = arith.mulf %104, %105 : vector<2x32xf32>
    %107 = arith.addf %103, %106 : vector<2x32xf32>
    %108 = vector.extract_strided_slice %101 {offsets = [0, 96], sizes = [2, 32], strides = [1, 1]} : vector<2x128xf32> to vector<2x32xf32>
    %109 = math.tanh %107 : vector<2x32xf32>
    %110 = arith.mulf %108, %109 : vector<2x32xf32>
    %111 = tpu.concatenate %110, %90 in 1 : vector<2x32xf32>, vector<2x32xf32> -> vector<2x64xf32>
    %112 = arith.truncf %111 : vector<2x64xf32> to vector<2x64xbf16>
    %cst_79 = arith.constant dense<0.000000e+00> : vector<2x160xf32>
    %113 = tpu.matmul %112, %73, %cst_79 {dimension_numbers = #tpu.dot_dimension_numbers<[1], [0], [0], [1], [0, 0, 1, 1], [], []>} : vector<2x64xbf16>, vector<64x160xbf16>, vector<2x160xf32> -> vector<2x160xf32>
    %114 = vector.extract_strided_slice %113 {offsets = [0, 0], sizes = [2, 128], strides = [1, 1]} : vector<2x160xf32> to vector<2x128xf32>
    %115 = vector.extract_strided_slice %113 {offsets = [0, 128], sizes = [2, 32], strides = [1, 1]} : vector<2x160xf32> to vector<2x32xf32>
    %116 = vector.shape_cast %115 : vector<2x32xf32> to vector<2x1x32xf32>
    %117 = vector.broadcast %116 : vector<2x1x32xf32> to vector<2x8x32xf32>
    %118 = arith.addf %117, %5 : vector<2x8x32xf32>
    %119 = math.tanh %118 : vector<2x8x32xf32>
    %120 = vector.shape_cast %12 : vector<1x32xf32> to vector<1x1x32xf32>
    %121 = vector.broadcast %120 : vector<1x1x32xf32> to vector<2x8x32xf32>
    %122 = arith.mulf %119, %121 : vector<2x8x32xf32>
    %cst_80 = arith.constant dense<0.000000e+00> : vector<2x8xf32>
    %123 = vector.multi_reduction <add>, %122, %cst_80 [2] : vector<2x8x32xf32> to vector<2x8xf32>
    %124 = arith.addf %123, %11 : vector<2x8xf32>
    %cst_81 = arith.constant dense<0xFF800000> : vector<2xf32>
    %125 = vector.multi_reduction <maximumf>, %124, %cst_81 [1] : vector<2x8xf32> to vector<2xf32>
    %126 = vector.shape_cast %125 : vector<2xf32> to vector<2x1xf32>
    %127 = vector.broadcast %126 : vector<2x1xf32> to vector<2x8xf32>
    %128 = arith.subf %124, %127 : vector<2x8xf32>
    %129 = math.exp %128 : vector<2x8xf32>
    %cst_82 = arith.constant dense<0.000000e+00> : vector<2xf32>
    %130 = vector.multi_reduction <add>, %129, %cst_82 [1] : vector<2x8xf32> to vector<2xf32>
    %131 = vector.shape_cast %130 : vector<2xf32> to vector<2x1xf32>
    %132 = tpu.reciprocal %131 {approx = true} : vector<2x1xf32> -> vector<2x1xf32>
    %133 = vector.broadcast %132 : vector<2x1xf32> to vector<2x8xf32>
    %134 = arith.mulf %129, %133 : vector<2x8xf32>
    %135 = vector.shape_cast %134 : vector<2x8xf32> to vector<2x8x1xf32>
    %136 = vector.broadcast %135 : vector<2x8x1xf32> to vector<2x8x32xf32>
    %137 = arith.mulf %136, %0 : vector<2x8x32xf32>
    %cst_83 = arith.constant dense<0.000000e+00> : vector<2x32xf32>
    %138 = vector.multi_reduction <add>, %137, %cst_83 [1] : vector<2x8x32xf32> to vector<2x32xf32>
    %139 = arith.truncf %138 : vector<2x32xf32> to vector<2x32xbf16>
    %cst_84 = arith.constant dense<0.000000e+00> : vector<2x128xf32>
    %140 = tpu.matmul %139, %74, %cst_84 {dimension_numbers = #tpu.dot_dimension_numbers<[1], [0], [0], [1], [0, 0, 1, 1], [], []>} : vector<2x32xbf16>, vector<32x128xbf16>, vector<2x128xf32> -> vector<2x128xf32>
    %141 = arith.addf %114, %140 : vector<2x128xf32>
    %142 = vector.broadcast %75 : vector<1x128xf32> to vector<2x128xf32>
    %143 = arith.addf %141, %142 : vector<2x128xf32>
    %144 = arith.mulf %143, %84 : vector<2x128xf32>
    %145 = math.tanh %144 : vector<2x128xf32>
    %146 = arith.mulf %145, %84 : vector<2x128xf32>
    %147 = arith.addf %146, %87 : vector<2x128xf32>
    %148 = vector.extract_strided_slice %147 {offsets = [0, 32], sizes = [2, 32], strides = [1, 1]} : vector<2x128xf32> to vector<2x32xf32>
    %149 = arith.mulf %148, %91 : vector<2x32xf32>
    %150 = vector.extract_strided_slice %147 {offsets = [0, 0], sizes = [2, 32], strides = [1, 1]} : vector<2x128xf32> to vector<2x32xf32>
    %151 = vector.extract_strided_slice %147 {offsets = [0, 64], sizes = [2, 32], strides = [1, 1]} : vector<2x128xf32> to vector<2x32xf32>
    %152 = arith.mulf %150, %151 : vector<2x32xf32>
    %153 = arith.addf %149, %152 : vector<2x32xf32>
    %154 = vector.extract_strided_slice %147 {offsets = [0, 96], sizes = [2, 32], strides = [1, 1]} : vector<2x128xf32> to vector<2x32xf32>
    %155 = math.tanh %153 : vector<2x32xf32>
    %156 = arith.mulf %154, %155 : vector<2x32xf32>
    %157 = tpu.concatenate %156, %110 in 1 : vector<2x32xf32>, vector<2x32xf32> -> vector<2x64xf32>
    %158 = arith.truncf %157 : vector<2x64xf32> to vector<2x64xbf16>
    %cst_85 = arith.constant dense<0.000000e+00> : vector<2x128xf32>
    %159 = tpu.matmul %158, %72, %cst_85 {dimension_numbers = #tpu.dot_dimension_numbers<[1], [0], [0], [1], [0, 0, 1, 1], [], []>} : vector<2x64xbf16>, vector<64x128xbf16>, vector<2x128xf32> -> vector<2x128xf32>
    %160 = vector.extract_strided_slice %64 {offsets = [2, 0], sizes = [2, 128], strides = [1, 1]} : vector<16x128xf32> to vector<2x128xf32>
    %161 = arith.addf %159, %160 : vector<2x128xf32>
    %162 = arith.addf %161, %71 : vector<2x128xf32>
    %163 = arith.mulf %162, %84 : vector<2x128xf32>
    %164 = math.tanh %163 : vector<2x128xf32>
    %165 = arith.mulf %164, %84 : vector<2x128xf32>
    %166 = arith.addf %165, %87 : vector<2x128xf32>
    %167 = vector.extract_strided_slice %166 {offsets = [0, 32], sizes = [2, 32], strides = [1, 1]} : vector<2x128xf32> to vector<2x32xf32>
    %168 = arith.mulf %167, %107 : vector<2x32xf32>
    %169 = vector.extract_strided_slice %166 {offsets = [0, 0], sizes = [2, 32], strides = [1, 1]} : vector<2x128xf32> to vector<2x32xf32>
    %170 = vector.extract_strided_slice %166 {offsets = [0, 64], sizes = [2, 32], strides = [1, 1]} : vector<2x128xf32> to vector<2x32xf32>
    %171 = arith.mulf %169, %170 : vector<2x32xf32>
    %172 = arith.addf %168, %171 : vector<2x32xf32>
    %173 = vector.extract_strided_slice %166 {offsets = [0, 96], sizes = [2, 32], strides = [1, 1]} : vector<2x128xf32> to vector<2x32xf32>
    %174 = math.tanh %172 : vector<2x32xf32>
    %175 = arith.mulf %173, %174 : vector<2x32xf32>
    %176 = tpu.concatenate %175, %156 in 1 : vector<2x32xf32>, vector<2x32xf32> -> vector<2x64xf32>
    %177 = arith.truncf %176 : vector<2x64xf32> to vector<2x64xbf16>
    %cst_86 = arith.constant dense<0.000000e+00> : vector<2x160xf32>
    %178 = tpu.matmul %177, %73, %cst_86 {dimension_numbers = #tpu.dot_dimension_numbers<[1], [0], [0], [1], [0, 0, 1, 1], [], []>} : vector<2x64xbf16>, vector<64x160xbf16>, vector<2x160xf32> -> vector<2x160xf32>
    %179 = vector.extract_strided_slice %178 {offsets = [0, 0], sizes = [2, 128], strides = [1, 1]} : vector<2x160xf32> to vector<2x128xf32>
    %180 = vector.extract_strided_slice %178 {offsets = [0, 128], sizes = [2, 32], strides = [1, 1]} : vector<2x160xf32> to vector<2x32xf32>
    %181 = vector.shape_cast %180 : vector<2x32xf32> to vector<2x1x32xf32>
    %182 = vector.broadcast %181 : vector<2x1x32xf32> to vector<2x8x32xf32>
    %183 = arith.addf %182, %5 : vector<2x8x32xf32>
    %184 = math.tanh %183 : vector<2x8x32xf32>
    %185 = vector.shape_cast %12 : vector<1x32xf32> to vector<1x1x32xf32>
    %186 = vector.broadcast %185 : vector<1x1x32xf32> to vector<2x8x32xf32>
    %187 = arith.mulf %184, %186 : vector<2x8x32xf32>
    %cst_87 = arith.constant dense<0.000000e+00> : vector<2x8xf32>
    %188 = vector.multi_reduction <add>, %187, %cst_87 [2] : vector<2x8x32xf32> to vector<2x8xf32>
    %189 = arith.addf %188, %11 : vector<2x8xf32>
    %cst_88 = arith.constant dense<0xFF800000> : vector<2xf32>
    %190 = vector.multi_reduction <maximumf>, %189, %cst_88 [1] : vector<2x8xf32> to vector<2xf32>
    %191 = vector.shape_cast %190 : vector<2xf32> to vector<2x1xf32>
    %192 = vector.broadcast %191 : vector<2x1xf32> to vector<2x8xf32>
    %193 = arith.subf %189, %192 : vector<2x8xf32>
    %194 = math.exp %193 : vector<2x8xf32>
    %cst_89 = arith.constant dense<0.000000e+00> : vector<2xf32>
    %195 = vector.multi_reduction <add>, %194, %cst_89 [1] : vector<2x8xf32> to vector<2xf32>
    %196 = vector.shape_cast %195 : vector<2xf32> to vector<2x1xf32>
    %197 = tpu.reciprocal %196 {approx = true} : vector<2x1xf32> -> vector<2x1xf32>
    %198 = vector.broadcast %197 : vector<2x1xf32> to vector<2x8xf32>
    %199 = arith.mulf %194, %198 : vector<2x8xf32>
    %200 = vector.shape_cast %199 : vector<2x8xf32> to vector<2x8x1xf32>
    %201 = vector.broadcast %200 : vector<2x8x1xf32> to vector<2x8x32xf32>
    %202 = arith.mulf %201, %0 : vector<2x8x32xf32>
    %cst_90 = arith.constant dense<0.000000e+00> : vector<2x32xf32>
    %203 = vector.multi_reduction <add>, %202, %cst_90 [1] : vector<2x8x32xf32> to vector<2x32xf32>
    %204 = arith.truncf %203 : vector<2x32xf32> to vector<2x32xbf16>
    %cst_91 = arith.constant dense<0.000000e+00> : vector<2x128xf32>
    %205 = tpu.matmul %204, %74, %cst_91 {dimension_numbers = #tpu.dot_dimension_numbers<[1], [0], [0], [1], [0, 0, 1, 1], [], []>} : vector<2x32xbf16>, vector<32x128xbf16>, vector<2x128xf32> -> vector<2x128xf32>
    %206 = arith.addf %179, %205 : vector<2x128xf32>
    %207 = vector.broadcast %75 : vector<1x128xf32> to vector<2x128xf32>
    %208 = arith.addf %206, %207 : vector<2x128xf32>
    %209 = arith.mulf %208, %84 : vector<2x128xf32>
    %210 = math.tanh %209 : vector<2x128xf32>
    %211 = arith.mulf %210, %84 : vector<2x128xf32>
    %212 = arith.addf %211, %87 : vector<2x128xf32>
    %213 = vector.extract_strided_slice %212 {offsets = [0, 32], sizes = [2, 32], strides = [1, 1]} : vector<2x128xf32> to vector<2x32xf32>
    %214 = arith.mulf %213, %153 : vector<2x32xf32>
    %215 = vector.extract_strided_slice %212 {offsets = [0, 0], sizes = [2, 32], strides = [1, 1]} : vector<2x128xf32> to vector<2x32xf32>
    %216 = vector.extract_strided_slice %212 {offsets = [0, 64], sizes = [2, 32], strides = [1, 1]} : vector<2x128xf32> to vector<2x32xf32>
    %217 = arith.mulf %215, %216 : vector<2x32xf32>
    %218 = arith.addf %214, %217 : vector<2x32xf32>
    %219 = vector.extract_strided_slice %212 {offsets = [0, 96], sizes = [2, 32], strides = [1, 1]} : vector<2x128xf32> to vector<2x32xf32>
    %220 = math.tanh %218 : vector<2x32xf32>
    %221 = arith.mulf %219, %220 : vector<2x32xf32>
    %222 = tpu.concatenate %221, %175 in 1 : vector<2x32xf32>, vector<2x32xf32> -> vector<2x64xf32>
    %223 = arith.truncf %222 : vector<2x64xf32> to vector<2x64xbf16>
    %cst_92 = arith.constant dense<0.000000e+00> : vector<2x128xf32>
    %224 = tpu.matmul %223, %72, %cst_92 {dimension_numbers = #tpu.dot_dimension_numbers<[1], [0], [0], [1], [0, 0, 1, 1], [], []>} : vector<2x64xbf16>, vector<64x128xbf16>, vector<2x128xf32> -> vector<2x128xf32>
    %225 = vector.extract_strided_slice %64 {offsets = [4, 0], sizes = [2, 128], strides = [1, 1]} : vector<16x128xf32> to vector<2x128xf32>
    %226 = arith.addf %224, %225 : vector<2x128xf32>
    %227 = arith.addf %226, %71 : vector<2x128xf32>
    %228 = arith.mulf %227, %84 : vector<2x128xf32>
    %229 = math.tanh %228 : vector<2x128xf32>
    %230 = arith.mulf %229, %84 : vector<2x128xf32>
    %231 = arith.addf %230, %87 : vector<2x128xf32>
    %232 = vector.extract_strided_slice %231 {offsets = [0, 32], sizes = [2, 32], strides = [1, 1]} : vector<2x128xf32> to vector<2x32xf32>
    %233 = arith.mulf %232, %172 : vector<2x32xf32>
    %234 = vector.extract_strided_slice %231 {offsets = [0, 0], sizes = [2, 32], strides = [1, 1]} : vector<2x128xf32> to vector<2x32xf32>
    %235 = vector.extract_strided_slice %231 {offsets = [0, 64], sizes = [2, 32], strides = [1, 1]} : vector<2x128xf32> to vector<2x32xf32>
    %236 = arith.mulf %234, %235 : vector<2x32xf32>
    %237 = arith.addf %233, %236 : vector<2x32xf32>
    %238 = vector.extract_strided_slice %231 {offsets = [0, 96], sizes = [2, 32], strides = [1, 1]} : vector<2x128xf32> to vector<2x32xf32>
    %239 = math.tanh %237 : vector<2x32xf32>
    %240 = arith.mulf %238, %239 : vector<2x32xf32>
    %241 = tpu.concatenate %240, %221 in 1 : vector<2x32xf32>, vector<2x32xf32> -> vector<2x64xf32>
    %242 = arith.truncf %241 : vector<2x64xf32> to vector<2x64xbf16>
    %cst_93 = arith.constant dense<0.000000e+00> : vector<2x160xf32>
    %243 = tpu.matmul %242, %73, %cst_93 {dimension_numbers = #tpu.dot_dimension_numbers<[1], [0], [0], [1], [0, 0, 1, 1], [], []>} : vector<2x64xbf16>, vector<64x160xbf16>, vector<2x160xf32> -> vector<2x160xf32>
    %244 = vector.extract_strided_slice %243 {offsets = [0, 0], sizes = [2, 128], strides = [1, 1]} : vector<2x160xf32> to vector<2x128xf32>
    %245 = vector.extract_strided_slice %243 {offsets = [0, 128], sizes = [2, 32], strides = [1, 1]} : vector<2x160xf32> to vector<2x32xf32>
    %246 = vector.shape_cast %245 : vector<2x32xf32> to vector<2x1x32xf32>
    %247 = vector.broadcast %246 : vector<2x1x32xf32> to vector<2x8x32xf32>
    %248 = arith.addf %247, %5 : vector<2x8x32xf32>
    %249 = math.tanh %248 : vector<2x8x32xf32>
    %250 = vector.shape_cast %12 : vector<1x32xf32> to vector<1x1x32xf32>
    %251 = vector.broadcast %250 : vector<1x1x32xf32> to vector<2x8x32xf32>
    %252 = arith.mulf %249, %251 : vector<2x8x32xf32>
    %cst_94 = arith.constant dense<0.000000e+00> : vector<2x8xf32>
    %253 = vector.multi_reduction <add>, %252, %cst_94 [2] : vector<2x8x32xf32> to vector<2x8xf32>
    %254 = arith.addf %253, %11 : vector<2x8xf32>
    %cst_95 = arith.constant dense<0xFF800000> : vector<2xf32>
    %255 = vector.multi_reduction <maximumf>, %254, %cst_95 [1] : vector<2x8xf32> to vector<2xf32>
    %256 = vector.shape_cast %255 : vector<2xf32> to vector<2x1xf32>
    %257 = vector.broadcast %256 : vector<2x1xf32> to vector<2x8xf32>
    %258 = arith.subf %254, %257 : vector<2x8xf32>
    %259 = math.exp %258 : vector<2x8xf32>
    %cst_96 = arith.constant dense<0.000000e+00> : vector<2xf32>
    %260 = vector.multi_reduction <add>, %259, %cst_96 [1] : vector<2x8xf32> to vector<2xf32>
    %261 = vector.shape_cast %260 : vector<2xf32> to vector<2x1xf32>
    %262 = tpu.reciprocal %261 {approx = true} : vector<2x1xf32> -> vector<2x1xf32>
    %263 = vector.broadcast %262 : vector<2x1xf32> to vector<2x8xf32>
    %264 = arith.mulf %259, %263 : vector<2x8xf32>
    %265 = vector.shape_cast %264 : vector<2x8xf32> to vector<2x8x1xf32>
    %266 = vector.broadcast %265 : vector<2x8x1xf32> to vector<2x8x32xf32>
    %267 = arith.mulf %266, %0 : vector<2x8x32xf32>
    %cst_97 = arith.constant dense<0.000000e+00> : vector<2x32xf32>
    %268 = vector.multi_reduction <add>, %267, %cst_97 [1] : vector<2x8x32xf32> to vector<2x32xf32>
    %269 = arith.truncf %268 : vector<2x32xf32> to vector<2x32xbf16>
    %cst_98 = arith.constant dense<0.000000e+00> : vector<2x128xf32>
    %270 = tpu.matmul %269, %74, %cst_98 {dimension_numbers = #tpu.dot_dimension_numbers<[1], [0], [0], [1], [0, 0, 1, 1], [], []>} : vector<2x32xbf16>, vector<32x128xbf16>, vector<2x128xf32> -> vector<2x128xf32>
    %271 = arith.addf %244, %270 : vector<2x128xf32>
    %272 = vector.broadcast %75 : vector<1x128xf32> to vector<2x128xf32>
    %273 = arith.addf %271, %272 : vector<2x128xf32>
    %274 = arith.mulf %273, %84 : vector<2x128xf32>
    %275 = math.tanh %274 : vector<2x128xf32>
    %276 = arith.mulf %275, %84 : vector<2x128xf32>
    %277 = arith.addf %276, %87 : vector<2x128xf32>
    %278 = vector.extract_strided_slice %277 {offsets = [0, 32], sizes = [2, 32], strides = [1, 1]} : vector<2x128xf32> to vector<2x32xf32>
    %279 = arith.mulf %278, %218 : vector<2x32xf32>
    %280 = vector.extract_strided_slice %277 {offsets = [0, 0], sizes = [2, 32], strides = [1, 1]} : vector<2x128xf32> to vector<2x32xf32>
    %281 = vector.extract_strided_slice %277 {offsets = [0, 64], sizes = [2, 32], strides = [1, 1]} : vector<2x128xf32> to vector<2x32xf32>
    %282 = arith.mulf %280, %281 : vector<2x32xf32>
    %283 = arith.addf %279, %282 : vector<2x32xf32>
    %284 = vector.extract_strided_slice %277 {offsets = [0, 96], sizes = [2, 32], strides = [1, 1]} : vector<2x128xf32> to vector<2x32xf32>
    %285 = math.tanh %283 : vector<2x32xf32>
    %286 = arith.mulf %284, %285 : vector<2x32xf32>
    %287 = tpu.concatenate %286, %240 in 1 : vector<2x32xf32>, vector<2x32xf32> -> vector<2x64xf32>
    %288 = arith.truncf %287 : vector<2x64xf32> to vector<2x64xbf16>
    %cst_99 = arith.constant dense<0.000000e+00> : vector<2x128xf32>
    %289 = tpu.matmul %288, %72, %cst_99 {dimension_numbers = #tpu.dot_dimension_numbers<[1], [0], [0], [1], [0, 0, 1, 1], [], []>} : vector<2x64xbf16>, vector<64x128xbf16>, vector<2x128xf32> -> vector<2x128xf32>
    %290 = vector.extract_strided_slice %64 {offsets = [6, 0], sizes = [2, 128], strides = [1, 1]} : vector<16x128xf32> to vector<2x128xf32>
    %291 = arith.addf %289, %290 : vector<2x128xf32>
    %292 = arith.addf %291, %71 : vector<2x128xf32>
    %293 = arith.mulf %292, %84 : vector<2x128xf32>
    %294 = math.tanh %293 : vector<2x128xf32>
    %295 = arith.mulf %294, %84 : vector<2x128xf32>
    %296 = arith.addf %295, %87 : vector<2x128xf32>
    %297 = vector.extract_strided_slice %296 {offsets = [0, 32], sizes = [2, 32], strides = [1, 1]} : vector<2x128xf32> to vector<2x32xf32>
    %298 = arith.mulf %297, %237 : vector<2x32xf32>
    %299 = vector.extract_strided_slice %296 {offsets = [0, 0], sizes = [2, 32], strides = [1, 1]} : vector<2x128xf32> to vector<2x32xf32>
    %300 = vector.extract_strided_slice %296 {offsets = [0, 64], sizes = [2, 32], strides = [1, 1]} : vector<2x128xf32> to vector<2x32xf32>
    %301 = arith.mulf %299, %300 : vector<2x32xf32>
    %302 = arith.addf %298, %301 : vector<2x32xf32>
    %303 = vector.extract_strided_slice %296 {offsets = [0, 96], sizes = [2, 32], strides = [1, 1]} : vector<2x128xf32> to vector<2x32xf32>
    %304 = math.tanh %302 : vector<2x32xf32>
    %305 = arith.mulf %303, %304 : vector<2x32xf32>
    %306 = tpu.concatenate %305, %286 in 1 : vector<2x32xf32>, vector<2x32xf32> -> vector<2x64xf32>
    %307 = arith.truncf %306 : vector<2x64xf32> to vector<2x64xbf16>
    %cst_100 = arith.constant dense<0.000000e+00> : vector<2x160xf32>
    %308 = tpu.matmul %307, %73, %cst_100 {dimension_numbers = #tpu.dot_dimension_numbers<[1], [0], [0], [1], [0, 0, 1, 1], [], []>} : vector<2x64xbf16>, vector<64x160xbf16>, vector<2x160xf32> -> vector<2x160xf32>
    %309 = vector.extract_strided_slice %308 {offsets = [0, 0], sizes = [2, 128], strides = [1, 1]} : vector<2x160xf32> to vector<2x128xf32>
    %310 = vector.extract_strided_slice %308 {offsets = [0, 128], sizes = [2, 32], strides = [1, 1]} : vector<2x160xf32> to vector<2x32xf32>
    %311 = vector.shape_cast %310 : vector<2x32xf32> to vector<2x1x32xf32>
    %312 = vector.broadcast %311 : vector<2x1x32xf32> to vector<2x8x32xf32>
    %313 = arith.addf %312, %5 : vector<2x8x32xf32>
    %314 = math.tanh %313 : vector<2x8x32xf32>
    %315 = vector.shape_cast %12 : vector<1x32xf32> to vector<1x1x32xf32>
    %316 = vector.broadcast %315 : vector<1x1x32xf32> to vector<2x8x32xf32>
    %317 = arith.mulf %314, %316 : vector<2x8x32xf32>
    %cst_101 = arith.constant dense<0.000000e+00> : vector<2x8xf32>
    %318 = vector.multi_reduction <add>, %317, %cst_101 [2] : vector<2x8x32xf32> to vector<2x8xf32>
    %319 = arith.addf %318, %11 : vector<2x8xf32>
    %cst_102 = arith.constant dense<0xFF800000> : vector<2xf32>
    %320 = vector.multi_reduction <maximumf>, %319, %cst_102 [1] : vector<2x8xf32> to vector<2xf32>
    %321 = vector.shape_cast %320 : vector<2xf32> to vector<2x1xf32>
    %322 = vector.broadcast %321 : vector<2x1xf32> to vector<2x8xf32>
    %323 = arith.subf %319, %322 : vector<2x8xf32>
    %324 = math.exp %323 : vector<2x8xf32>
    %cst_103 = arith.constant dense<0.000000e+00> : vector<2xf32>
    %325 = vector.multi_reduction <add>, %324, %cst_103 [1] : vector<2x8xf32> to vector<2xf32>
    %326 = vector.shape_cast %325 : vector<2xf32> to vector<2x1xf32>
    %327 = tpu.reciprocal %326 {approx = true} : vector<2x1xf32> -> vector<2x1xf32>
    %328 = vector.broadcast %327 : vector<2x1xf32> to vector<2x8xf32>
    %329 = arith.mulf %324, %328 : vector<2x8xf32>
    %330 = vector.shape_cast %329 : vector<2x8xf32> to vector<2x8x1xf32>
    %331 = vector.broadcast %330 : vector<2x8x1xf32> to vector<2x8x32xf32>
    %332 = arith.mulf %331, %0 : vector<2x8x32xf32>
    %cst_104 = arith.constant dense<0.000000e+00> : vector<2x32xf32>
    %333 = vector.multi_reduction <add>, %332, %cst_104 [1] : vector<2x8x32xf32> to vector<2x32xf32>
    %334 = arith.truncf %333 : vector<2x32xf32> to vector<2x32xbf16>
    %cst_105 = arith.constant dense<0.000000e+00> : vector<2x128xf32>
    %335 = tpu.matmul %334, %74, %cst_105 {dimension_numbers = #tpu.dot_dimension_numbers<[1], [0], [0], [1], [0, 0, 1, 1], [], []>} : vector<2x32xbf16>, vector<32x128xbf16>, vector<2x128xf32> -> vector<2x128xf32>
    %336 = arith.addf %309, %335 : vector<2x128xf32>
    %337 = vector.broadcast %75 : vector<1x128xf32> to vector<2x128xf32>
    %338 = arith.addf %336, %337 : vector<2x128xf32>
    %339 = arith.mulf %338, %84 : vector<2x128xf32>
    %340 = math.tanh %339 : vector<2x128xf32>
    %341 = arith.mulf %340, %84 : vector<2x128xf32>
    %342 = arith.addf %341, %87 : vector<2x128xf32>
    %343 = vector.extract_strided_slice %342 {offsets = [0, 32], sizes = [2, 32], strides = [1, 1]} : vector<2x128xf32> to vector<2x32xf32>
    %344 = arith.mulf %343, %283 : vector<2x32xf32>
    %345 = vector.extract_strided_slice %342 {offsets = [0, 0], sizes = [2, 32], strides = [1, 1]} : vector<2x128xf32> to vector<2x32xf32>
    %346 = vector.extract_strided_slice %342 {offsets = [0, 64], sizes = [2, 32], strides = [1, 1]} : vector<2x128xf32> to vector<2x32xf32>
    %347 = arith.mulf %345, %346 : vector<2x32xf32>
    %348 = arith.addf %344, %347 : vector<2x32xf32>
    %349 = vector.extract_strided_slice %342 {offsets = [0, 96], sizes = [2, 32], strides = [1, 1]} : vector<2x128xf32> to vector<2x32xf32>
    %350 = math.tanh %348 : vector<2x32xf32>
    %351 = arith.mulf %349, %350 : vector<2x32xf32>
    %352 = tpu.concatenate %351, %305 in 1 : vector<2x32xf32>, vector<2x32xf32> -> vector<2x64xf32>
    %353 = arith.truncf %352 : vector<2x64xf32> to vector<2x64xbf16>
    %cst_106 = arith.constant dense<0.000000e+00> : vector<2x128xf32>
    %354 = tpu.matmul %353, %72, %cst_106 {dimension_numbers = #tpu.dot_dimension_numbers<[1], [0], [0], [1], [0, 0, 1, 1], [], []>} : vector<2x64xbf16>, vector<64x128xbf16>, vector<2x128xf32> -> vector<2x128xf32>
    %355 = vector.extract_strided_slice %64 {offsets = [8, 0], sizes = [2, 128], strides = [1, 1]} : vector<16x128xf32> to vector<2x128xf32>
    %356 = arith.addf %354, %355 : vector<2x128xf32>
    %357 = arith.addf %356, %71 : vector<2x128xf32>
    %358 = arith.mulf %357, %84 : vector<2x128xf32>
    %359 = math.tanh %358 : vector<2x128xf32>
    %360 = arith.mulf %359, %84 : vector<2x128xf32>
    %361 = arith.addf %360, %87 : vector<2x128xf32>
    %362 = vector.extract_strided_slice %361 {offsets = [0, 32], sizes = [2, 32], strides = [1, 1]} : vector<2x128xf32> to vector<2x32xf32>
    %363 = arith.mulf %362, %302 : vector<2x32xf32>
    %364 = vector.extract_strided_slice %361 {offsets = [0, 0], sizes = [2, 32], strides = [1, 1]} : vector<2x128xf32> to vector<2x32xf32>
    %365 = vector.extract_strided_slice %361 {offsets = [0, 64], sizes = [2, 32], strides = [1, 1]} : vector<2x128xf32> to vector<2x32xf32>
    %366 = arith.mulf %364, %365 : vector<2x32xf32>
    %367 = arith.addf %363, %366 : vector<2x32xf32>
    %368 = vector.extract_strided_slice %361 {offsets = [0, 96], sizes = [2, 32], strides = [1, 1]} : vector<2x128xf32> to vector<2x32xf32>
    %369 = math.tanh %367 : vector<2x32xf32>
    %370 = arith.mulf %368, %369 : vector<2x32xf32>
    %371 = tpu.concatenate %370, %351 in 1 : vector<2x32xf32>, vector<2x32xf32> -> vector<2x64xf32>
    %372 = arith.truncf %371 : vector<2x64xf32> to vector<2x64xbf16>
    %cst_107 = arith.constant dense<0.000000e+00> : vector<2x160xf32>
    %373 = tpu.matmul %372, %73, %cst_107 {dimension_numbers = #tpu.dot_dimension_numbers<[1], [0], [0], [1], [0, 0, 1, 1], [], []>} : vector<2x64xbf16>, vector<64x160xbf16>, vector<2x160xf32> -> vector<2x160xf32>
    %374 = vector.extract_strided_slice %373 {offsets = [0, 0], sizes = [2, 128], strides = [1, 1]} : vector<2x160xf32> to vector<2x128xf32>
    %375 = vector.extract_strided_slice %373 {offsets = [0, 128], sizes = [2, 32], strides = [1, 1]} : vector<2x160xf32> to vector<2x32xf32>
    %376 = vector.shape_cast %375 : vector<2x32xf32> to vector<2x1x32xf32>
    %377 = vector.broadcast %376 : vector<2x1x32xf32> to vector<2x8x32xf32>
    %378 = arith.addf %377, %5 : vector<2x8x32xf32>
    %379 = math.tanh %378 : vector<2x8x32xf32>
    %380 = vector.shape_cast %12 : vector<1x32xf32> to vector<1x1x32xf32>
    %381 = vector.broadcast %380 : vector<1x1x32xf32> to vector<2x8x32xf32>
    %382 = arith.mulf %379, %381 : vector<2x8x32xf32>
    %cst_108 = arith.constant dense<0.000000e+00> : vector<2x8xf32>
    %383 = vector.multi_reduction <add>, %382, %cst_108 [2] : vector<2x8x32xf32> to vector<2x8xf32>
    %384 = arith.addf %383, %11 : vector<2x8xf32>
    %cst_109 = arith.constant dense<0xFF800000> : vector<2xf32>
    %385 = vector.multi_reduction <maximumf>, %384, %cst_109 [1] : vector<2x8xf32> to vector<2xf32>
    %386 = vector.shape_cast %385 : vector<2xf32> to vector<2x1xf32>
    %387 = vector.broadcast %386 : vector<2x1xf32> to vector<2x8xf32>
    %388 = arith.subf %384, %387 : vector<2x8xf32>
    %389 = math.exp %388 : vector<2x8xf32>
    %cst_110 = arith.constant dense<0.000000e+00> : vector<2xf32>
    %390 = vector.multi_reduction <add>, %389, %cst_110 [1] : vector<2x8xf32> to vector<2xf32>
    %391 = vector.shape_cast %390 : vector<2xf32> to vector<2x1xf32>
    %392 = tpu.reciprocal %391 {approx = true} : vector<2x1xf32> -> vector<2x1xf32>
    %393 = vector.broadcast %392 : vector<2x1xf32> to vector<2x8xf32>
    %394 = arith.mulf %389, %393 : vector<2x8xf32>
    %395 = vector.shape_cast %394 : vector<2x8xf32> to vector<2x8x1xf32>
    %396 = vector.broadcast %395 : vector<2x8x1xf32> to vector<2x8x32xf32>
    %397 = arith.mulf %396, %0 : vector<2x8x32xf32>
    %cst_111 = arith.constant dense<0.000000e+00> : vector<2x32xf32>
    %398 = vector.multi_reduction <add>, %397, %cst_111 [1] : vector<2x8x32xf32> to vector<2x32xf32>
    %399 = arith.truncf %398 : vector<2x32xf32> to vector<2x32xbf16>
    %cst_112 = arith.constant dense<0.000000e+00> : vector<2x128xf32>
    %400 = tpu.matmul %399, %74, %cst_112 {dimension_numbers = #tpu.dot_dimension_numbers<[1], [0], [0], [1], [0, 0, 1, 1], [], []>} : vector<2x32xbf16>, vector<32x128xbf16>, vector<2x128xf32> -> vector<2x128xf32>
    %401 = arith.addf %374, %400 : vector<2x128xf32>
    %402 = vector.broadcast %75 : vector<1x128xf32> to vector<2x128xf32>
    %403 = arith.addf %401, %402 : vector<2x128xf32>
    %404 = arith.mulf %403, %84 : vector<2x128xf32>
    %405 = math.tanh %404 : vector<2x128xf32>
    %406 = arith.mulf %405, %84 : vector<2x128xf32>
    %407 = arith.addf %406, %87 : vector<2x128xf32>
    %408 = vector.extract_strided_slice %407 {offsets = [0, 32], sizes = [2, 32], strides = [1, 1]} : vector<2x128xf32> to vector<2x32xf32>
    %409 = arith.mulf %408, %348 : vector<2x32xf32>
    %410 = vector.extract_strided_slice %407 {offsets = [0, 0], sizes = [2, 32], strides = [1, 1]} : vector<2x128xf32> to vector<2x32xf32>
    %411 = vector.extract_strided_slice %407 {offsets = [0, 64], sizes = [2, 32], strides = [1, 1]} : vector<2x128xf32> to vector<2x32xf32>
    %412 = arith.mulf %410, %411 : vector<2x32xf32>
    %413 = arith.addf %409, %412 : vector<2x32xf32>
    %414 = vector.extract_strided_slice %407 {offsets = [0, 96], sizes = [2, 32], strides = [1, 1]} : vector<2x128xf32> to vector<2x32xf32>
    %415 = math.tanh %413 : vector<2x32xf32>
    %416 = arith.mulf %414, %415 : vector<2x32xf32>
    %417 = tpu.concatenate %416, %370 in 1 : vector<2x32xf32>, vector<2x32xf32> -> vector<2x64xf32>
    %418 = arith.truncf %417 : vector<2x64xf32> to vector<2x64xbf16>
    %cst_113 = arith.constant dense<0.000000e+00> : vector<2x128xf32>
    %419 = tpu.matmul %418, %72, %cst_113 {dimension_numbers = #tpu.dot_dimension_numbers<[1], [0], [0], [1], [0, 0, 1, 1], [], []>} : vector<2x64xbf16>, vector<64x128xbf16>, vector<2x128xf32> -> vector<2x128xf32>
    %420 = vector.extract_strided_slice %64 {offsets = [10, 0], sizes = [2, 128], strides = [1, 1]} : vector<16x128xf32> to vector<2x128xf32>
    %421 = arith.addf %419, %420 : vector<2x128xf32>
    %422 = arith.addf %421, %71 : vector<2x128xf32>
    %423 = arith.mulf %422, %84 : vector<2x128xf32>
    %424 = math.tanh %423 : vector<2x128xf32>
    %425 = arith.mulf %424, %84 : vector<2x128xf32>
    %426 = arith.addf %425, %87 : vector<2x128xf32>
    %427 = vector.extract_strided_slice %426 {offsets = [0, 32], sizes = [2, 32], strides = [1, 1]} : vector<2x128xf32> to vector<2x32xf32>
    %428 = arith.mulf %427, %367 : vector<2x32xf32>
    %429 = vector.extract_strided_slice %426 {offsets = [0, 0], sizes = [2, 32], strides = [1, 1]} : vector<2x128xf32> to vector<2x32xf32>
    %430 = vector.extract_strided_slice %426 {offsets = [0, 64], sizes = [2, 32], strides = [1, 1]} : vector<2x128xf32> to vector<2x32xf32>
    %431 = arith.mulf %429, %430 : vector<2x32xf32>
    %432 = arith.addf %428, %431 : vector<2x32xf32>
    %433 = vector.extract_strided_slice %426 {offsets = [0, 96], sizes = [2, 32], strides = [1, 1]} : vector<2x128xf32> to vector<2x32xf32>
    %434 = math.tanh %432 : vector<2x32xf32>
    %435 = arith.mulf %433, %434 : vector<2x32xf32>
    %436 = tpu.concatenate %435, %416 in 1 : vector<2x32xf32>, vector<2x32xf32> -> vector<2x64xf32>
    %437 = arith.truncf %436 : vector<2x64xf32> to vector<2x64xbf16>
    %cst_114 = arith.constant dense<0.000000e+00> : vector<2x160xf32>
    %438 = tpu.matmul %437, %73, %cst_114 {dimension_numbers = #tpu.dot_dimension_numbers<[1], [0], [0], [1], [0, 0, 1, 1], [], []>} : vector<2x64xbf16>, vector<64x160xbf16>, vector<2x160xf32> -> vector<2x160xf32>
    %439 = vector.extract_strided_slice %438 {offsets = [0, 0], sizes = [2, 128], strides = [1, 1]} : vector<2x160xf32> to vector<2x128xf32>
    %440 = vector.extract_strided_slice %438 {offsets = [0, 128], sizes = [2, 32], strides = [1, 1]} : vector<2x160xf32> to vector<2x32xf32>
    %441 = vector.shape_cast %440 : vector<2x32xf32> to vector<2x1x32xf32>
    %442 = vector.broadcast %441 : vector<2x1x32xf32> to vector<2x8x32xf32>
    %443 = arith.addf %442, %5 : vector<2x8x32xf32>
    %444 = math.tanh %443 : vector<2x8x32xf32>
    %445 = vector.shape_cast %12 : vector<1x32xf32> to vector<1x1x32xf32>
    %446 = vector.broadcast %445 : vector<1x1x32xf32> to vector<2x8x32xf32>
    %447 = arith.mulf %444, %446 : vector<2x8x32xf32>
    %cst_115 = arith.constant dense<0.000000e+00> : vector<2x8xf32>
    %448 = vector.multi_reduction <add>, %447, %cst_115 [2] : vector<2x8x32xf32> to vector<2x8xf32>
    %449 = arith.addf %448, %11 : vector<2x8xf32>
    %cst_116 = arith.constant dense<0xFF800000> : vector<2xf32>
    %450 = vector.multi_reduction <maximumf>, %449, %cst_116 [1] : vector<2x8xf32> to vector<2xf32>
    %451 = vector.shape_cast %450 : vector<2xf32> to vector<2x1xf32>
    %452 = vector.broadcast %451 : vector<2x1xf32> to vector<2x8xf32>
    %453 = arith.subf %449, %452 : vector<2x8xf32>
    %454 = math.exp %453 : vector<2x8xf32>
    %cst_117 = arith.constant dense<0.000000e+00> : vector<2xf32>
    %455 = vector.multi_reduction <add>, %454, %cst_117 [1] : vector<2x8xf32> to vector<2xf32>
    %456 = vector.shape_cast %455 : vector<2xf32> to vector<2x1xf32>
    %457 = tpu.reciprocal %456 {approx = true} : vector<2x1xf32> -> vector<2x1xf32>
    %458 = vector.broadcast %457 : vector<2x1xf32> to vector<2x8xf32>
    %459 = arith.mulf %454, %458 : vector<2x8xf32>
    %460 = vector.shape_cast %459 : vector<2x8xf32> to vector<2x8x1xf32>
    %461 = vector.broadcast %460 : vector<2x8x1xf32> to vector<2x8x32xf32>
    %462 = arith.mulf %461, %0 : vector<2x8x32xf32>
    %cst_118 = arith.constant dense<0.000000e+00> : vector<2x32xf32>
    %463 = vector.multi_reduction <add>, %462, %cst_118 [1] : vector<2x8x32xf32> to vector<2x32xf32>
    %464 = arith.truncf %463 : vector<2x32xf32> to vector<2x32xbf16>
    %cst_119 = arith.constant dense<0.000000e+00> : vector<2x128xf32>
    %465 = tpu.matmul %464, %74, %cst_119 {dimension_numbers = #tpu.dot_dimension_numbers<[1], [0], [0], [1], [0, 0, 1, 1], [], []>} : vector<2x32xbf16>, vector<32x128xbf16>, vector<2x128xf32> -> vector<2x128xf32>
    %466 = arith.addf %439, %465 : vector<2x128xf32>
    %467 = vector.broadcast %75 : vector<1x128xf32> to vector<2x128xf32>
    %468 = arith.addf %466, %467 : vector<2x128xf32>
    %469 = arith.mulf %468, %84 : vector<2x128xf32>
    %470 = math.tanh %469 : vector<2x128xf32>
    %471 = arith.mulf %470, %84 : vector<2x128xf32>
    %472 = arith.addf %471, %87 : vector<2x128xf32>
    %473 = vector.extract_strided_slice %472 {offsets = [0, 32], sizes = [2, 32], strides = [1, 1]} : vector<2x128xf32> to vector<2x32xf32>
    %474 = arith.mulf %473, %413 : vector<2x32xf32>
    %475 = vector.extract_strided_slice %472 {offsets = [0, 0], sizes = [2, 32], strides = [1, 1]} : vector<2x128xf32> to vector<2x32xf32>
    %476 = vector.extract_strided_slice %472 {offsets = [0, 64], sizes = [2, 32], strides = [1, 1]} : vector<2x128xf32> to vector<2x32xf32>
    %477 = arith.mulf %475, %476 : vector<2x32xf32>
    %478 = arith.addf %474, %477 : vector<2x32xf32>
    %479 = vector.extract_strided_slice %472 {offsets = [0, 96], sizes = [2, 32], strides = [1, 1]} : vector<2x128xf32> to vector<2x32xf32>
    %480 = math.tanh %478 : vector<2x32xf32>
    %481 = arith.mulf %479, %480 : vector<2x32xf32>
    %482 = tpu.concatenate %481, %435 in 1 : vector<2x32xf32>, vector<2x32xf32> -> vector<2x64xf32>
    %483 = arith.truncf %482 : vector<2x64xf32> to vector<2x64xbf16>
    %cst_120 = arith.constant dense<0.000000e+00> : vector<2x128xf32>
    %484 = tpu.matmul %483, %72, %cst_120 {dimension_numbers = #tpu.dot_dimension_numbers<[1], [0], [0], [1], [0, 0, 1, 1], [], []>} : vector<2x64xbf16>, vector<64x128xbf16>, vector<2x128xf32> -> vector<2x128xf32>
    %485 = vector.extract_strided_slice %64 {offsets = [12, 0], sizes = [2, 128], strides = [1, 1]} : vector<16x128xf32> to vector<2x128xf32>
    %486 = arith.addf %484, %485 : vector<2x128xf32>
    %487 = arith.addf %486, %71 : vector<2x128xf32>
    %488 = arith.mulf %487, %84 : vector<2x128xf32>
    %489 = math.tanh %488 : vector<2x128xf32>
    %490 = arith.mulf %489, %84 : vector<2x128xf32>
    %491 = arith.addf %490, %87 : vector<2x128xf32>
    %492 = vector.extract_strided_slice %491 {offsets = [0, 32], sizes = [2, 32], strides = [1, 1]} : vector<2x128xf32> to vector<2x32xf32>
    %493 = arith.mulf %492, %432 : vector<2x32xf32>
    %494 = vector.extract_strided_slice %491 {offsets = [0, 0], sizes = [2, 32], strides = [1, 1]} : vector<2x128xf32> to vector<2x32xf32>
    %495 = vector.extract_strided_slice %491 {offsets = [0, 64], sizes = [2, 32], strides = [1, 1]} : vector<2x128xf32> to vector<2x32xf32>
    %496 = arith.mulf %494, %495 : vector<2x32xf32>
    %497 = arith.addf %493, %496 : vector<2x32xf32>
    %498 = vector.extract_strided_slice %491 {offsets = [0, 96], sizes = [2, 32], strides = [1, 1]} : vector<2x128xf32> to vector<2x32xf32>
    %499 = math.tanh %497 : vector<2x32xf32>
    %500 = arith.mulf %498, %499 : vector<2x32xf32>
    %501 = tpu.concatenate %500, %481 in 1 : vector<2x32xf32>, vector<2x32xf32> -> vector<2x64xf32>
    %502 = arith.truncf %501 : vector<2x64xf32> to vector<2x64xbf16>
    %cst_121 = arith.constant dense<0.000000e+00> : vector<2x160xf32>
    %503 = tpu.matmul %502, %73, %cst_121 {dimension_numbers = #tpu.dot_dimension_numbers<[1], [0], [0], [1], [0, 0, 1, 1], [], []>} : vector<2x64xbf16>, vector<64x160xbf16>, vector<2x160xf32> -> vector<2x160xf32>
    %504 = vector.extract_strided_slice %503 {offsets = [0, 0], sizes = [2, 128], strides = [1, 1]} : vector<2x160xf32> to vector<2x128xf32>
    %505 = vector.extract_strided_slice %503 {offsets = [0, 128], sizes = [2, 32], strides = [1, 1]} : vector<2x160xf32> to vector<2x32xf32>
    %506 = vector.shape_cast %505 : vector<2x32xf32> to vector<2x1x32xf32>
    %507 = vector.broadcast %506 : vector<2x1x32xf32> to vector<2x8x32xf32>
    %508 = arith.addf %507, %5 : vector<2x8x32xf32>
    %509 = math.tanh %508 : vector<2x8x32xf32>
    %510 = vector.shape_cast %12 : vector<1x32xf32> to vector<1x1x32xf32>
    %511 = vector.broadcast %510 : vector<1x1x32xf32> to vector<2x8x32xf32>
    %512 = arith.mulf %509, %511 : vector<2x8x32xf32>
    %cst_122 = arith.constant dense<0.000000e+00> : vector<2x8xf32>
    %513 = vector.multi_reduction <add>, %512, %cst_122 [2] : vector<2x8x32xf32> to vector<2x8xf32>
    %514 = arith.addf %513, %11 : vector<2x8xf32>
    %cst_123 = arith.constant dense<0xFF800000> : vector<2xf32>
    %515 = vector.multi_reduction <maximumf>, %514, %cst_123 [1] : vector<2x8xf32> to vector<2xf32>
    %516 = vector.shape_cast %515 : vector<2xf32> to vector<2x1xf32>
    %517 = vector.broadcast %516 : vector<2x1xf32> to vector<2x8xf32>
    %518 = arith.subf %514, %517 : vector<2x8xf32>
    %519 = math.exp %518 : vector<2x8xf32>
    %cst_124 = arith.constant dense<0.000000e+00> : vector<2xf32>
    %520 = vector.multi_reduction <add>, %519, %cst_124 [1] : vector<2x8xf32> to vector<2xf32>
    %521 = vector.shape_cast %520 : vector<2xf32> to vector<2x1xf32>
    %522 = tpu.reciprocal %521 {approx = true} : vector<2x1xf32> -> vector<2x1xf32>
    %523 = vector.broadcast %522 : vector<2x1xf32> to vector<2x8xf32>
    %524 = arith.mulf %519, %523 : vector<2x8xf32>
    %525 = vector.shape_cast %524 : vector<2x8xf32> to vector<2x8x1xf32>
    %526 = vector.broadcast %525 : vector<2x8x1xf32> to vector<2x8x32xf32>
    %527 = arith.mulf %526, %0 : vector<2x8x32xf32>
    %cst_125 = arith.constant dense<0.000000e+00> : vector<2x32xf32>
    %528 = vector.multi_reduction <add>, %527, %cst_125 [1] : vector<2x8x32xf32> to vector<2x32xf32>
    %529 = arith.truncf %528 : vector<2x32xf32> to vector<2x32xbf16>
    %cst_126 = arith.constant dense<0.000000e+00> : vector<2x128xf32>
    %530 = tpu.matmul %529, %74, %cst_126 {dimension_numbers = #tpu.dot_dimension_numbers<[1], [0], [0], [1], [0, 0, 1, 1], [], []>} : vector<2x32xbf16>, vector<32x128xbf16>, vector<2x128xf32> -> vector<2x128xf32>
    %531 = arith.addf %504, %530 : vector<2x128xf32>
    %532 = vector.broadcast %75 : vector<1x128xf32> to vector<2x128xf32>
    %533 = arith.addf %531, %532 : vector<2x128xf32>
    %534 = arith.mulf %533, %84 : vector<2x128xf32>
    %535 = math.tanh %534 : vector<2x128xf32>
    %536 = arith.mulf %535, %84 : vector<2x128xf32>
    %537 = arith.addf %536, %87 : vector<2x128xf32>
    %538 = vector.extract_strided_slice %537 {offsets = [0, 32], sizes = [2, 32], strides = [1, 1]} : vector<2x128xf32> to vector<2x32xf32>
    %539 = arith.mulf %538, %478 : vector<2x32xf32>
    %540 = vector.extract_strided_slice %537 {offsets = [0, 0], sizes = [2, 32], strides = [1, 1]} : vector<2x128xf32> to vector<2x32xf32>
    %541 = vector.extract_strided_slice %537 {offsets = [0, 64], sizes = [2, 32], strides = [1, 1]} : vector<2x128xf32> to vector<2x32xf32>
    %542 = arith.mulf %540, %541 : vector<2x32xf32>
    %543 = arith.addf %539, %542 : vector<2x32xf32>
    %544 = vector.extract_strided_slice %537 {offsets = [0, 96], sizes = [2, 32], strides = [1, 1]} : vector<2x128xf32> to vector<2x32xf32>
    %545 = math.tanh %543 : vector<2x32xf32>
    %546 = arith.mulf %544, %545 : vector<2x32xf32>
    %547 = tpu.concatenate %546, %500 in 1 : vector<2x32xf32>, vector<2x32xf32> -> vector<2x64xf32>
    %548 = arith.truncf %547 : vector<2x64xf32> to vector<2x64xbf16>
    %cst_127 = arith.constant dense<0.000000e+00> : vector<2x128xf32>
    %549 = tpu.matmul %548, %72, %cst_127 {dimension_numbers = #tpu.dot_dimension_numbers<[1], [0], [0], [1], [0, 0, 1, 1], [], []>} : vector<2x64xbf16>, vector<64x128xbf16>, vector<2x128xf32> -> vector<2x128xf32>
    %550 = vector.extract_strided_slice %64 {offsets = [14, 0], sizes = [2, 128], strides = [1, 1]} : vector<16x128xf32> to vector<2x128xf32>
    %551 = arith.addf %549, %550 : vector<2x128xf32>
    %552 = arith.addf %551, %71 : vector<2x128xf32>
    %553 = arith.mulf %552, %84 : vector<2x128xf32>
    %554 = math.tanh %553 : vector<2x128xf32>
    %555 = arith.mulf %554, %84 : vector<2x128xf32>
    %556 = arith.addf %555, %87 : vector<2x128xf32>
    %557 = vector.extract_strided_slice %556 {offsets = [0, 32], sizes = [2, 32], strides = [1, 1]} : vector<2x128xf32> to vector<2x32xf32>
    %558 = arith.mulf %557, %497 : vector<2x32xf32>
    %559 = vector.extract_strided_slice %556 {offsets = [0, 0], sizes = [2, 32], strides = [1, 1]} : vector<2x128xf32> to vector<2x32xf32>
    %560 = vector.extract_strided_slice %556 {offsets = [0, 64], sizes = [2, 32], strides = [1, 1]} : vector<2x128xf32> to vector<2x32xf32>
    %561 = arith.mulf %559, %560 : vector<2x32xf32>
    %562 = arith.addf %558, %561 : vector<2x32xf32>
    %563 = vector.extract_strided_slice %556 {offsets = [0, 96], sizes = [2, 32], strides = [1, 1]} : vector<2x128xf32> to vector<2x32xf32>
    %564 = math.tanh %562 : vector<2x32xf32>
    %565 = arith.mulf %563, %564 : vector<2x32xf32>
    %566 = tpu.concatenate %565, %546 in 1 : vector<2x32xf32>, vector<2x32xf32> -> vector<2x64xf32>
    %567 = arith.truncf %566 : vector<2x64xf32> to vector<2x64xbf16>
    %cst_128 = arith.constant dense<0.000000e+00> : vector<2x160xf32>
    %568 = tpu.matmul %567, %73, %cst_128 {dimension_numbers = #tpu.dot_dimension_numbers<[1], [0], [0], [1], [0, 0, 1, 1], [], []>} : vector<2x64xbf16>, vector<64x160xbf16>, vector<2x160xf32> -> vector<2x160xf32>
    %569 = vector.extract_strided_slice %568 {offsets = [0, 0], sizes = [2, 128], strides = [1, 1]} : vector<2x160xf32> to vector<2x128xf32>
    %570 = vector.extract_strided_slice %568 {offsets = [0, 128], sizes = [2, 32], strides = [1, 1]} : vector<2x160xf32> to vector<2x32xf32>
    %571 = vector.shape_cast %570 : vector<2x32xf32> to vector<2x1x32xf32>
    %572 = vector.broadcast %571 : vector<2x1x32xf32> to vector<2x8x32xf32>
    %573 = arith.addf %572, %5 : vector<2x8x32xf32>
    %574 = math.tanh %573 : vector<2x8x32xf32>
    %575 = vector.shape_cast %12 : vector<1x32xf32> to vector<1x1x32xf32>
    %576 = vector.broadcast %575 : vector<1x1x32xf32> to vector<2x8x32xf32>
    %577 = arith.mulf %574, %576 : vector<2x8x32xf32>
    %cst_129 = arith.constant dense<0.000000e+00> : vector<2x8xf32>
    %578 = vector.multi_reduction <add>, %577, %cst_129 [2] : vector<2x8x32xf32> to vector<2x8xf32>
    %579 = arith.addf %578, %11 : vector<2x8xf32>
    %cst_130 = arith.constant dense<0xFF800000> : vector<2xf32>
    %580 = vector.multi_reduction <maximumf>, %579, %cst_130 [1] : vector<2x8xf32> to vector<2xf32>
    %581 = vector.shape_cast %580 : vector<2xf32> to vector<2x1xf32>
    %582 = vector.broadcast %581 : vector<2x1xf32> to vector<2x8xf32>
    %583 = arith.subf %579, %582 : vector<2x8xf32>
    %584 = math.exp %583 : vector<2x8xf32>
    %cst_131 = arith.constant dense<0.000000e+00> : vector<2xf32>
    %585 = vector.multi_reduction <add>, %584, %cst_131 [1] : vector<2x8xf32> to vector<2xf32>
    %586 = vector.shape_cast %585 : vector<2xf32> to vector<2x1xf32>
    %587 = tpu.reciprocal %586 {approx = true} : vector<2x1xf32> -> vector<2x1xf32>
    %588 = vector.broadcast %587 : vector<2x1xf32> to vector<2x8xf32>
    %589 = arith.mulf %584, %588 : vector<2x8xf32>
    %590 = vector.shape_cast %589 : vector<2x8xf32> to vector<2x8x1xf32>
    %591 = vector.broadcast %590 : vector<2x8x1xf32> to vector<2x8x32xf32>
    %592 = arith.mulf %591, %0 : vector<2x8x32xf32>
    %cst_132 = arith.constant dense<0.000000e+00> : vector<2x32xf32>
    %593 = vector.multi_reduction <add>, %592, %cst_132 [1] : vector<2x8x32xf32> to vector<2x32xf32>
    %594 = arith.truncf %593 : vector<2x32xf32> to vector<2x32xbf16>
    %cst_133 = arith.constant dense<0.000000e+00> : vector<2x128xf32>
    %595 = tpu.matmul %594, %74, %cst_133 {dimension_numbers = #tpu.dot_dimension_numbers<[1], [0], [0], [1], [0, 0, 1, 1], [], []>} : vector<2x32xbf16>, vector<32x128xbf16>, vector<2x128xf32> -> vector<2x128xf32>
    %596 = arith.addf %569, %595 : vector<2x128xf32>
    %597 = vector.broadcast %75 : vector<1x128xf32> to vector<2x128xf32>
    %598 = arith.addf %596, %597 : vector<2x128xf32>
    %599 = arith.mulf %598, %84 : vector<2x128xf32>
    %600 = math.tanh %599 : vector<2x128xf32>
    %601 = arith.mulf %600, %84 : vector<2x128xf32>
    %602 = arith.addf %601, %87 : vector<2x128xf32>
    %603 = vector.extract_strided_slice %602 {offsets = [0, 32], sizes = [2, 32], strides = [1, 1]} : vector<2x128xf32> to vector<2x32xf32>
    %604 = arith.mulf %603, %543 : vector<2x32xf32>
    %605 = vector.extract_strided_slice %602 {offsets = [0, 0], sizes = [2, 32], strides = [1, 1]} : vector<2x128xf32> to vector<2x32xf32>
    %606 = vector.extract_strided_slice %602 {offsets = [0, 64], sizes = [2, 32], strides = [1, 1]} : vector<2x128xf32> to vector<2x32xf32>
    %607 = arith.mulf %605, %606 : vector<2x32xf32>
    %608 = arith.addf %604, %607 : vector<2x32xf32>
    %609 = vector.extract_strided_slice %602 {offsets = [0, 96], sizes = [2, 32], strides = [1, 1]} : vector<2x128xf32> to vector<2x32xf32>
    %610 = math.tanh %608 : vector<2x32xf32>
    %611 = arith.mulf %609, %610 : vector<2x32xf32>
    %612 = vector.extract_strided_slice %156 {offsets = [0, 0], sizes = [1, 32], strides = [1, 1]} : vector<2x32xf32> to vector<1x32xf32>
    %613 = vector.extract_strided_slice %221 {offsets = [0, 0], sizes = [1, 32], strides = [1, 1]} : vector<2x32xf32> to vector<1x32xf32>
    %614 = vector.extract_strided_slice %286 {offsets = [0, 0], sizes = [1, 32], strides = [1, 1]} : vector<2x32xf32> to vector<1x32xf32>
    %615 = vector.extract_strided_slice %351 {offsets = [0, 0], sizes = [1, 32], strides = [1, 1]} : vector<2x32xf32> to vector<1x32xf32>
    %616 = vector.extract_strided_slice %416 {offsets = [0, 0], sizes = [1, 32], strides = [1, 1]} : vector<2x32xf32> to vector<1x32xf32>
    %617 = vector.extract_strided_slice %481 {offsets = [0, 0], sizes = [1, 32], strides = [1, 1]} : vector<2x32xf32> to vector<1x32xf32>
    %618 = vector.extract_strided_slice %546 {offsets = [0, 0], sizes = [1, 32], strides = [1, 1]} : vector<2x32xf32> to vector<1x32xf32>
    %619 = vector.extract_strided_slice %611 {offsets = [0, 0], sizes = [1, 32], strides = [1, 1]} : vector<2x32xf32> to vector<1x32xf32>
    %620 = tpu.concatenate %612, %613, %614, %615, %616, %617, %618, %619 in 0 : vector<1x32xf32>, vector<1x32xf32>, vector<1x32xf32>, vector<1x32xf32>, vector<1x32xf32>, vector<1x32xf32>, vector<1x32xf32>, vector<1x32xf32> -> vector<8x32xf32>
    %621 = vector.extract_strided_slice %156 {offsets = [1, 0], sizes = [1, 32], strides = [1, 1]} : vector<2x32xf32> to vector<1x32xf32>
    %622 = vector.extract_strided_slice %221 {offsets = [1, 0], sizes = [1, 32], strides = [1, 1]} : vector<2x32xf32> to vector<1x32xf32>
    %623 = vector.extract_strided_slice %286 {offsets = [1, 0], sizes = [1, 32], strides = [1, 1]} : vector<2x32xf32> to vector<1x32xf32>
    %624 = vector.extract_strided_slice %351 {offsets = [1, 0], sizes = [1, 32], strides = [1, 1]} : vector<2x32xf32> to vector<1x32xf32>
    %625 = vector.extract_strided_slice %416 {offsets = [1, 0], sizes = [1, 32], strides = [1, 1]} : vector<2x32xf32> to vector<1x32xf32>
    %626 = vector.extract_strided_slice %481 {offsets = [1, 0], sizes = [1, 32], strides = [1, 1]} : vector<2x32xf32> to vector<1x32xf32>
    %627 = vector.extract_strided_slice %546 {offsets = [1, 0], sizes = [1, 32], strides = [1, 1]} : vector<2x32xf32> to vector<1x32xf32>
    %628 = vector.extract_strided_slice %611 {offsets = [1, 0], sizes = [1, 32], strides = [1, 1]} : vector<2x32xf32> to vector<1x32xf32>
    %629 = tpu.concatenate %621, %622, %623, %624, %625, %626, %627, %628 in 0 : vector<1x32xf32>, vector<1x32xf32>, vector<1x32xf32>, vector<1x32xf32>, vector<1x32xf32>, vector<1x32xf32>, vector<1x32xf32>, vector<1x32xf32> -> vector<8x32xf32>
    %630 = tpu.concatenate %620, %629 in 0 : vector<8x32xf32>, vector<8x32xf32> -> vector<16x32xf32>
    %631 = arith.truncf %630 : vector<16x32xf32> to vector<16x32xbf16>
    %c0_134 = arith.constant 0 : index
    %c0_135 = arith.constant 0 : index
    %632 = vector.load %arg14[%c0_134, %c0_135] : memref<32x64xbf16, #tpu.memory_space<vmem>>, vector<32x64xbf16>
    %cst_136 = arith.constant dense<0.000000e+00> : vector<16x64xf32>
    %633 = tpu.matmul %631, %632, %cst_136 {dimension_numbers = #tpu.dot_dimension_numbers<[1], [0], [0], [1], [0, 0, 1, 1], [], []>} : vector<16x32xbf16>, vector<32x64xbf16>, vector<16x64xf32> -> vector<16x64xf32>
    %c0_137 = arith.constant 0 : index
    %c0_138 = arith.constant 0 : index
    %634 = vector.load %arg15[%c0_137, %c0_138] : memref<1x64xf32, #tpu.memory_space<vmem>>, vector<1x64xf32>
    %635 = vector.broadcast %634 : vector<1x64xf32> to vector<16x64xf32>
    %636 = arith.addf %633, %635 : vector<16x64xf32>
    %c0_139 = arith.constant 0 : index
    %c0_140 = arith.constant 0 : index
    %637 = vector.load %arg16[%c0_139, %c0_140] : memref<16x64xf32, #tpu.memory_space<vmem>>, vector<16x64xf32>
    tpu.vector_store %arg16[%c0_139, %c0_140], %636 {strides = array<i32>} : memref<16x64xf32, #tpu.memory_space<vmem>>, vector<16x64xf32>,
    return
  }
}

</mosaic_0001>

<llo_original>
// kernel: butd_forward.1
$region0: #{butd_forward.1}
  #allocation0 [shape = 'u32[]', space=smem, size = 0x4, offset = 0x4, fixed_abs, tag = 'smem constant byte address 0x4 - core index']
  #allocation1 [shape = 'u32[72,128]{1,0:T(1,128)}', space=vmem, size = 0x9000, scoped, tag = 'internal scratch']
  %s0 = inlined_call_operand.vmem [shape: s32[2,8], index: 0, kind: input, shape index: {}]
  %s1 = inlined_call_operand.vmem [shape: f32[64,32], index: 1, kind: input, shape index: {}]
  %s2 = inlined_call_operand.vmem [shape: f32[2,32], index: 2, kind: input, shape index: {}]
  %s3 = inlined_call_operand.hbm [shape: f32[2,8,32], index: 3, kind: input, shape index: {}]
  %s4 = inlined_call_operand.vmem [shape: f32[2,8], index: 4, kind: input, shape index: {}]
  %s5 = inlined_call_operand.hbm [shape: bf16[32,32], index: 5, kind: input, shape index: {}]
  %s6 = inlined_call_operand.hbm [shape: f32[1,32], index: 6, kind: input, shape index: {}]
  %s7 = inlined_call_operand.vmem [shape: bf16[64,128], index: 7, kind: input, shape index: {}]
  %s8 = inlined_call_operand.hbm [shape: bf16[32,128], index: 8, kind: input, shape index: {}]
  %s9 = inlined_call_operand.hbm [shape: bf16[32,128], index: 9, kind: input, shape index: {}]
  %s10 = inlined_call_operand.hbm [shape: f32[1,128], index: 10, kind: input, shape index: {}]
  %s11 = inlined_call_operand.vmem [shape: bf16[64,160], index: 11, kind: input, shape index: {}]
  %s12 = inlined_call_operand.hbm [shape: bf16[32,128], index: 12, kind: input, shape index: {}]
  %s13 = inlined_call_operand.hbm [shape: f32[1,128], index: 13, kind: input, shape index: {}]
  %s14 = inlined_call_operand.hbm [shape: bf16[32,64], index: 14, kind: input, shape index: {}]
  %s15 = inlined_call_operand.hbm [shape: f32[1,64], index: 15, kind: input, shape index: {}]
  %s16 = inlined_call_operand.hbm [shape: f32[16,64], index: 16, kind: output, shape index: {}]
  %s17 = sld [smem:[#allocation0]]
  $region118: #{butd_forward.1} parent=0
    _
  %s19 = ssub.s32 1, %s17
  %s20 = scalar_select 0, %s19, %s17
  $region1: #{butd_forward.1} parent=0
    #allocation2 [shape = 'u8[1024]{0}', space=smem, size = 0x400, scoped, tag = 'input window, operand 0, single buffered']
    #allocation3 [shape = 's32[1]{0}', space=sflag, size = 0x4, scoped, tag = 'scoped memory for butd_forward.1']
    #allocation4 [shape = 's32[1]{0}', space=sflag, size = 0x4, scoped, tag = 'scoped memory for butd_forward.1']
    #allocation5 [shape = 's32[1]{0}', space=sflag, size = 0x4, scoped, tag = 'scoped memory for butd_forward.1']
    #allocation6 [shape = 'u8[8192]{0}', space=vmem, size = 0x2000, scoped, tag = 'input window, operand 3, single buffered']
    #allocation7 [shape = 'u8[8192]{0}', space=vmem, size = 0x2000, scoped, tag = 'input window, operand 5, single buffered']
    #allocation8 [shape = 's32[1]{0}', space=sflag, size = 0x4, scoped, tag = 'scoped memory for butd_forward.1']
    #allocation9 [shape = 'u8[512]{0}', space=vmem, size = 0x400, scoped, tag = 'input window, operand 6, single buffered']
    #allocation10 [shape = 'u8[8192]{0}', space=vmem, size = 0x2000, scoped, tag = 'input window, operand 8, single buffered']
    #allocation11 [shape = 's32[1]{0}', space=sflag, size = 0x4, scoped, tag = 'scoped memory for butd_forward.1']
    #allocation12 [shape = 'u8[8192]{0}', space=vmem, size = 0x2000, scoped, tag = 'input window, operand 9, single buffered']
    #allocation13 [shape = 'u8[512]{0}', space=vmem, size = 0x400, scoped, tag = 'input window, operand 10, single buffered']
    #allocation14 [shape = 's32[1]{0}', space=sflag, size = 0x4, scoped, tag = 'scoped memory for butd_forward.1']
    #allocation15 [shape = 'u8[8192]{0}', space=vmem, size = 0x2000, scoped, tag = 'input window, operand 12, single buffered']
    #allocation16 [shape = 'u8[512]{0}', space=vmem, size = 0x400, scoped, tag = 'input window, operand 13, single buffered']
    #allocation17 [shape = 's32[1]{0}', space=sflag, size = 0x4, scoped, tag = 'scoped memory for butd_forward.1']
    #allocation18 [shape = 'u8[8192]{0}', space=vmem, size = 0x2000, scoped, tag = 'input window, operand 14, single buffered']
    #allocation19 [shape = 'u8[512]{0}', space=vmem, size = 0x400, scoped, tag = 'input window, operand 15, single buffered']
    #allocation20 [shape = 's32[1]{0}', space=sflag, size = 0x4, scoped, tag = 'scoped memory for butd_forward.1']
    #allocation21 [shape = 'u8[8192]{0}', space=vmem, size = 0x2000, scoped, tag = 'output window, operand 0, single buffered']
    %21 = vsyncpa [#allocation5], 0
    %22 = vsyncpa [#allocation3], 0
    %23 = vsyncpa [#allocation8], 0
    %24 = vsyncpa [#allocation11], 0
    %25 = vsyncpa [#allocation14], 0
    %26 = vsyncpa [#allocation17], 0
    %27 = vsyncpa [#allocation20], 0
    %28 = vsyncpa [#allocation4], 0
    // Predicated region
    $region2: #{butd_forward.1} parent=1 // pred_check
      _
    $region3: #{butd_forward.1} parent=1 // pred_check_branch
      %30 = sbr.rel (0) target = $region5
    $region4: #{butd_forward.1} parent=1 // pred_region
      %32 = vsyncadd [#allocation5], 0
      %s34 = sshll.u32 %s0, 4
      %s35 = int_to_ptr.vmem [resolvable:$true] %s34
      %37 = dma.vmem_to_smem %s35, 32, [#allocation2], [#allocation5]
    $region5: #{butd_forward.1} parent=1 // pred_fallthru
      _
    // Predicated region
    $region6: #{butd_forward.1} parent=1 // pred_check
      _
    $region7: #{butd_forward.1} parent=1 // pred_check_branch
      %39 = sbr.rel (0) target = $region9
    $region8: #{butd_forward.1} parent=1 // pred_region
      _
    $region9: #{butd_forward.1} parent=1 // pred_fallthru
      _
    // Predicated region
    $region10: #{butd_forward.1} parent=1 // pred_check
      _
    $region11: #{butd_forward.1} parent=1 // pred_check_branch
      %41 = sbr.rel (0) target = $region13
    $region12: #{butd_forward.1} parent=1 // pred_region
      _
    $region13: #{butd_forward.1} parent=1 // pred_fallthru
      _
    // Predicated region
    $region14: #{butd_forward.1} parent=1 // pred_check
      _
    $region15: #{butd_forward.1} parent=1 // pred_check_branch
      %43 = sbr.rel (0) target = $region17
    $region16: #{butd_forward.1} parent=1 // pred_region
      %45 = vsyncadd [#allocation3], 0
      %s46 = sshll.u32 %s3, 4
      %s47 = int_to_ptr.hbm [resolvable:$true] %s46
      %s48 = sshll.u32 [#allocation6], 4
      %s49 = int_to_ptr.vmem [resolvable:$true] %s48
      %54 = dma.hbm_to_vmem [thread:$0]  %s47, 256, %s49, [#allocation3], 128, 128, 8
    $region17: #{butd_forward.1} parent=1 // pred_fallthru
      _
    // Predicated region
    $region18: #{butd_forward.1} parent=1 // pred_check
      _
    $region19: #{butd_forward.1} parent=1 // pred_check_branch
      %56 = sbr.rel (0) target = $region21
    $region20: #{butd_forward.1} parent=1 // pred_region
      _
    $region21: #{butd_forward.1} parent=1 // pred_fallthru
      _
    // Predicated region
    $region22: #{butd_forward.1} parent=1 // pred_check
      _
    $region23: #{butd_forward.1} parent=1 // pred_check_branch
      %58 = sbr.rel (0) target = $region25
    $region24: #{butd_forward.1} parent=1 // pred_region
      %60 = vsyncadd [#allocation8], 0
      %s61 = sshll.u32 %s5, 4
      %s62 = int_to_ptr.hbm [resolvable:$true] %s61
      %s63 = sshll.u32 [#allocation7], 4
      %s64 = int_to_ptr.vmem [resolvable:$true] %s63
      %69 = dma.hbm_to_vmem [thread:$0]  %s62, 256, %s64, [#allocation8], 64, 64, 4
    $region25: #{butd_forward.1} parent=1 // pred_fallthru
      _
    // Predicated region
    $region26: #{butd_forward.1} parent=1 // pred_check
      _
    $region27: #{butd_forward.1} parent=1 // pred_check_branch
      %71 = sbr.rel (0) target = $region29
    $region28: #{butd_forward.1} parent=1 // pred_region
      %73 = vsyncadd [#allocation8], 0
      %s75 = sshll.u32 %s6, 4
      %s76 = int_to_ptr.hbm [resolvable:$true] %s75
      %s77 = sshll.u32 [#allocation9], 4
      %s78 = int_to_ptr.vmem [resolvable:$true] %s77
      %80 = dma.hbm_to_vmem [thread:$0]  %s76, 16, %s78, [#allocation8]
    $region29: #{butd_forward.1} parent=1 // pred_fallthru
      _
    // Predicated region
    $region30: #{butd_forward.1} parent=1 // pred_check
      _
    $region31: #{butd_forward.1} parent=1 // pred_check_branch
      %82 = sbr.rel (0) target = $region33
    $region32: #{butd_forward.1} parent=1 // pred_region
      _
    $region33: #{butd_forward.1} parent=1 // pred_fallthru
      _
    // Predicated region
    $region34: #{butd_forward.1} parent=1 // pred_check
      _
    $region35: #{butd_forward.1} parent=1 // pred_check_branch
      %84 = sbr.rel (0) target = $region37
    $region36: #{butd_forward.1} parent=1 // pred_region
      %86 = vsyncadd [#allocation11], 0
      %s87 = sshll.u32 %s8, 4
      %s88 = int_to_ptr.hbm [resolvable:$true] %s87
      %s89 = sshll.u32 [#allocation10], 4
      %s90 = int_to_ptr.vmem [resolvable:$true] %s89
      %95 = dma.hbm_to_vmem [thread:$0]  %s88, 256, %s90, [#allocation11], 64, 64, 4
    $region37: #{butd_forward.1} parent=1 // pred_fallthru
      _
    // Predicated region
    $region38: #{butd_forward.1} parent=1 // pred_check
      _
    $region39: #{butd_forward.1} parent=1 // pred_check_branch
      %97 = sbr.rel (0) target = $region41
    $region40: #{butd_forward.1} parent=1 // pred_region
      %99 = vsyncadd [#allocation11], 0
      %s100 = sshll.u32 %s9, 4
      %s101 = int_to_ptr.hbm [resolvable:$true] %s100
      %s102 = sshll.u32 [#allocation12], 4
      %s103 = int_to_ptr.vmem [resolvable:$true] %s102
      %108 = dma.hbm_to_vmem [thread:$0]  %s101, 256, %s103, [#allocation11], 64, 64, 4
    $region41: #{butd_forward.1} parent=1 // pred_fallthru
      _
    // Predicated region
    $region42: #{butd_forward.1} parent=1 // pred_check
      _
    $region43: #{butd_forward.1} parent=1 // pred_check_branch
      %110 = sbr.rel (0) target = $region45
    $region44: #{butd_forward.1} parent=1 // pred_region
      %112 = vsyncadd [#allocation14], 0
      %s114 = sshll.u32 %s10, 4
      %s115 = int_to_ptr.hbm [resolvable:$true] %s114
      %s116 = sshll.u32 [#allocation13], 4
      %s117 = int_to_ptr.vmem [resolvable:$true] %s116
      %119 = dma.hbm_to_vmem [thread:$0]  %s115, 16, %s117, [#allocation14]
    $region45: #{butd_forward.1} parent=1 // pred_fallthru
      _
    // Predicated region
    $region46: #{butd_forward.1} parent=1 // pred_check
      _
    $region47: #{butd_forward.1} parent=1 // pred_check_branch
      %121 = sbr.rel (0) target = $region49
    $region48: #{butd_forward.1} parent=1 // pred_region
      _
    $region49: #{butd_forward.1} parent=1 // pred_fallthru
      _
    // Predicated region
    $region50: #{butd_forward.1} parent=1 // pred_check
      _
    $region51: #{butd_forward.1} parent=1 // pred_check_branch
      %123 = sbr.rel (0) target = $region53
    $region52: #{butd_forward.1} parent=1 // pred_region
      %125 = vsyncadd [#allocation14], 0
      %s126 = sshll.u32 %s12, 4
      %s127 = int_to_ptr.hbm [resolvable:$true] %s126
      %s128 = sshll.u32 [#allocation15], 4
      %s129 = int_to_ptr.vmem [resolvable:$true] %s128
      %134 = dma.hbm_to_vmem [thread:$0]  %s127, 256, %s129, [#allocation14], 64, 64, 4
    $region53: #{butd_forward.1} parent=1 // pred_fallthru
      _
    // Predicated region
    $region54: #{butd_forward.1} parent=1 // pred_check
      _
    $region55: #{butd_forward.1} parent=1 // pred_check_branch
      %136 = sbr.rel (0) target = $region57
    $region56: #{butd_forward.1} parent=1 // pred_region
      %138 = vsyncadd [#allocation17], 0
      %s140 = sshll.u32 %s13, 4
      %s141 = int_to_ptr.hbm [resolvable:$true] %s140
      %s142 = sshll.u32 [#allocation16], 4
      %s143 = int_to_ptr.vmem [resolvable:$true] %s142
      %145 = dma.hbm_to_vmem [thread:$0]  %s141, 16, %s143, [#allocation17]
    $region57: #{butd_forward.1} parent=1 // pred_fallthru
      _
    // Predicated region
    $region58: #{butd_forward.1} parent=1 // pred_check
      _
    $region59: #{butd_forward.1} parent=1 // pred_check_branch
      %147 = sbr.rel (0) target = $region61
    $region60: #{butd_forward.1} parent=1 // pred_region
      %149 = vsyncadd [#allocation17], 0
      %s150 = sshll.u32 %s14, 4
      %s151 = int_to_ptr.hbm [resolvable:$true] %s150
      %s152 = sshll.u32 [#allocation18], 4
      %s153 = int_to_ptr.vmem [resolvable:$true] %s152
      %158 = dma.hbm_to_vmem [thread:$0]  %s151, 256, %s153, [#allocation17], 64, 64, 4
    $region61: #{butd_forward.1} parent=1 // pred_fallthru
      _
    // Predicated region
    $region62: #{butd_forward.1} parent=1 // pred_check
      _
    $region63: #{butd_forward.1} parent=1 // pred_check_branch
      %160 = sbr.rel (0) target = $region65
    $region64: #{butd_forward.1} parent=1 // pred_region
      %162 = vsyncadd [#allocation20], 0
      %s164 = sshll.u32 %s15, 4
      %s165 = int_to_ptr.hbm [resolvable:$true] %s164
      %s166 = sshll.u32 [#allocation19], 4
      %s167 = int_to_ptr.vmem [resolvable:$true] %s166
      %169 = dma.hbm_to_vmem [thread:$0]  %s165, 16, %s167, [#allocation20]
    $region65: #{butd_forward.1} parent=1 // pred_fallthru
      _
    // Predicated region
    $region66: #{butd_forward.1} parent=1 // pred_check
      _
    $region67: #{butd_forward.1} parent=1 // pred_check_branch
      %171 = sbr.rel (0) target = $region69
    $region68: #{butd_forward.1} parent=1 // pred_region
      %173 = dma.done [#allocation5], 32
    $region69: #{butd_forward.1} parent=1 // pred_fallthru
      _
    // Predicated region
    $region70: #{butd_forward.1} parent=1 // pred_check
      _
    $region71: #{butd_forward.1} parent=1 // pred_check_branch
      %175 = sbr.rel (0) target = $region73
    $region72: #{butd_forward.1} parent=1 // pred_region
      %177 = dma.done [#allocation3], 256
    $region73: #{butd_forward.1} parent=1 // pred_fallthru
      _
    // Predicated region
    $region74: #{butd_forward.1} parent=1 // pred_check
      _
    $region75: #{butd_forward.1} parent=1 // pred_check_branch
      %179 = sbr.rel (0) target = $region77
    $region76: #{butd_forward.1} parent=1 // pred_region
      %181 = dma.done [#allocation8], 256
    $region77: #{butd_forward.1} parent=1 // pred_fallthru
      _
    // Predicated region
    $region78: #{butd_forward.1} parent=1 // pred_check
      _
    $region79: #{butd_forward.1} parent=1 // pred_check_branch
      %183 = sbr.rel (0) target = $region81
    $region80: #{butd_forward.1} parent=1 // pred_region
      %185 = dma.done [#allocation8], 16
    $region81: #{butd_forward.1} parent=1 // pred_fallthru
      _
    // Predicated region
    $region82: #{butd_forward.1} parent=1 // pred_check
      _
    $region83: #{butd_forward.1} parent=1 // pred_check_branch
      %187 = sbr.rel (0) target = $region85
    $region84: #{butd_forward.1} parent=1 // pred_region
      %189 = dma.done [#allocation11], 256
    $region85: #{butd_forward.1} parent=1 // pred_fallthru
      _
    // Predicated region
    $region86: #{butd_forward.1} parent=1 // pred_check
      _
    $region87: #{butd_forward.1} parent=1 // pred_check_branch
      %191 = sbr.rel (0) target = $region89
    $region88: #{butd_forward.1} parent=1 // pred_region
      %193 = dma.done [#allocation11], 256
    $region89: #{butd_forward.1} parent=1 // pred_fallthru
      _
    // Predicated region
    $region90: #{butd_forward.1} parent=1 // pred_check
      _
    $region91: #{butd_forward.1} parent=1 // pred_check_branch
      %195 = sbr.rel (0) target = $region93
    $region92: #{butd_forward.1} parent=1 // pred_region
      %197 = dma.done [#allocation14], 16
    $region93: #{butd_forward.1} parent=1 // pred_fallthru
      _
    // Predicated region
    $region94: #{butd_forward.1} parent=1 // pred_check
      _
    $region95: #{butd_forward.1} parent=1 // pred_check_branch
      %199 = sbr.rel (0) target = $region97
    $region96: #{butd_forward.1} parent=1 // pred_region
      %201 = dma.done [#allocation14], 256
    $region97: #{butd_forward.1} parent=1 // pred_fallthru
      _
    // Predicated region
    $region98: #{butd_forward.1} parent=1 // pred_check
      _
    $region99: #{butd_forward.1} parent=1 // pred_check_branch
      %203 = sbr.rel (0) target = $region101
    $region100: #{butd_forward.1} parent=1 // pred_region
      %205 = dma.done [#allocation17], 16
    $region101: #{butd_forward.1} parent=1 // pred_fallthru
      _
    // Predicated region
    $region102: #{butd_forward.1} parent=1 // pred_check
      _
    $region103: #{butd_forward.1} parent=1 // pred_check_branch
      %207 = sbr.rel (0) target = $region105
    $region104: #{butd_forward.1} parent=1 // pred_region
      %209 = dma.done [#allocation17], 256
    $region105: #{butd_forward.1} parent=1 // pred_fallthru
      _
    // Predicated region
    $region106: #{butd_forward.1} parent=1 // pred_check
      _
    $region107: #{butd_forward.1} parent=1 // pred_check_branch
      %211 = sbr.rel (0) target = $region109
    $region108: #{butd_forward.1} parent=1 // pred_region
      %213 = dma.done [#allocation20], 16
    $region109: #{butd_forward.1} parent=1 // pred_fallthru
      _
    %214 = sfence
    %v216 = vld [vmem:[#allocation6] sm:$0xff]
    %v217 = vld [vmem:[#allocation6 + $0x8] sm:$0xff]
    %v218 = vpack.c.bf16 %v217, %v216
    %v219 = vld [vmem:[#allocation7] sm:$0xf]
    %v220 = vld [vmem:[#allocation7 + $0x4] sm:$0xf]
    %v221 = vld [vmem:[#allocation7 + $0x8] sm:$0xf]
    %v222 = vld [vmem:[#allocation7 + $0xc] sm:$0xf]
    %v227 = vunpack.c.l.b16 %v219
    %v228 = vunpack.c.l.b16 %v220
    %v229 = vunpack.c.l.b16 %v221
    %v230 = vunpack.c.l.b16 %v222
    %v231 = vpack.c.b16 %v228, %v227
    %v232 = vpack.c.b16 %v230, %v229
    %vm235 = vcmask 261120
    %v237 = vsel %vm235, %v218, 0
    %239 = vmatpush.bf16.msra.mxu0 0
    %240 = vmatpush.bf16.msra.mxu0 0
    %241 = vmatpush.bf16.msra.mxu0 0
    %242 = vmatpush.bf16.msra.mxu0 0
    %243 = vmatpush.bf16.msra.mxu0 0
    %244 = vmatpush.bf16.msra.mxu0 0
    %245 = vmatpush.bf16.msra.mxu0 %v232
    %246 = vmatpush.bf16.msra.mxu0 %v231
    %247 = vmatmul.bf16.gmra.mxu0 %v237
    %v248 = vpop.f32.mrf.mxu0
    %v249 = vadd.f32 0.0, %v248
    %v250 = vpop.f32.mrf.mxu0
    %v251 = vadd.f32 0.0, %v250
    %252 = vdwg.mxu0
    %v253 = vld [vmem:[%s4] sm:$0x3]
    %vm254 = vcmp.eq.f32.partialorder %v253, 0.0
    %v255 = vsel %vm254, -1e+18, 0.0
    %v256 = vld [vmem:[#allocation9] sm:$0x1]
    %s257 = sld [smem:[#allocation2]]
    %s258 = scalar_lea.vmem %s1, %s257
    %v259 = vld [vmem:[%s258] sm:$0x1]
    %s260 = sld [smem:[#allocation2 + $0x80]]
    %s261 = scalar_lea.vmem %s1, %s260
    %v262 = vld [vmem:[%s261] sm:$0x1]
    %s263 = sld [smem:[#allocation2 + $0x1]]
    %s264 = scalar_lea.vmem %s1, %s263
    %v265 = vld [vmem:[%s264] sm:$0x1]
    %s266 = sld [smem:[#allocation2 + $0x81]]
    %s267 = scalar_lea.vmem %s1, %s266
    %v268 = vld [vmem:[%s267] sm:$0x1]
    %s269 = sld [smem:[#allocation2 + $0x2]]
    %s270 = scalar_lea.vmem %s1, %s269
    %v271 = vld [vmem:[%s270] sm:$0x1]
    %s272 = sld [smem:[#allocation2 + $0x82]]
    %s273 = scalar_lea.vmem %s1, %s272
    %v274 = vld [vmem:[%s273] sm:$0x1]
    %s275 = sld [smem:[#allocation2 + $0x3]]
    %s276 = scalar_lea.vmem %s1, %s275
    %v277 = vld [vmem:[%s276] sm:$0x1]
    %s278 = sld [smem:[#allocation2 + $0x83]]
    %s279 = scalar_lea.vmem %s1, %s278
    %v280 = vld [vmem:[%s279] sm:$0x1]
    %s281 = sld [smem:[#allocation2 + $0x4]]
    %s282 = scalar_lea.vmem %s1, %s281
    %v283 = vld [vmem:[%s282] sm:$0x1]
    %s284 = sld [smem:[#allocation2 + $0x84]]
    %s285 = scalar_lea.vmem %s1, %s284
    %v286 = vld [vmem:[%s285] sm:$0x1]
    %s287 = sld [smem:[#allocation2 + $0x5]]
    %s288 = scalar_lea.vmem %s1, %s287
    %v289 = vld [vmem:[%s288] sm:$0x1]
    %s290 = sld [smem:[#allocation2 + $0x85]]
    %s291 = scalar_lea.vmem %s1, %s290
    %v292 = vld [vmem:[%s291] sm:$0x1]
    %s293 = sld [smem:[#allocation2 + $0x6]]
    %s294 = scalar_lea.vmem %s1, %s293
    %v295 = vld [vmem:[%s294] sm:$0x1]
    %s296 = sld [smem:[#allocation2 + $0x86]]
    %s297 = scalar_lea.vmem %s1, %s296
    %v298 = vld [vmem:[%s297] sm:$0x1]
    %s299 = sld [smem:[#allocation2 + $0x7]]
    %s300 = scalar_lea.vmem %s1, %s299
    %v301 = vld [vmem:[%s300] sm:$0x1]
    %s302 = sld [smem:[#allocation2 + $0x87]]
    %s303 = scalar_lea.vmem %s1, %s302
    %v304 = vld [vmem:[%s303] sm:$0x1]
    %v306 = vrot.slane %v262, 7
    %v309 = vrot.slane %v265, 6
    %v312 = vrot.slane %v268, 5
    %v315 = vrot.slane %v271, 4
    %v318 = vrot.slane %v274, 3
    %v321 = vrot.slane %v277, 2
    %v324 = vrot.slane %v280, 1
    %v327 = vrot.slane %v286, 7
    %v330 = vrot.slane %v289, 6
    %v333 = vrot.slane %v292, 5
    %v336 = vrot.slane %v295, 4
    %v339 = vrot.slane %v298, 3
    %v342 = vrot.slane %v301, 2
    %v345 = vrot.slane %v304, 1
    %vm347 = vcmask 1040384
    %v348 = vsel %vm347, %v259, %v306
    %vm349 = vcmask 1041408
    %v350 = vsel %vm349, %v348, %v309
    %vm351 = vcmask 1042432
    %v352 = vsel %vm351, %v350, %v312
    %vm353 = vcmask 1043456
    %v354 = vsel %vm353, %v352, %v315
    %vm355 = vcmask 1044480
    %v356 = vsel %vm355, %v354, %v318
    %vm357 = vcmask 1045504
    %v358 = vsel %vm357, %v356, %v321
    %vm359 = vcmask 1046528
    %v360 = vsel %vm359, %v358, %v324
    %v361 = vsel %vm347, %v283, %v327
    %v362 = vsel %vm349, %v361, %v330
    %v363 = vsel %vm351, %v362, %v333
    %v364 = vsel %vm353, %v363, %v336
    %v365 = vsel %vm355, %v364, %v339
    %v366 = vsel %vm357, %v365, %v342
    %v367 = vsel %vm359, %v366, %v345
    %v368 = vpack.c.bf16 %v367, %v360
    %v369 = vld [vmem:[#allocation10] sm:$0xf]
    %v370 = vld [vmem:[#allocation10 + $0x4] sm:$0xf]
    %v371 = vld [vmem:[#allocation10 + $0x8] sm:$0xf]
    %v372 = vld [vmem:[#allocation10 + $0xc] sm:$0xf]
    %v377 = vunpack.c.l.b16 %v369
    %v378 = vunpack.c.l.b16 %v370
    %v379 = vunpack.c.l.b16 %v371
    %v380 = vunpack.c.l.b16 %v372
    %v381 = vpack.c.b16 %v378, %v377
    %v382 = vpack.c.b16 %v380, %v379
    %v386 = vsel %vm235, %v368, 0
    %388 = vmatpush.bf16.msra.mxu0 0
    %389 = vmatpush.bf16.msra.mxu0 0
    %390 = vmatpush.bf16.msra.mxu0 0
    %391 = vmatpush.bf16.msra.mxu0 0
    %392 = vmatpush.bf16.msra.mxu0 0
    %393 = vmatpush.bf16.msra.mxu0 0
    %394 = vmatpush.bf16.msra.mxu0 %v382
    %395 = vmatpush.bf16.msra.mxu0 %v381
    %396 = vmatmul.bf16.gmra.mxu0 %v386
    %v397 = vpop.f32.mrf.mxu0
    %v398 = vadd.f32 0.0, %v397
    %v399 = vpop.f32.mrf.mxu0
    %v400 = vadd.f32 0.0, %v399
    %401 = vdwg.mxu0
    %v402 = vld [vmem:[%s2] sm:$0x3]
    %v403 = vpack.c.bf16 %v402, %v402
    %v404 = vld [vmem:[#allocation12] sm:$0xf]
    %v405 = vld [vmem:[#allocation12 + $0x4] sm:$0xf]
    %v406 = vld [vmem:[#allocation12 + $0x8] sm:$0xf]
    %v407 = vld [vmem:[#allocation12 + $0xc] sm:$0xf]
    %v408 = vld [vmem:[#allocation13] sm:$0x1]
    %v410 = vperm.slane %v408, 0
    %v416 = vunpack.c.l.b16 %v404
    %v417 = vunpack.c.l.b16 %v405
    %v418 = vunpack.c.l.b16 %v406
    %v419 = vunpack.c.l.b16 %v407
    %v420 = vpack.c.b16 %v417, %v416
    %v421 = vpack.c.b16 %v419, %v418
    %v425 = vsel %vm235, %v403, 0
    %427 = vmatpush.bf16.msra.mxu0 0
    %428 = vmatpush.bf16.msra.mxu0 0
    %429 = vmatpush.bf16.msra.mxu0 0
    %430 = vmatpush.bf16.msra.mxu0 0
    %431 = vmatpush.bf16.msra.mxu0 0
    %432 = vmatpush.bf16.msra.mxu0 0
    %433 = vmatpush.bf16.msra.mxu0 %v421
    %434 = vmatpush.bf16.msra.mxu0 %v420
    %435 = vmatmul.bf16.gmra.mxu0 %v425
    %v436 = vpop.f32.mrf.mxu0
    %v437 = vadd.f32 %v410, %v436
    %v438 = vpop.f32.mrf.mxu0
    %439 = vdwg.mxu0
    %v440 = vld [vmem:[%s7] sm:$0xf]
    %v441 = vld [vmem:[%s7 + $0x4] sm:$0xf]
    %v442 = vld [vmem:[%s7 + $0x8] sm:$0xf]
    %v443 = vld [vmem:[%s7 + $0xc] sm:$0xf]
    %v444 = vld [vmem:[%s7 + $0x10] sm:$0xf]
    %v445 = vld [vmem:[%s7 + $0x14] sm:$0xf]
    %v446 = vld [vmem:[%s7 + $0x18] sm:$0xf]
    %v447 = vld [vmem:[%s7 + $0x1c] sm:$0xf]
    %v448 = vld [vmem:[%s11] sm:$0xff]
    %v449 = vld [vmem:[%s11 + $0x8] sm:$0xff]
    %v450 = vld [vmem:[%s11 + $0x10] sm:$0xff]
    %v451 = vld [vmem:[%s11 + $0x18] sm:$0xff]
    %v452 = vld [vmem:[%s11 + $0x20] sm:$0xff]
    %v453 = vld [vmem:[%s11 + $0x28] sm:$0xff]
    %v454 = vld [vmem:[%s11 + $0x30] sm:$0xff]
    %v455 = vld [vmem:[%s11 + $0x38] sm:$0xff]
    %v456 = vld [vmem:[#allocation15] sm:$0xf]
    %v457 = vld [vmem:[#allocation15 + $0x4] sm:$0xf]
    %v458 = vld [vmem:[#allocation15 + $0x8] sm:$0xf]
    %v459 = vld [vmem:[#allocation15 + $0xc] sm:$0xf]
    %v460 = vld [vmem:[#allocation16] sm:$0x1]
    %v461 = vlaneseq
    %v462 = vand.u32 %v461, 127
    %vm463 = vcmp.ge.s32.totalorder %v462, 64
    %vm464 = vcmp.lt.s32.totalorder %v462, 96
    %vm465 = vmand %vm463, %vm464
    %v466 = vsel %vm465, 1.0, 0.5
    %v467 = vsel %vm465, 0.0, 0.5
    %v468 = vpack.c.bf16 0.0, 0.0
    %v477 = vunpack.c.l.b16 %v440
    %v478 = vunpack.c.l.b16 %v441
    %v479 = vunpack.c.l.b16 %v442
    %v480 = vunpack.c.l.b16 %v443
    %v481 = vunpack.c.l.b16 %v444
    %v482 = vunpack.c.l.b16 %v445
    %v483 = vunpack.c.l.b16 %v446
    %v484 = vunpack.c.l.b16 %v447
    %v485 = vpack.c.b16 %v478, %v477
    %v486 = vpack.c.b16 %v480, %v479
    %v487 = vpack.c.b16 %v482, %v481
    %v488 = vpack.c.b16 %v484, %v483
    %vm493 = vcmask 523264
    %v495 = vsel %vm493, %v468, 0
    %497 = vmatpush.bf16.msra.mxu0 0
    %498 = vmatpush.bf16.msra.mxu0 0
    %499 = vmatpush.bf16.msra.mxu0 0
    %500 = vmatpush.bf16.msra.mxu0 0
    %501 = vmatpush.bf16.msra.mxu0 %v488
    %502 = vmatpush.bf16.msra.mxu0 %v487
    %503 = vmatpush.bf16.msra.mxu0 %v486
    %504 = vmatpush.bf16.msra.mxu0 %v485
    %505 = vmatmul.bf16.gmra.mxu0 %v495
    %v506 = vpop.f32.mrf.mxu0
    %v507 = vadd.f32 %v398, %v506
    %v508 = vpop.f32.mrf.mxu0
    %509 = vdwg.mxu0
    %v510 = vadd.f32 %v507, %v437
    %v511 = vmul.f32 %v510, %v466
    %v512 = vtanh.pop %v511
    %v513 = vmul.f32 %v512, %v466
    %v514 = vadd.f32 %v513, %v467
    %v515 = vmul.f32 %v514, 0.0
    %517 = vrot.lane.b32.xlu0 %v514, 64
    %v518 = vpop.permute.xlu0 %517
    %v520 = vmul.f32 %v514, %v518
    %522 = vrot.lane.b32.xlu0 %v520, 32
    %v523 = vpop.permute.xlu0 %522
    %v525 = vadd.f32 %v515, %v523
    %v526 = vtanh.pop %v525
    %528 = vrot.lane.b32.xlu0 %v526, 64
    %v529 = vpop.permute.xlu0 %528
    %v531 = vmul.f32 %v514, %v529
    %533 = vrot.lane.b32.xlu0 %v531, 32
    %v534 = vpop.permute.xlu0 %533
    %v536 = vsel %vm235, %v534, 0.0
    %v537 = vpack.c.bf16 %v536, %v536
    %v546 = vunpack.c.l.b16 %v448
    %v547 = vunpack.c.h.b16 %v448
    %v548 = vunpack.c.l.b16 %v449
    %v549 = vunpack.c.h.b16 %v449
    %v550 = vunpack.c.l.b16 %v450
    %v551 = vunpack.c.h.b16 %v450
    %v552 = vunpack.c.l.b16 %v451
    %v553 = vunpack.c.h.b16 %v451
    %v554 = vunpack.c.l.b16 %v452
    %v555 = vunpack.c.h.b16 %v452
    %v556 = vunpack.c.l.b16 %v453
    %v557 = vunpack.c.h.b16 %v453
    %v558 = vunpack.c.l.b16 %v454
    %v559 = vunpack.c.h.b16 %v454
    %v560 = vunpack.c.l.b16 %v455
    %v561 = vunpack.c.h.b16 %v455
    %v562 = vpack.c.b16 %v548, %v546
    %v563 = vpack.c.b16 %v549, %v547
    %v564 = vpack.c.b16 %v552, %v550
    %v565 = vpack.c.b16 %v553, %v551
    %v566 = vpack.c.b16 %v556, %v554
    %v567 = vpack.c.b16 %v557, %v555
    %v568 = vpack.c.b16 %v560, %v558
    %v569 = vpack.c.b16 %v561, %v559
    %v579 = vsel %vm493, %v537, 0
    %581 = vmatpush.bf16.msra.mxu0 0
    %582 = vmatpush.bf16.msra.mxu0 0
    %583 = vmatpush.bf16.msra.mxu0 0
    %584 = vmatpush.bf16.msra.mxu0 0
    %585 = vmatpush.bf16.msra.mxu0 %v568
    %586 = vmatpush.bf16.msra.mxu0 %v566
    %587 = vmatpush.bf16.msra.mxu0 %v564
    %588 = vmatpush.bf16.msra.mxu0 %v562
    %589 = vmatmul.bf16.gmra.mxu0 %v579
    %v590 = vpop.f32.mrf.mxu0
    %v591 = vadd.f32 0.0, %v590
    %v592 = vpop.f32.mrf.mxu0
    %593 = vdwg.mxu0
    %594 = vmatpush.bf16.msra.mxu0 0
    %595 = vmatpush.bf16.msra.mxu0 0
    %596 = vmatpush.bf16.msra.mxu0 0
    %597 = vmatpush.bf16.msra.mxu0 0
    %598 = vmatpush.bf16.msra.mxu0 %v569
    %599 = vmatpush.bf16.msra.mxu0 %v567
    %600 = vmatpush.bf16.msra.mxu0 %v565
    %601 = vmatpush.bf16.msra.mxu0 %v563
    %602 = vmatmul.bf16.gmra.mxu0 %v579
    %v603 = vpop.f32.mrf.mxu0
    %v604 = vadd.f32 0.0, %v603
    %v605 = vpop.f32.mrf.mxu0
    %606 = vdwg.mxu0
    %v608 = vrot.slane %v604, 1
    %v609 = vperm.slane %v604, 0
    %v610 = vperm.slane %v608, 0
    %v613 = vadd.f32 %v609, %v249
    %v614 = vadd.f32 %v610, %v251
    %v615 = vtanh.pop %v613
    %v616 = vtanh.pop %v614
    %v618 = vperm.slane %v256, 0
    %v620 = vmul.f32 %v615, %v618
    %v621 = vmul.f32 %v616, %v618
    %v622 = vsel %vm235, %v620, 0.0
    %623 = vadd.xlane.f32.xlu0 %v622
    %v624 = vpop.xlane.xlu0 %623
    %v625 = vsel %vm235, %v621, 0.0
    %626 = vadd.xlane.f32.xlu0 %v625
    %v627 = vpop.xlane.xlu0 %626
    %v629 = vperm.slane %v255, 0
    %v630 = vlaneseq
    %v631 = vshrl.u32 %v630, 7
    %633 = vset.pattern.permute.xlu0 %v631
    %634 = vperm.xlu0 %633, %v629
    %v635 = vpop.permute.xlu0 %634
    %v636 = vperm.slane %v255, 1
    %v637 = vlaneseq
    %v638 = vshrl.u32 %v637, 7
    %640 = vset.pattern.permute.xlu0 %v638
    %641 = vperm.xlu0 %640, %v636
    %v642 = vpop.permute.xlu0 %641
    %v645 = vadd.f32 %v624, %v635
    %v646 = vadd.f32 %v627, %v642
    %649 = vset.pattern.permute.xlu0 0
    %650 = vperm.xlu0 %649, %v645
    %v651 = vpop.permute.xlu0 %650
    %652 = vset.pattern.permute.xlu0 0
    %653 = vperm.xlu0 %652, %v646
    %v654 = vpop.permute.xlu0 %653
    %v655 = vperm.slane %v651, %v462
    %v656 = vperm.slane %v654, %v462
    %vm657 = vcmask 1041409
    %v658 = vsel %vm657, %v656, %v655
    %vm660 = vcmask 58368
    %v661 = vsel %vm660, %v658, -inf
    %662 = vmax.xlane.f32.xlu0 %v661
    %v663 = vpop.xlane.xlu0 %662
    %v665 = vperm.slane %v663, 0
    %v666 = vperm.slane %v663, 1
    %v669 = vsub.f32 %v645, %v665
    %v670 = vsub.f32 %v646, %v666
    %v671 = vmul.f32 %v669, 1.442695
    %v672 = vpow.pop %v671
    %v673 = vmul.f32 %v670, 1.442695
    %v674 = vpow.pop %v673
    %677 = vset.pattern.permute.xlu0 0
    %678 = vperm.xlu0 %677, %v672
    %v679 = vpop.permute.xlu0 %678
    %680 = vset.pattern.permute.xlu0 0
    %681 = vperm.xlu0 %680, %v674
    %v682 = vpop.permute.xlu0 %681
    %v683 = vperm.slane %v679, %v462
    %v684 = vperm.slane %v682, %v462
    %v685 = vsel %vm657, %v684, %v683
    %v687 = vsel %vm660, %v685, 0.0
    %688 = vadd.xlane.f32.xlu0 %v687
    %v689 = vpop.xlane.xlu0 %688
    %v690 = vrcp.pop %v689
    %v692 = vperm.slane %v690, 0
    %v693 = vperm.slane %v690, 1
    %v696 = vmul.f32 %v672, %v692
    %v697 = vmul.f32 %v674, %v693
    %699 = vset.pattern.permute.xlu0 0
    %700 = vperm.xlu0 %699, %v696
    %v701 = vpop.permute.xlu0 %700
    %704 = vset.pattern.permute.xlu0 0
    %705 = vperm.xlu0 %704, %v697
    %v706 = vpop.permute.xlu0 %705
    %v708 = vmul.f32 %v701, %v216
    %v709 = vmul.f32 %v706, %v217
    %v710 = vsel %vm235, %v708, 0.0
    %v711 = vrot.slane %v710, 4
    %v712 = vadd.f32 %v710, %v711
    %v713 = vrot.slane %v712, 2
    %v714 = vadd.f32 %v712, %v713
    %v715 = vrot.slane %v714, 1
    %v716 = vadd.f32 %v714, %v715
    %v717 = vsel %vm235, %v709, 0.0
    %v718 = vrot.slane %v717, 4
    %v719 = vadd.f32 %v717, %v718
    %v720 = vrot.slane %v719, 2
    %v721 = vadd.f32 %v719, %v720
    %v722 = vrot.slane %v721, 1
    %v723 = vadd.f32 %v721, %v722
    %v724 = vpack.c.bf16 %v716, %v716
    %v725 = vpack.c.bf16 %v723, %v723
    %v728 = vunpack.c.l.b16 %v724
    %v729 = vunpack.c.l.b16 %v725
    %v730 = vsel %vm657, %v729, %v728
    %v731 = vpack.c.b16 %v730, %v730
    %v736 = vunpack.c.l.b16 %v456
    %v737 = vunpack.c.l.b16 %v457
    %v738 = vunpack.c.l.b16 %v458
    %v739 = vunpack.c.l.b16 %v459
    %v740 = vpack.c.b16 %v737, %v736
    %v741 = vpack.c.b16 %v739, %v738
    %v745 = vsel %vm235, %v731, 0
    %747 = vmatpush.bf16.msra.mxu0 0
    %748 = vmatpush.bf16.msra.mxu0 0
    %749 = vmatpush.bf16.msra.mxu0 0
    %750 = vmatpush.bf16.msra.mxu0 0
    %751 = vmatpush.bf16.msra.mxu0 0
    %752 = vmatpush.bf16.msra.mxu0 0
    %753 = vmatpush.bf16.msra.mxu0 %v741
    %754 = vmatpush.bf16.msra.mxu0 %v740
    %755 = vmatmul.bf16.gmra.mxu0 %v745
    %v756 = vpop.f32.mrf.mxu0
    %v757 = vadd.f32 0.0, %v756
    %v758 = vpop.f32.mrf.mxu0
    %759 = vdwg.mxu0
    %v760 = vadd.f32 %v591, %v757
    %v762 = vperm.slane %v460, 0
    %v764 = vadd.f32 %v760, %v762
    %v765 = vmul.f32 %v764, %v466
    %v766 = vtanh.pop %v765
    %v767 = vmul.f32 %v766, %v466
    %v768 = vadd.f32 %v767, %v467
    %v769 = vmul.f32 %v768, 0.0
    %771 = vrot.lane.b32.xlu0 %v768, 64
    %v772 = vpop.permute.xlu0 %771
    %v774 = vmul.f32 %v768, %v772
    %776 = vrot.lane.b32.xlu0 %v774, 32
    %v777 = vpop.permute.xlu0 %776
    %v779 = vadd.f32 %v769, %v777
    %v780 = vtanh.pop %v779
    %782 = vrot.lane.b32.xlu0 %v780, 64
    %v783 = vpop.permute.xlu0 %782
    %v785 = vmul.f32 %v768, %v783
    %787 = vrot.lane.b32.xlu0 %v785, 32
    %v788 = vpop.permute.xlu0 %787
    %790 = vrot.lane.b32.xlu0 %v531, 64
    %v791 = vpop.permute.xlu0 %790
    %v793 = vsel %vm235, %v788, %v791
    %v794 = vpack.c.bf16 %v793, %v793
    %v796 = vrot.slane %v398, 2
    %v799 = vsel %vm493, %v794, 0
    %801 = vmatpush.bf16.msra.mxu0 0
    %802 = vmatpush.bf16.msra.mxu0 0
    %803 = vmatpush.bf16.msra.mxu0 0
    %804 = vmatpush.bf16.msra.mxu0 0
    %805 = vmatpush.bf16.msra.mxu0 %v488
    %806 = vmatpush.bf16.msra.mxu0 %v487
    %807 = vmatpush.bf16.msra.mxu0 %v486
    %808 = vmatpush.bf16.msra.mxu0 %v485
    %809 = vmatmul.bf16.gmra.mxu0 %v799
    %v810 = vpop.f32.mrf.mxu0
    %v811 = vadd.f32 %v796, %v810
    %v812 = vpop.f32.mrf.mxu0
    %813 = vdwg.mxu0
    %v814 = vadd.f32 %v811, %v437
    %v815 = vmul.f32 %v814, %v466
    %v816 = vtanh.pop %v815
    %v817 = vmul.f32 %v816, %v466
    %v818 = vadd.f32 %v817, %v467
    %v819 = vmul.f32 %v818, %v525
    %821 = vrot.lane.b32.xlu0 %v818, 64
    %v822 = vpop.permute.xlu0 %821
    %v824 = vmul.f32 %v818, %v822
    %826 = vrot.lane.b32.xlu0 %v824, 32
    %v827 = vpop.permute.xlu0 %826
    %v829 = vadd.f32 %v819, %v827
    %v830 = vtanh.pop %v829
    %832 = vrot.lane.b32.xlu0 %v830, 64
    %v833 = vpop.permute.xlu0 %832
    %v835 = vmul.f32 %v818, %v833
    %837 = vrot.lane.b32.xlu0 %v835, 32
    %v838 = vpop.permute.xlu0 %837
    %840 = vrot.lane.b32.xlu0 %v785, 64
    %v841 = vpop.permute.xlu0 %840
    %v843 = vsel %vm235, %v838, %v841
    %v844 = vpack.c.bf16 %v843, %v843
    %v846 = vsel %vm493, %v844, 0
    %848 = vmatpush.bf16.msra.mxu0 0
    %849 = vmatpush.bf16.msra.mxu0 0
    %850 = vmatpush.bf16.msra.mxu0 0
    %851 = vmatpush.bf16.msra.mxu0 0
    %852 = vmatpush.bf16.msra.mxu0 %v568
    %853 = vmatpush.bf16.msra.mxu0 %v566
    %854 = vmatpush.bf16.msra.mxu0 %v564
    %855 = vmatpush.bf16.msra.mxu0 %v562
    %856 = vmatmul.bf16.gmra.mxu0 %v846
    %v857 = vpop.f32.mrf.mxu0
    %v858 = vadd.f32 0.0, %v857
    %v859 = vpop.f32.mrf.mxu0
    %860 = vdwg.mxu0
    %861 = vmatpush.bf16.msra.mxu0 0
    %862 = vmatpush.bf16.msra.mxu0 0
    %863 = vmatpush.bf16.msra.mxu0 0
    %864 = vmatpush.bf16.msra.mxu0 0
    %865 = vmatpush.bf16.msra.mxu0 %v569
    %866 = vmatpush.bf16.msra.mxu0 %v567
    %867 = vmatpush.bf16.msra.mxu0 %v565
    %868 = vmatpush.bf16.msra.mxu0 %v563
    %869 = vmatmul.bf16.gmra.mxu0 %v846
    %v870 = vpop.f32.mrf.mxu0
    %v871 = vadd.f32 0.0, %v870
    %v872 = vpop.f32.mrf.mxu0
    %873 = vdwg.mxu0
    %v875 = vrot.slane %v871, 1
    %v876 = vperm.slane %v871, 0
    %v877 = vperm.slane %v875, 0
    %v880 = vadd.f32 %v876, %v249
    %v881 = vadd.f32 %v877, %v251
    %v882 = vtanh.pop %v880
    %v883 = vtanh.pop %v881
    %v884 = vmul.f32 %v882, %v618
    %v885 = vmul.f32 %v883, %v618
    %v886 = vsel %vm235, %v884, 0.0
    %887 = vadd.xlane.f32.xlu0 %v886
    %v888 = vpop.xlane.xlu0 %887
    %v889 = vsel %vm235, %v885, 0.0
    %890 = vadd.xlane.f32.xlu0 %v889
    %v891 = vpop.xlane.xlu0 %890
    %v892 = vadd.f32 %v888, %v635
    %v893 = vadd.f32 %v891, %v642
    %896 = vset.pattern.permute.xlu0 0
    %897 = vperm.xlu0 %896, %v892
    %v898 = vpop.permute.xlu0 %897
    %899 = vset.pattern.permute.xlu0 0
    %900 = vperm.xlu0 %899, %v893
    %v901 = vpop.permute.xlu0 %900
    %v902 = vperm.slane %v898, %v462
    %v903 = vperm.slane %v901, %v462
    %v904 = vsel %vm657, %v903, %v902
    %v906 = vsel %vm660, %v904, -inf
    %907 = vmax.xlane.f32.xlu0 %v906
    %v908 = vpop.xlane.xlu0 %907
    %v910 = vperm.slane %v908, 0
    %v911 = vperm.slane %v908, 1
    %v914 = vsub.f32 %v892, %v910
    %v915 = vsub.f32 %v893, %v911
    %v916 = vmul.f32 %v914, 1.442695
    %v917 = vpow.pop %v916
    %v918 = vmul.f32 %v915, 1.442695
    %v919 = vpow.pop %v918
    %922 = vset.pattern.permute.xlu0 0
    %923 = vperm.xlu0 %922, %v917
    %v924 = vpop.permute.xlu0 %923
    %925 = vset.pattern.permute.xlu0 0
    %926 = vperm.xlu0 %925, %v919
    %v927 = vpop.permute.xlu0 %926
    %v928 = vperm.slane %v924, %v462
    %v929 = vperm.slane %v927, %v462
    %v930 = vsel %vm657, %v929, %v928
    %v932 = vsel %vm660, %v930, 0.0
    %933 = vadd.xlane.f32.xlu0 %v932
    %v934 = vpop.xlane.xlu0 %933
    %v935 = vrcp.pop %v934
    %v937 = vperm.slane %v935, 0
    %v938 = vperm.slane %v935, 1
    %v941 = vmul.f32 %v917, %v937
    %v942 = vmul.f32 %v919, %v938
    %944 = vset.pattern.permute.xlu0 0
    %945 = vperm.xlu0 %944, %v941
    %v946 = vpop.permute.xlu0 %945
    %949 = vset.pattern.permute.xlu0 0
    %950 = vperm.xlu0 %949, %v942
    %v951 = vpop.permute.xlu0 %950
    %v953 = vmul.f32 %v946, %v216
    %v954 = vmul.f32 %v951, %v217
    %v955 = vsel %vm235, %v953, 0.0
    %v956 = vrot.slane %v955, 4
    %v957 = vadd.f32 %v955, %v956
    %v958 = vrot.slane %v957, 2
    %v959 = vadd.f32 %v957, %v958
    %v960 = vrot.slane %v959, 1
    %v961 = vadd.f32 %v959, %v960
    %v962 = vsel %vm235, %v954, 0.0
    %v963 = vrot.slane %v962, 4
    %v964 = vadd.f32 %v962, %v963
    %v965 = vrot.slane %v964, 2
    %v966 = vadd.f32 %v964, %v965
    %v967 = vrot.slane %v966, 1
    %v968 = vadd.f32 %v966, %v967
    %v969 = vpack.c.bf16 %v961, %v961
    %v970 = vpack.c.bf16 %v968, %v968
    %v973 = vunpack.c.l.b16 %v969
    %v974 = vunpack.c.l.b16 %v970
    %v975 = vsel %vm657, %v974, %v973
    %v976 = vpack.c.b16 %v975, %v975
    %v978 = vsel %vm235, %v976, 0
    %980 = vmatpush.bf16.msra.mxu0 0
    %981 = vmatpush.bf16.msra.mxu0 0
    %982 = vmatpush.bf16.msra.mxu0 0
    %983 = vmatpush.bf16.msra.mxu0 0
    %984 = vmatpush.bf16.msra.mxu0 0
    %985 = vmatpush.bf16.msra.mxu0 0
    %986 = vmatpush.bf16.msra.mxu0 %v741
    %987 = vmatpush.bf16.msra.mxu0 %v740
    %988 = vmatmul.bf16.gmra.mxu0 %v978
    %v989 = vpop.f32.mrf.mxu0
    %v990 = vadd.f32 0.0, %v989
    %v991 = vpop.f32.mrf.mxu0
    %992 = vdwg.mxu0
    %v993 = vadd.f32 %v858, %v990
    %v994 = vadd.f32 %v993, %v762
    %v995 = vmul.f32 %v994, %v466
    %v996 = vtanh.pop %v995
    %v997 = vmul.f32 %v996, %v466
    %v998 = vadd.f32 %v997, %v467
    %v999 = vmul.f32 %v998, %v779
    %1001 = vrot.lane.b32.xlu0 %v998, 64
    %v1002 = vpop.permute.xlu0 %1001
    %v1004 = vmul.f32 %v998, %v1002
    %1006 = vrot.lane.b32.xlu0 %v1004, 32
    %v1007 = vpop.permute.xlu0 %1006
    %v1009 = vadd.f32 %v999, %v1007
    %v1010 = vtanh.pop %v1009
    %1012 = vrot.lane.b32.xlu0 %v1010, 64
    %v1013 = vpop.permute.xlu0 %1012
    %v1015 = vmul.f32 %v998, %v1013
    %1017 = vrot.lane.b32.xlu0 %v1015, 32
    %v1018 = vpop.permute.xlu0 %1017
    %1020 = vrot.lane.b32.xlu0 %v835, 64
    %v1021 = vpop.permute.xlu0 %1020
    %v1023 = vsel %vm235, %v1018, %v1021
    %v1024 = vpack.c.bf16 %v1023, %v1023
    %v1025 = vrot.slane %v398, 4
    %v1028 = vsel %vm493, %v1024, 0
    %1030 = vmatpush.bf16.msra.mxu0 0
    %1031 = vmatpush.bf16.msra.mxu0 0
    %1032 = vmatpush.bf16.msra.mxu0 0
    %1033 = vmatpush.bf16.msra.mxu0 0
    %1034 = vmatpush.bf16.msra.mxu0 %v488
    %1035 = vmatpush.bf16.msra.mxu0 %v487
    %1036 = vmatpush.bf16.msra.mxu0 %v486
    %1037 = vmatpush.bf16.msra.mxu0 %v485
    %1038 = vmatmul.bf16.gmra.mxu0 %v1028
    %v1039 = vpop.f32.mrf.mxu0
    %v1040 = vadd.f32 %v1025, %v1039
    %v1041 = vpop.f32.mrf.mxu0
    %1042 = vdwg.mxu0
    %v1043 = vadd.f32 %v1040, %v437
    %v1044 = vmul.f32 %v1043, %v466
    %v1045 = vtanh.pop %v1044
    %v1046 = vmul.f32 %v1045, %v466
    %v1047 = vadd.f32 %v1046, %v467
    %v1048 = vmul.f32 %v1047, %v829
    %1050 = vrot.lane.b32.xlu0 %v1047, 64
    %v1051 = vpop.permute.xlu0 %1050
    %v1053 = vmul.f32 %v1047, %v1051
    %1055 = vrot.lane.b32.xlu0 %v1053, 32
    %v1056 = vpop.permute.xlu0 %1055
    %v1058 = vadd.f32 %v1048, %v1056
    %v1059 = vtanh.pop %v1058
    %1061 = vrot.lane.b32.xlu0 %v1059, 64
    %v1062 = vpop.permute.xlu0 %1061
    %v1064 = vmul.f32 %v1047, %v1062
    %1066 = vrot.lane.b32.xlu0 %v1064, 32
    %v1067 = vpop.permute.xlu0 %1066
    %1069 = vrot.lane.b32.xlu0 %v1015, 64
    %v1070 = vpop.permute.xlu0 %1069
    %v1072 = vsel %vm235, %v1067, %v1070
    %v1073 = vpack.c.bf16 %v1072, %v1072
    %v1075 = vsel %vm493, %v1073, 0
    %1077 = vmatpush.bf16.msra.mxu0 0
    %1078 = vmatpush.bf16.msra.mxu0 0
    %1079 = vmatpush.bf16.msra.mxu0 0
    %1080 = vmatpush.bf16.msra.mxu0 0
    %1081 = vmatpush.bf16.msra.mxu0 %v568
    %1082 = vmatpush.bf16.msra.mxu0 %v566
    %1083 = vmatpush.bf16.msra.mxu0 %v564
    %1084 = vmatpush.bf16.msra.mxu0 %v562
    %1085 = vmatmul.bf16.gmra.mxu0 %v1075
    %v1086 = vpop.f32.mrf.mxu0
    %v1087 = vadd.f32 0.0, %v1086
    %v1088 = vpop.f32.mrf.mxu0
    %1089 = vdwg.mxu0
    %1090 = vmatpush.bf16.msra.mxu0 0
    %1091 = vmatpush.bf16.msra.mxu0 0
    %1092 = vmatpush.bf16.msra.mxu0 0
    %1093 = vmatpush.bf16.msra.mxu0 0
    %1094 = vmatpush.bf16.msra.mxu0 %v569
    %1095 = vmatpush.bf16.msra.mxu0 %v567
    %1096 = vmatpush.bf16.msra.mxu0 %v565
    %1097 = vmatpush.bf16.msra.mxu0 %v563
    %1098 = vmatmul.bf16.gmra.mxu0 %v1075
    %v1099 = vpop.f32.mrf.mxu0
    %v1100 = vadd.f32 0.0, %v1099
    %v1101 = vpop.f32.mrf.mxu0
    %1102 = vdwg.mxu0
    %v1104 = vrot.slane %v1100, 1
    %v1105 = vperm.slane %v1100, 0
    %v1106 = vperm.slane %v1104, 0
    %v1109 = vadd.f32 %v1105, %v249
    %v1110 = vadd.f32 %v1106, %v251
    %v1111 = vtanh.pop %v1109
    %v1112 = vtanh.pop %v1110
    %v1113 = vmul.f32 %v1111, %v618
    %v1114 = vmul.f32 %v1112, %v618
    %v1115 = vsel %vm235, %v1113, 0.0
    %1116 = vadd.xlane.f32.xlu0 %v1115
    %v1117 = vpop.xlane.xlu0 %1116
    %v1118 = vsel %vm235, %v1114, 0.0
    %1119 = vadd.xlane.f32.xlu0 %v1118
    %v1120 = vpop.xlane.xlu0 %1119
    %v1121 = vadd.f32 %v1117, %v635
    %v1122 = vadd.f32 %v1120, %v642
    %1125 = vset.pattern.permute.xlu0 0
    %1126 = vperm.xlu0 %1125, %v1121
    %v1127 = vpop.permute.xlu0 %1126
    %1128 = vset.pattern.permute.xlu0 0
    %1129 = vperm.xlu0 %1128, %v1122
    %v1130 = vpop.permute.xlu0 %1129
    %v1131 = vperm.slane %v1127, %v462
    %v1132 = vperm.slane %v1130, %v462
    %v1133 = vsel %vm657, %v1132, %v1131
    %v1135 = vsel %vm660, %v1133, -inf
    %1136 = vmax.xlane.f32.xlu0 %v1135
    %v1137 = vpop.xlane.xlu0 %1136
    %v1139 = vperm.slane %v1137, 0
    %v1140 = vperm.slane %v1137, 1
    %v1143 = vsub.f32 %v1121, %v1139
    %v1144 = vsub.f32 %v1122, %v1140
    %v1145 = vmul.f32 %v1143, 1.442695
    %v1146 = vpow.pop %v1145
    %v1147 = vmul.f32 %v1144, 1.442695
    %v1148 = vpow.pop %v1147
    %1151 = vset.pattern.permute.xlu0 0
    %1152 = vperm.xlu0 %1151, %v1146
    %v1153 = vpop.permute.xlu0 %1152
    %1154 = vset.pattern.permute.xlu0 0
    %1155 = vperm.xlu0 %1154, %v1148
    %v1156 = vpop.permute.xlu0 %1155
    %v1157 = vperm.slane %v1153, %v462
    %v1158 = vperm.slane %v1156, %v462
    %v1159 = vsel %vm657, %v1158, %v1157
    %v1161 = vsel %vm660, %v1159, 0.0
    %1162 = vadd.xlane.f32.xlu0 %v1161
    %v1163 = vpop.xlane.xlu0 %1162
    %v1164 = vrcp.pop %v1163
    %v1166 = vperm.slane %v1164, 0
    %v1167 = vperm.slane %v1164, 1
    %v1170 = vmul.f32 %v1146, %v1166
    %v1171 = vmul.f32 %v1148, %v1167
    %1173 = vset.pattern.permute.xlu0 0
    %1174 = vperm.xlu0 %1173, %v1170
    %v1175 = vpop.permute.xlu0 %1174
    %1178 = vset.pattern.permute.xlu0 0
    %1179 = vperm.xlu0 %1178, %v1171
    %v1180 = vpop.permute.xlu0 %1179
    %v1182 = vmul.f32 %v1175, %v216
    %v1183 = vmul.f32 %v1180, %v217
    %v1184 = vsel %vm235, %v1182, 0.0
    %v1185 = vrot.slane %v1184, 4
    %v1186 = vadd.f32 %v1184, %v1185
    %v1187 = vrot.slane %v1186, 2
    %v1188 = vadd.f32 %v1186, %v1187
    %v1189 = vrot.slane %v1188, 1
    %v1190 = vadd.f32 %v1188, %v1189
    %v1191 = vsel %vm235, %v1183, 0.0
    %v1192 = vrot.slane %v1191, 4
    %v1193 = vadd.f32 %v1191, %v1192
    %v1194 = vrot.slane %v1193, 2
    %v1195 = vadd.f32 %v1193, %v1194
    %v1196 = vrot.slane %v1195, 1
    %v1197 = vadd.f32 %v1195, %v1196
    %v1198 = vpack.c.bf16 %v1190, %v1190
    %v1199 = vpack.c.bf16 %v1197, %v1197
    %v1202 = vunpack.c.l.b16 %v1198
    %v1203 = vunpack.c.l.b16 %v1199
    %v1204 = vsel %vm657, %v1203, %v1202
    %v1205 = vpack.c.b16 %v1204, %v1204
    %v1207 = vsel %vm235, %v1205, 0
    %1209 = vmatpush.bf16.msra.mxu0 0
    %1210 = vmatpush.bf16.msra.mxu0 0
    %1211 = vmatpush.bf16.msra.mxu0 0
    %1212 = vmatpush.bf16.msra.mxu0 0
    %1213 = vmatpush.bf16.msra.mxu0 0
    %1214 = vmatpush.bf16.msra.mxu0 0
    %1215 = vmatpush.bf16.msra.mxu0 %v741
    %1216 = vmatpush.bf16.msra.mxu0 %v740
    %1217 = vmatmul.bf16.gmra.mxu0 %v1207
    %v1218 = vpop.f32.mrf.mxu0
    %v1219 = vadd.f32 0.0, %v1218
    %v1220 = vpop.f32.mrf.mxu0
    %1221 = vdwg.mxu0
    %v1222 = vadd.f32 %v1087, %v1219
    %v1223 = vadd.f32 %v1222, %v762
    %v1224 = vmul.f32 %v1223, %v466
    %v1225 = vtanh.pop %v1224
    %v1226 = vmul.f32 %v1225, %v466
    %v1227 = vadd.f32 %v1226, %v467
    %v1228 = vmul.f32 %v1227, %v1009
    %1230 = vrot.lane.b32.xlu0 %v1227, 64
    %v1231 = vpop.permute.xlu0 %1230
    %v1233 = vmul.f32 %v1227, %v1231
    %1235 = vrot.lane.b32.xlu0 %v1233, 32
    %v1236 = vpop.permute.xlu0 %1235
    %v1238 = vadd.f32 %v1228, %v1236
    %v1239 = vtanh.pop %v1238
    %1241 = vrot.lane.b32.xlu0 %v1239, 64
    %v1242 = vpop.permute.xlu0 %1241
    %v1244 = vmul.f32 %v1227, %v1242
    %1246 = vrot.lane.b32.xlu0 %v1244, 32
    %v1247 = vpop.permute.xlu0 %1246
    %1249 = vrot.lane.b32.xlu0 %v1064, 64
    %v1250 = vpop.permute.xlu0 %1249
    %v1252 = vsel %vm235, %v1247, %v1250
    %v1253 = vpack.c.bf16 %v1252, %v1252
    %v1254 = vrot.slane %v398, 6
    %v1257 = vsel %vm493, %v1253, 0
    %1259 = vmatpush.bf16.msra.mxu0 0
    %1260 = vmatpush.bf16.msra.mxu0 0
    %1261 = vmatpush.bf16.msra.mxu0 0
    %1262 = vmatpush.bf16.msra.mxu0 0
    %1263 = vmatpush.bf16.msra.mxu0 %v488
    %1264 = vmatpush.bf16.msra.mxu0 %v487
    %1265 = vmatpush.bf16.msra.mxu0 %v486
    %1266 = vmatpush.bf16.msra.mxu0 %v485
    %1267 = vmatmul.bf16.gmra.mxu0 %v1257
    %v1268 = vpop.f32.mrf.mxu0
    %v1269 = vadd.f32 %v1254, %v1268
    %v1270 = vpop.f32.mrf.mxu0
    %1271 = vdwg.mxu0
    %v1272 = vadd.f32 %v1269, %v437
    %v1273 = vmul.f32 %v1272, %v466
    %v1274 = vtanh.pop %v1273
    %v1275 = vmul.f32 %v1274, %v466
    %v1276 = vadd.f32 %v1275, %v467
    %v1277 = vmul.f32 %v1276, %v1058
    %1279 = vrot.lane.b32.xlu0 %v1276, 64
    %v1280 = vpop.permute.xlu0 %1279
    %v1282 = vmul.f32 %v1276, %v1280
    %1284 = vrot.lane.b32.xlu0 %v1282, 32
    %v1285 = vpop.permute.xlu0 %1284
    %v1287 = vadd.f32 %v1277, %v1285
    %v1288 = vtanh.pop %v1287
    %1290 = vrot.lane.b32.xlu0 %v1288, 64
    %v1291 = vpop.permute.xlu0 %1290
    %v1293 = vmul.f32 %v1276, %v1291
    %1295 = vrot.lane.b32.xlu0 %v1293, 32
    %v1296 = vpop.permute.xlu0 %1295
    %1298 = vrot.lane.b32.xlu0 %v1244, 64
    %v1299 = vpop.permute.xlu0 %1298
    %v1301 = vsel %vm235, %v1296, %v1299
    %v1302 = vpack.c.bf16 %v1301, %v1301
    %v1304 = vsel %vm493, %v1302, 0
    %1306 = vmatpush.bf16.msra.mxu0 0
    %1307 = vmatpush.bf16.msra.mxu0 0
    %1308 = vmatpush.bf16.msra.mxu0 0
    %1309 = vmatpush.bf16.msra.mxu0 0
    %1310 = vmatpush.bf16.msra.mxu0 %v568
    %1311 = vmatpush.bf16.msra.mxu0 %v566
    %1312 = vmatpush.bf16.msra.mxu0 %v564
    %1313 = vmatpush.bf16.msra.mxu0 %v562
    %1314 = vmatmul.bf16.gmra.mxu0 %v1304
    %v1315 = vpop.f32.mrf.mxu0
    %v1316 = vadd.f32 0.0, %v1315
    %v1317 = vpop.f32.mrf.mxu0
    %1318 = vdwg.mxu0
    %1319 = vmatpush.bf16.msra.mxu0 0
    %1320 = vmatpush.bf16.msra.mxu0 0
    %1321 = vmatpush.bf16.msra.mxu0 0
    %1322 = vmatpush.bf16.msra.mxu0 0
    %1323 = vmatpush.bf16.msra.mxu0 %v569
    %1324 = vmatpush.bf16.msra.mxu0 %v567
    %1325 = vmatpush.bf16.msra.mxu0 %v565
    %1326 = vmatpush.bf16.msra.mxu0 %v563
    %1327 = vmatmul.bf16.gmra.mxu0 %v1304
    %v1328 = vpop.f32.mrf.mxu0
    %v1329 = vadd.f32 0.0, %v1328
    %v1330 = vpop.f32.mrf.mxu0
    %1331 = vdwg.mxu0
    %v1333 = vrot.slane %v1329, 1
    %v1334 = vperm.slane %v1329, 0
    %v1335 = vperm.slane %v1333, 0
    %v1338 = vadd.f32 %v1334, %v249
    %v1339 = vadd.f32 %v1335, %v251
    %v1340 = vtanh.pop %v1338
    %v1341 = vtanh.pop %v1339
    %v1342 = vmul.f32 %v1340, %v618
    %v1343 = vmul.f32 %v1341, %v618
    %v1344 = vsel %vm235, %v1342, 0.0
    %1345 = vadd.xlane.f32.xlu0 %v1344
    %v1346 = vpop.xlane.xlu0 %1345
    %v1347 = vsel %vm235, %v1343, 0.0
    %1348 = vadd.xlane.f32.xlu0 %v1347
    %v1349 = vpop.xlane.xlu0 %1348
    %v1350 = vadd.f32 %v1346, %v635
    %v1351 = vadd.f32 %v1349, %v642
    %1354 = vset.pattern.permute.xlu0 0
    %1355 = vperm.xlu0 %1354, %v1350
    %v1356 = vpop.permute.xlu0 %1355
    %1357 = vset.pattern.permute.xlu0 0
    %1358 = vperm.xlu0 %1357, %v1351
    %v1359 = vpop.permute.xlu0 %1358
    %v1360 = vperm.slane %v1356, %v462
    %v1361 = vperm.slane %v1359, %v462
    %v1362 = vsel %vm657, %v1361, %v1360
    %v1364 = vsel %vm660, %v1362, -inf
    %1365 = vmax.xlane.f32.xlu0 %v1364
    %v1366 = vpop.xlane.xlu0 %1365
    %v1368 = vperm.slane %v1366, 0
    %v1369 = vperm.slane %v1366, 1
    %v1372 = vsub.f32 %v1350, %v1368
    %v1373 = vsub.f32 %v1351, %v1369
    %v1374 = vmul.f32 %v1372, 1.442695
    %v1375 = vpow.pop %v1374
    %v1376 = vmul.f32 %v1373, 1.442695
    %v1377 = vpow.pop %v1376
    %1380 = vset.pattern.permute.xlu0 0
    %1381 = vperm.xlu0 %1380, %v1375
    %v1382 = vpop.permute.xlu0 %1381
    %1383 = vset.pattern.permute.xlu0 0
    %1384 = vperm.xlu0 %1383, %v1377
    %v1385 = vpop.permute.xlu0 %1384
    %v1386 = vperm.slane %v1382, %v462
    %v1387 = vperm.slane %v1385, %v462
    %v1388 = vsel %vm657, %v1387, %v1386
    %v1390 = vsel %vm660, %v1388, 0.0
    %1391 = vadd.xlane.f32.xlu0 %v1390
    %v1392 = vpop.xlane.xlu0 %1391
    %v1393 = vrcp.pop %v1392
    %v1395 = vperm.slane %v1393, 0
    %v1396 = vperm.slane %v1393, 1
    %v1399 = vmul.f32 %v1375, %v1395
    %v1400 = vmul.f32 %v1377, %v1396
    %1402 = vset.pattern.permute.xlu0 0
    %1403 = vperm.xlu0 %1402, %v1399
    %v1404 = vpop.permute.xlu0 %1403
    %1407 = vset.pattern.permute.xlu0 0
    %1408 = vperm.xlu0 %1407, %v1400
    %v1409 = vpop.permute.xlu0 %1408
    %v1411 = vmul.f32 %v1404, %v216
    %v1412 = vmul.f32 %v1409, %v217
    %v1413 = vsel %vm235, %v1411, 0.0
    %v1414 = vrot.slane %v1413, 4
    %v1415 = vadd.f32 %v1413, %v1414
    %v1416 = vrot.slane %v1415, 2
    %v1417 = vadd.f32 %v1415, %v1416
    %v1418 = vrot.slane %v1417, 1
    %v1419 = vadd.f32 %v1417, %v1418
    %v1420 = vsel %vm235, %v1412, 0.0
    %v1421 = vrot.slane %v1420, 4
    %v1422 = vadd.f32 %v1420, %v1421
    %v1423 = vrot.slane %v1422, 2
    %v1424 = vadd.f32 %v1422, %v1423
    %v1425 = vrot.slane %v1424, 1
    %v1426 = vadd.f32 %v1424, %v1425
    %v1427 = vpack.c.bf16 %v1419, %v1419
    %v1428 = vpack.c.bf16 %v1426, %v1426
    %v1431 = vunpack.c.l.b16 %v1427
    %v1432 = vunpack.c.l.b16 %v1428
    %v1433 = vsel %vm657, %v1432, %v1431
    %v1434 = vpack.c.b16 %v1433, %v1433
    %v1436 = vsel %vm235, %v1434, 0
    %1438 = vmatpush.bf16.msra.mxu0 0
    %1439 = vmatpush.bf16.msra.mxu0 0
    %1440 = vmatpush.bf16.msra.mxu0 0
    %1441 = vmatpush.bf16.msra.mxu0 0
    %1442 = vmatpush.bf16.msra.mxu0 0
    %1443 = vmatpush.bf16.msra.mxu0 0
    %1444 = vmatpush.bf16.msra.mxu0 %v741
    %1445 = vmatpush.bf16.msra.mxu0 %v740
    %1446 = vmatmul.bf16.gmra.mxu0 %v1436
    %v1447 = vpop.f32.mrf.mxu0
    %v1448 = vadd.f32 0.0, %v1447
    %v1449 = vpop.f32.mrf.mxu0
    %1450 = vdwg.mxu0
    %v1451 = vadd.f32 %v1316, %v1448
    %v1452 = vadd.f32 %v1451, %v762
    %v1453 = vmul.f32 %v1452, %v466
    %v1454 = vtanh.pop %v1453
    %v1455 = vmul.f32 %v1454, %v466
    %v1456 = vadd.f32 %v1455, %v467
    %v1457 = vmul.f32 %v1456, %v1238
    %1459 = vrot.lane.b32.xlu0 %v1456, 64
    %v1460 = vpop.permute.xlu0 %1459
    %v1462 = vmul.f32 %v1456, %v1460
    %1464 = vrot.lane.b32.xlu0 %v1462, 32
    %v1465 = vpop.permute.xlu0 %1464
    %v1467 = vadd.f32 %v1457, %v1465
    %v1468 = vtanh.pop %v1467
    %1470 = vrot.lane.b32.xlu0 %v1468, 64
    %v1471 = vpop.permute.xlu0 %1470
    %v1473 = vmul.f32 %v1456, %v1471
    %1475 = vrot.lane.b32.xlu0 %v1473, 32
    %v1476 = vpop.permute.xlu0 %1475
    %1478 = vrot.lane.b32.xlu0 %v1293, 64
    %v1479 = vpop.permute.xlu0 %1478
    %v1481 = vsel %vm235, %v1476, %v1479
    %v1482 = vpack.c.bf16 %v1481, %v1481
    %v1484 = vsel %vm493, %v1482, 0
    %1486 = vmatpush.bf16.msra.mxu0 0
    %1487 = vmatpush.bf16.msra.mxu0 0
    %1488 = vmatpush.bf16.msra.mxu0 0
    %1489 = vmatpush.bf16.msra.mxu0 0
    %1490 = vmatpush.bf16.msra.mxu0 %v488
    %1491 = vmatpush.bf16.msra.mxu0 %v487
    %1492 = vmatpush.bf16.msra.mxu0 %v486
    %1493 = vmatpush.bf16.msra.mxu0 %v485
    %1494 = vmatmul.bf16.gmra.mxu0 %v1484
    %v1495 = vpop.f32.mrf.mxu0
    %v1496 = vadd.f32 %v400, %v1495
    %v1497 = vpop.f32.mrf.mxu0
    %1498 = vdwg.mxu0
    %v1499 = vadd.f32 %v1496, %v437
    %v1500 = vmul.f32 %v1499, %v466
    %v1501 = vtanh.pop %v1500
    %v1502 = vmul.f32 %v1501, %v466
    %v1503 = vadd.f32 %v1502, %v467
    %v1504 = vmul.f32 %v1503, %v1287
    %1506 = vrot.lane.b32.xlu0 %v1503, 64
    %v1507 = vpop.permute.xlu0 %1506
    %v1509 = vmul.f32 %v1503, %v1507
    %1511 = vrot.lane.b32.xlu0 %v1509, 32
    %v1512 = vpop.permute.xlu0 %1511
    %v1514 = vadd.f32 %v1504, %v1512
    %v1515 = vtanh.pop %v1514
    %1517 = vrot.lane.b32.xlu0 %v1515, 64
    %v1518 = vpop.permute.xlu0 %1517
    %v1520 = vmul.f32 %v1503, %v1518
    %1522 = vrot.lane.b32.xlu0 %v1520, 32
    %v1523 = vpop.permute.xlu0 %1522
    %1525 = vrot.lane.b32.xlu0 %v1473, 64
    %v1526 = vpop.permute.xlu0 %1525
    %v1528 = vsel %vm235, %v1523, %v1526
    %v1529 = vpack.c.bf16 %v1528, %v1528
    %v1531 = vsel %vm493, %v1529, 0
    %1533 = vmatpush.bf16.msra.mxu0 0
    %1534 = vmatpush.bf16.msra.mxu0 0
    %1535 = vmatpush.bf16.msra.mxu0 0
    %1536 = vmatpush.bf16.msra.mxu0 0
    %1537 = vmatpush.bf16.msra.mxu0 %v568
    %1538 = vmatpush.bf16.msra.mxu0 %v566
    %1539 = vmatpush.bf16.msra.mxu0 %v564
    %1540 = vmatpush.bf16.msra.mxu0 %v562
    %1541 = vmatmul.bf16.gmra.mxu0 %v1531
    %v1542 = vpop.f32.mrf.mxu0
    %v1543 = vadd.f32 0.0, %v1542
    %v1544 = vpop.f32.mrf.mxu0
    %1545 = vdwg.mxu0
    %1546 = vmatpush.bf16.msra.mxu0 0
    %1547 = vmatpush.bf16.msra.mxu0 0
    %1548 = vmatpush.bf16.msra.mxu0 0
    %1549 = vmatpush.bf16.msra.mxu0 0
    %1550 = vmatpush.bf16.msra.mxu0 %v569
    %1551 = vmatpush.bf16.msra.mxu0 %v567
    %1552 = vmatpush.bf16.msra.mxu0 %v565
    %1553 = vmatpush.bf16.msra.mxu0 %v563
    %1554 = vmatmul.bf16.gmra.mxu0 %v1531
    %v1555 = vpop.f32.mrf.mxu0
    %v1556 = vadd.f32 0.0, %v1555
    %v1557 = vpop.f32.mrf.mxu0
    %1558 = vdwg.mxu0
    %v1560 = vrot.slane %v1556, 1
    %v1561 = vperm.slane %v1556, 0
    %v1562 = vperm.slane %v1560, 0
    %v1565 = vadd.f32 %v1561, %v249
    %v1566 = vadd.f32 %v1562, %v251
    %v1567 = vtanh.pop %v1565
    %v1568 = vtanh.pop %v1566
    %v1569 = vmul.f32 %v1567, %v618
    %v1570 = vmul.f32 %v1568, %v618
    %v1571 = vsel %vm235, %v1569, 0.0
    %1572 = vadd.xlane.f32.xlu0 %v1571
    %v1573 = vpop.xlane.xlu0 %1572
    %v1574 = vsel %vm235, %v1570, 0.0
    %1575 = vadd.xlane.f32.xlu0 %v1574
    %v1576 = vpop.xlane.xlu0 %1575
    %v1577 = vadd.f32 %v1573, %v635
    %v1578 = vadd.f32 %v1576, %v642
    %1581 = vset.pattern.permute.xlu0 0
    %1582 = vperm.xlu0 %1581, %v1577
    %v1583 = vpop.permute.xlu0 %1582
    %1584 = vset.pattern.permute.xlu0 0
    %1585 = vperm.xlu0 %1584, %v1578
    %v1586 = vpop.permute.xlu0 %1585
    %v1587 = vperm.slane %v1583, %v462
    %v1588 = vperm.slane %v1586, %v462
    %v1589 = vsel %vm657, %v1588, %v1587
    %v1591 = vsel %vm660, %v1589, -inf
    %1592 = vmax.xlane.f32.xlu0 %v1591
    %v1593 = vpop.xlane.xlu0 %1592
    %v1595 = vperm.slane %v1593, 0
    %v1596 = vperm.slane %v1593, 1
    %v1599 = vsub.f32 %v1577, %v1595
    %v1600 = vsub.f32 %v1578, %v1596
    %v1601 = vmul.f32 %v1599, 1.442695
    %v1602 = vpow.pop %v1601
    %v1603 = vmul.f32 %v1600, 1.442695
    %v1604 = vpow.pop %v1603
    %1607 = vset.pattern.permute.xlu0 0
    %1608 = vperm.xlu0 %1607, %v1602
    %v1609 = vpop.permute.xlu0 %1608
    %1610 = vset.pattern.permute.xlu0 0
    %1611 = vperm.xlu0 %1610, %v1604
    %v1612 = vpop.permute.xlu0 %1611
    %v1613 = vperm.slane %v1609, %v462
    %v1614 = vperm.slane %v1612, %v462
    %v1615 = vsel %vm657, %v1614, %v1613
    %v1617 = vsel %vm660, %v1615, 0.0
    %1618 = vadd.xlane.f32.xlu0 %v1617
    %v1619 = vpop.xlane.xlu0 %1618
    %v1620 = vrcp.pop %v1619
    %v1622 = vperm.slane %v1620, 0
    %v1623 = vperm.slane %v1620, 1
    %v1626 = vmul.f32 %v1602, %v1622
    %v1627 = vmul.f32 %v1604, %v1623
    %1629 = vset.pattern.permute.xlu0 0
    %1630 = vperm.xlu0 %1629, %v1626
    %v1631 = vpop.permute.xlu0 %1630
    %1634 = vset.pattern.permute.xlu0 0
    %1635 = vperm.xlu0 %1634, %v1627
    %v1636 = vpop.permute.xlu0 %1635
    %v1638 = vmul.f32 %v1631, %v216
    %v1639 = vmul.f32 %v1636, %v217
    %v1640 = vsel %vm235, %v1638, 0.0
    %v1641 = vrot.slane %v1640, 4
    %v1642 = vadd.f32 %v1640, %v1641
    %v1643 = vrot.slane %v1642, 2
    %v1644 = vadd.f32 %v1642, %v1643
    %v1645 = vrot.slane %v1644, 1
    %v1646 = vadd.f32 %v1644, %v1645
    %v1647 = vsel %vm235, %v1639, 0.0
    %v1648 = vrot.slane %v1647, 4
    %v1649 = vadd.f32 %v1647, %v1648
    %v1650 = vrot.slane %v1649, 2
    %v1651 = vadd.f32 %v1649, %v1650
    %v1652 = vrot.slane %v1651, 1
    %v1653 = vadd.f32 %v1651, %v1652
    %v1654 = vpack.c.bf16 %v1646, %v1646
    %v1655 = vpack.c.bf16 %v1653, %v1653
    %v1658 = vunpack.c.l.b16 %v1654
    %v1659 = vunpack.c.l.b16 %v1655
    %v1660 = vsel %vm657, %v1659, %v1658
    %v1661 = vpack.c.b16 %v1660, %v1660
    %v1663 = vsel %vm235, %v1661, 0
    %1665 = vmatpush.bf16.msra.mxu0 0
    %1666 = vmatpush.bf16.msra.mxu0 0
    %1667 = vmatpush.bf16.msra.mxu0 0
    %1668 = vmatpush.bf16.msra.mxu0 0
    %1669 = vmatpush.bf16.msra.mxu0 0
    %1670 = vmatpush.bf16.msra.mxu0 0
    %1671 = vmatpush.bf16.msra.mxu0 %v741
    %1672 = vmatpush.bf16.msra.mxu0 %v740
    %1673 = vmatmul.bf16.gmra.mxu0 %v1663
    %v1674 = vpop.f32.mrf.mxu0
    %v1675 = vadd.f32 0.0, %v1674
    %v1676 = vpop.f32.mrf.mxu0
    %1677 = vdwg.mxu0
    %v1678 = vadd.f32 %v1543, %v1675
    %v1679 = vadd.f32 %v1678, %v762
    %v1680 = vmul.f32 %v1679, %v466
    %v1681 = vtanh.pop %v1680
    %v1682 = vmul.f32 %v1681, %v466
    %v1683 = vadd.f32 %v1682, %v467
    %v1684 = vmul.f32 %v1683, %v1467
    %1686 = vrot.lane.b32.xlu0 %v1683, 64
    %v1687 = vpop.permute.xlu0 %1686
    %v1689 = vmul.f32 %v1683, %v1687
    %1691 = vrot.lane.b32.xlu0 %v1689, 32
    %v1692 = vpop.permute.xlu0 %1691
    %v1694 = vadd.f32 %v1684, %v1692
    %v1695 = vtanh.pop %v1694
    %1697 = vrot.lane.b32.xlu0 %v1695, 64
    %v1698 = vpop.permute.xlu0 %1697
    %v1700 = vmul.f32 %v1683, %v1698
    %1702 = vrot.lane.b32.xlu0 %v1700, 32
    %v1703 = vpop.permute.xlu0 %1702
    %1705 = vrot.lane.b32.xlu0 %v1520, 64
    %v1706 = vpop.permute.xlu0 %1705
    %v1708 = vsel %vm235, %v1703, %v1706
    %v1709 = vpack.c.bf16 %v1708, %v1708
    %v1711 = vrot.slane %v400, 2
    %v1714 = vsel %vm493, %v1709, 0
    %1716 = vmatpush.bf16.msra.mxu0 0
    %1717 = vmatpush.bf16.msra.mxu0 0
    %1718 = vmatpush.bf16.msra.mxu0 0
    %1719 = vmatpush.bf16.msra.mxu0 0
    %1720 = vmatpush.bf16.msra.mxu0 %v488
    %1721 = vmatpush.bf16.msra.mxu0 %v487
    %1722 = vmatpush.bf16.msra.mxu0 %v486
    %1723 = vmatpush.bf16.msra.mxu0 %v485
    %1724 = vmatmul.bf16.gmra.mxu0 %v1714
    %v1725 = vpop.f32.mrf.mxu0
    %v1726 = vadd.f32 %v1711, %v1725
    %v1727 = vpop.f32.mrf.mxu0
    %1728 = vdwg.mxu0
    %v1729 = vadd.f32 %v1726, %v437
    %v1730 = vmul.f32 %v1729, %v466
    %v1731 = vtanh.pop %v1730
    %v1732 = vmul.f32 %v1731, %v466
    %v1733 = vadd.f32 %v1732, %v467
    %v1734 = vmul.f32 %v1733, %v1514
    %1736 = vrot.lane.b32.xlu0 %v1733, 64
    %v1737 = vpop.permute.xlu0 %1736
    %v1739 = vmul.f32 %v1733, %v1737
    %1741 = vrot.lane.b32.xlu0 %v1739, 32
    %v1742 = vpop.permute.xlu0 %1741
    %v1744 = vadd.f32 %v1734, %v1742
    %v1745 = vtanh.pop %v1744
    %1747 = vrot.lane.b32.xlu0 %v1745, 64
    %v1748 = vpop.permute.xlu0 %1747
    %v1750 = vmul.f32 %v1733, %v1748
    %1752 = vrot.lane.b32.xlu0 %v1750, 32
    %v1753 = vpop.permute.xlu0 %1752
    %1755 = vrot.lane.b32.xlu0 %v1700, 64
    %v1756 = vpop.permute.xlu0 %1755
    %v1758 = vsel %vm235, %v1753, %v1756
    %v1759 = vpack.c.bf16 %v1758, %v1758
    %v1761 = vsel %vm493, %v1759, 0
    %1763 = vmatpush.bf16.msra.mxu0 0
    %1764 = vmatpush.bf16.msra.mxu0 0
    %1765 = vmatpush.bf16.msra.mxu0 0
    %1766 = vmatpush.bf16.msra.mxu0 0
    %1767 = vmatpush.bf16.msra.mxu0 %v568
    %1768 = vmatpush.bf16.msra.mxu0 %v566
    %1769 = vmatpush.bf16.msra.mxu0 %v564
    %1770 = vmatpush.bf16.msra.mxu0 %v562
    %1771 = vmatmul.bf16.gmra.mxu0 %v1761
    %v1772 = vpop.f32.mrf.mxu0
    %v1773 = vadd.f32 0.0, %v1772
    %v1774 = vpop.f32.mrf.mxu0
    %1775 = vdwg.mxu0
    %1776 = vmatpush.bf16.msra.mxu0 0
    %1777 = vmatpush.bf16.msra.mxu0 0
    %1778 = vmatpush.bf16.msra.mxu0 0
    %1779 = vmatpush.bf16.msra.mxu0 0
    %1780 = vmatpush.bf16.msra.mxu0 %v569
    %1781 = vmatpush.bf16.msra.mxu0 %v567
    %1782 = vmatpush.bf16.msra.mxu0 %v565
    %1783 = vmatpush.bf16.msra.mxu0 %v563
    %1784 = vmatmul.bf16.gmra.mxu0 %v1761
    %v1785 = vpop.f32.mrf.mxu0
    %v1786 = vadd.f32 0.0, %v1785
    %v1787 = vpop.f32.mrf.mxu0
    %1788 = vdwg.mxu0
    %v1790 = vrot.slane %v1786, 1
    %v1791 = vperm.slane %v1786, 0
    %v1792 = vperm.slane %v1790, 0
    %v1795 = vadd.f32 %v1791, %v249
    %v1796 = vadd.f32 %v1792, %v251
    %v1797 = vtanh.pop %v1795
    %v1798 = vtanh.pop %v1796
    %v1799 = vmul.f32 %v1797, %v618
    %v1800 = vmul.f32 %v1798, %v618
    %v1801 = vsel %vm235, %v1799, 0.0
    %1802 = vadd.xlane.f32.xlu0 %v1801
    %v1803 = vpop.xlane.xlu0 %1802
    %v1804 = vsel %vm235, %v1800, 0.0
    %1805 = vadd.xlane.f32.xlu0 %v1804
    %v1806 = vpop.xlane.xlu0 %1805
    %v1807 = vadd.f32 %v1803, %v635
    %v1808 = vadd.f32 %v1806, %v642
    %1811 = vset.pattern.permute.xlu0 0
    %1812 = vperm.xlu0 %1811, %v1807
    %v1813 = vpop.permute.xlu0 %1812
    %1814 = vset.pattern.permute.xlu0 0
    %1815 = vperm.xlu0 %1814, %v1808
    %v1816 = vpop.permute.xlu0 %1815
    %v1817 = vperm.slane %v1813, %v462
    %v1818 = vperm.slane %v1816, %v462
    %v1819 = vsel %vm657, %v1818, %v1817
    %v1821 = vsel %vm660, %v1819, -inf
    %1822 = vmax.xlane.f32.xlu0 %v1821
    %v1823 = vpop.xlane.xlu0 %1822
    %v1825 = vperm.slane %v1823, 0
    %v1826 = vperm.slane %v1823, 1
    %v1829 = vsub.f32 %v1807, %v1825
    %v1830 = vsub.f32 %v1808, %v1826
    %v1831 = vmul.f32 %v1829, 1.442695
    %v1832 = vpow.pop %v1831
    %v1833 = vmul.f32 %v1830, 1.442695
    %v1834 = vpow.pop %v1833
    %1837 = vset.pattern.permute.xlu0 0
    %1838 = vperm.xlu0 %1837, %v1832
    %v1839 = vpop.permute.xlu0 %1838
    %1840 = vset.pattern.permute.xlu0 0
    %1841 = vperm.xlu0 %1840, %v1834
    %v1842 = vpop.permute.xlu0 %1841
    %v1843 = vperm.slane %v1839, %v462
    %v1844 = vperm.slane %v1842, %v462
    %v1845 = vsel %vm657, %v1844, %v1843
    %v1847 = vsel %vm660, %v1845, 0.0
    %1848 = vadd.xlane.f32.xlu0 %v1847
    %v1849 = vpop.xlane.xlu0 %1848
    %v1850 = vrcp.pop %v1849
    %v1852 = vperm.slane %v1850, 0
    %v1853 = vperm.slane %v1850, 1
    %v1856 = vmul.f32 %v1832, %v1852
    %v1857 = vmul.f32 %v1834, %v1853
    %1859 = vset.pattern.permute.xlu0 0
    %1860 = vperm.xlu0 %1859, %v1856
    %v1861 = vpop.permute.xlu0 %1860
    %1864 = vset.pattern.permute.xlu0 0
    %1865 = vperm.xlu0 %1864, %v1857
    %v1866 = vpop.permute.xlu0 %1865
    %v1868 = vmul.f32 %v1861, %v216
    %v1869 = vmul.f32 %v1866, %v217
    %v1870 = vsel %vm235, %v1868, 0.0
    %v1871 = vrot.slane %v1870, 4
    %v1872 = vadd.f32 %v1870, %v1871
    %v1873 = vrot.slane %v1872, 2
    %v1874 = vadd.f32 %v1872, %v1873
    %v1875 = vrot.slane %v1874, 1
    %v1876 = vadd.f32 %v1874, %v1875
    %v1877 = vsel %vm235, %v1869, 0.0
    %v1878 = vrot.slane %v1877, 4
    %v1879 = vadd.f32 %v1877, %v1878
    %v1880 = vrot.slane %v1879, 2
    %v1881 = vadd.f32 %v1879, %v1880
    %v1882 = vrot.slane %v1881, 1
    %v1883 = vadd.f32 %v1881, %v1882
    %v1884 = vpack.c.bf16 %v1876, %v1876
    %v1885 = vpack.c.bf16 %v1883, %v1883
    %v1888 = vunpack.c.l.b16 %v1884
    %v1889 = vunpack.c.l.b16 %v1885
    %v1890 = vsel %vm657, %v1889, %v1888
    %v1891 = vpack.c.b16 %v1890, %v1890
    %v1893 = vsel %vm235, %v1891, 0
    %1895 = vmatpush.bf16.msra.mxu0 0
    %1896 = vmatpush.bf16.msra.mxu0 0
    %1897 = vmatpush.bf16.msra.mxu0 0
    %1898 = vmatpush.bf16.msra.mxu0 0
    %1899 = vmatpush.bf16.msra.mxu0 0
    %1900 = vmatpush.bf16.msra.mxu0 0
    %1901 = vmatpush.bf16.msra.mxu0 %v741
    %1902 = vmatpush.bf16.msra.mxu0 %v740
    %1903 = vmatmul.bf16.gmra.mxu0 %v1893
    %v1904 = vpop.f32.mrf.mxu0
    %v1905 = vadd.f32 0.0, %v1904
    %v1906 = vpop.f32.mrf.mxu0
    %1907 = vdwg.mxu0
    %v1908 = vadd.f32 %v1773, %v1905
    %v1909 = vadd.f32 %v1908, %v762
    %v1910 = vmul.f32 %v1909, %v466
    %v1911 = vtanh.pop %v1910
    %v1912 = vmul.f32 %v1911, %v466
    %v1913 = vadd.f32 %v1912, %v467
    %v1914 = vmul.f32 %v1913, %v1694
    %1916 = vrot.lane.b32.xlu0 %v1913, 64
    %v1917 = vpop.permute.xlu0 %1916
    %v1919 = vmul.f32 %v1913, %v1917
    %1921 = vrot.lane.b32.xlu0 %v1919, 32
    %v1922 = vpop.permute.xlu0 %1921
    %v1924 = vadd.f32 %v1914, %v1922
    %v1925 = vtanh.pop %v1924
    %1927 = vrot.lane.b32.xlu0 %v1925, 64
    %v1928 = vpop.permute.xlu0 %1927
    %v1930 = vmul.f32 %v1913, %v1928
    %1932 = vrot.lane.b32.xlu0 %v1930, 32
    %v1933 = vpop.permute.xlu0 %1932
    %1935 = vrot.lane.b32.xlu0 %v1750, 64
    %v1936 = vpop.permute.xlu0 %1935
    %v1938 = vsel %vm235, %v1933, %v1936
    %v1939 = vpack.c.bf16 %v1938, %v1938
    %v1940 = vrot.slane %v400, 4
    %v1943 = vsel %vm493, %v1939, 0
    %1945 = vmatpush.bf16.msra.mxu0 0
    %1946 = vmatpush.bf16.msra.mxu0 0
    %1947 = vmatpush.bf16.msra.mxu0 0
    %1948 = vmatpush.bf16.msra.mxu0 0
    %1949 = vmatpush.bf16.msra.mxu0 %v488
    %1950 = vmatpush.bf16.msra.mxu0 %v487
    %1951 = vmatpush.bf16.msra.mxu0 %v486
    %1952 = vmatpush.bf16.msra.mxu0 %v485
    %1953 = vmatmul.bf16.gmra.mxu0 %v1943
    %v1954 = vpop.f32.mrf.mxu0
    %v1955 = vadd.f32 %v1940, %v1954
    %v1956 = vpop.f32.mrf.mxu0
    %1957 = vdwg.mxu0
    %v1958 = vadd.f32 %v1955, %v437
    %v1959 = vmul.f32 %v1958, %v466
    %v1960 = vtanh.pop %v1959
    %v1961 = vmul.f32 %v1960, %v466
    %v1962 = vadd.f32 %v1961, %v467
    %v1963 = vmul.f32 %v1962, %v1744
    %1965 = vrot.lane.b32.xlu0 %v1962, 64
    %v1966 = vpop.permute.xlu0 %1965
    %v1968 = vmul.f32 %v1962, %v1966
    %1970 = vrot.lane.b32.xlu0 %v1968, 32
    %v1971 = vpop.permute.xlu0 %1970
    %v1973 = vadd.f32 %v1963, %v1971
    %v1974 = vtanh.pop %v1973
    %1976 = vrot.lane.b32.xlu0 %v1974, 64
    %v1977 = vpop.permute.xlu0 %1976
    %v1979 = vmul.f32 %v1962, %v1977
    %1981 = vrot.lane.b32.xlu0 %v1979, 32
    %v1982 = vpop.permute.xlu0 %1981
    %1984 = vrot.lane.b32.xlu0 %v1930, 64
    %v1985 = vpop.permute.xlu0 %1984
    %v1987 = vsel %vm235, %v1982, %v1985
    %v1988 = vpack.c.bf16 %v1987, %v1987
    %v1990 = vsel %vm493, %v1988, 0
    %1992 = vmatpush.bf16.msra.mxu0 0
    %1993 = vmatpush.bf16.msra.mxu0 0
    %1994 = vmatpush.bf16.msra.mxu0 0
    %1995 = vmatpush.bf16.msra.mxu0 0
    %1996 = vmatpush.bf16.msra.mxu0 %v568
    %1997 = vmatpush.bf16.msra.mxu0 %v566
    %1998 = vmatpush.bf16.msra.mxu0 %v564
    %1999 = vmatpush.bf16.msra.mxu0 %v562
    %2000 = vmatmul.bf16.gmra.mxu0 %v1990
    %v2001 = vpop.f32.mrf.mxu0
    %v2002 = vadd.f32 0.0, %v2001
    %v2003 = vpop.f32.mrf.mxu0
    %2004 = vdwg.mxu0
    %2005 = vmatpush.bf16.msra.mxu0 0
    %2006 = vmatpush.bf16.msra.mxu0 0
    %2007 = vmatpush.bf16.msra.mxu0 0
    %2008 = vmatpush.bf16.msra.mxu0 0
    %2009 = vmatpush.bf16.msra.mxu0 %v569
    %2010 = vmatpush.bf16.msra.mxu0 %v567
    %2011 = vmatpush.bf16.msra.mxu0 %v565
    %2012 = vmatpush.bf16.msra.mxu0 %v563
    %2013 = vmatmul.bf16.gmra.mxu0 %v1990
    %v2014 = vpop.f32.mrf.mxu0
    %v2015 = vadd.f32 0.0, %v2014
    %v2016 = vpop.f32.mrf.mxu0
    %2017 = vdwg.mxu0
    %v2019 = vrot.slane %v2015, 1
    %v2020 = vperm.slane %v2015, 0
    %v2021 = vperm.slane %v2019, 0
    %v2024 = vadd.f32 %v2020, %v249
    %v2025 = vadd.f32 %v2021, %v251
    %v2026 = vtanh.pop %v2024
    %v2027 = vtanh.pop %v2025
    %v2028 = vmul.f32 %v2026, %v618
    %v2029 = vmul.f32 %v2027, %v618
    %v2030 = vsel %vm235, %v2028, 0.0
    %2031 = vadd.xlane.f32.xlu0 %v2030
    %v2032 = vpop.xlane.xlu0 %2031
    %v2033 = vsel %vm235, %v2029, 0.0
    %2034 = vadd.xlane.f32.xlu0 %v2033
    %v2035 = vpop.xlane.xlu0 %2034
    %v2036 = vadd.f32 %v2032, %v635
    %v2037 = vadd.f32 %v2035, %v642
    %2040 = vset.pattern.permute.xlu0 0
    %2041 = vperm.xlu0 %2040, %v2036
    %v2042 = vpop.permute.xlu0 %2041
    %2043 = vset.pattern.permute.xlu0 0
    %2044 = vperm.xlu0 %2043, %v2037
    %v2045 = vpop.permute.xlu0 %2044
    %v2046 = vperm.slane %v2042, %v462
    %v2047 = vperm.slane %v2045, %v462
    %v2048 = vsel %vm657, %v2047, %v2046
    %v2050 = vsel %vm660, %v2048, -inf
    %2051 = vmax.xlane.f32.xlu0 %v2050
    %v2052 = vpop.xlane.xlu0 %2051
    %v2054 = vperm.slane %v2052, 0
    %v2055 = vperm.slane %v2052, 1
    %v2058 = vsub.f32 %v2036, %v2054
    %v2059 = vsub.f32 %v2037, %v2055
    %v2060 = vmul.f32 %v2058, 1.442695
    %v2061 = vpow.pop %v2060
    %v2062 = vmul.f32 %v2059, 1.442695
    %v2063 = vpow.pop %v2062
    %2066 = vset.pattern.permute.xlu0 0
    %2067 = vperm.xlu0 %2066, %v2061
    %v2068 = vpop.permute.xlu0 %2067
    %2069 = vset.pattern.permute.xlu0 0
    %2070 = vperm.xlu0 %2069, %v2063
    %v2071 = vpop.permute.xlu0 %2070
    %v2072 = vperm.slane %v2068, %v462
    %v2073 = vperm.slane %v2071, %v462
    %v2074 = vsel %vm657, %v2073, %v2072
    %v2076 = vsel %vm660, %v2074, 0.0
    %2077 = vadd.xlane.f32.xlu0 %v2076
    %v2078 = vpop.xlane.xlu0 %2077
    %v2079 = vrcp.pop %v2078
    %v2081 = vperm.slane %v2079, 0
    %v2082 = vperm.slane %v2079, 1
    %v2085 = vmul.f32 %v2061, %v2081
    %v2086 = vmul.f32 %v2063, %v2082
    %2088 = vset.pattern.permute.xlu0 0
    %2089 = vperm.xlu0 %2088, %v2085
    %v2090 = vpop.permute.xlu0 %2089
    %2093 = vset.pattern.permute.xlu0 0
    %2094 = vperm.xlu0 %2093, %v2086
    %v2095 = vpop.permute.xlu0 %2094
    %v2097 = vmul.f32 %v2090, %v216
    %v2098 = vmul.f32 %v2095, %v217
    %v2099 = vsel %vm235, %v2097, 0.0
    %v2100 = vrot.slane %v2099, 4
    %v2101 = vadd.f32 %v2099, %v2100
    %v2102 = vrot.slane %v2101, 2
    %v2103 = vadd.f32 %v2101, %v2102
    %v2104 = vrot.slane %v2103, 1
    %v2105 = vadd.f32 %v2103, %v2104
    %v2106 = vsel %vm235, %v2098, 0.0
    %v2107 = vrot.slane %v2106, 4
    %v2108 = vadd.f32 %v2106, %v2107
    %v2109 = vrot.slane %v2108, 2
    %v2110 = vadd.f32 %v2108, %v2109
    %v2111 = vrot.slane %v2110, 1
    %v2112 = vadd.f32 %v2110, %v2111
    %v2113 = vpack.c.bf16 %v2105, %v2105
    %v2114 = vpack.c.bf16 %v2112, %v2112
    %v2117 = vunpack.c.l.b16 %v2113
    %v2118 = vunpack.c.l.b16 %v2114
    %v2119 = vsel %vm657, %v2118, %v2117
    %v2120 = vpack.c.b16 %v2119, %v2119
    %v2122 = vsel %vm235, %v2120, 0
    %2124 = vmatpush.bf16.msra.mxu0 0
    %2125 = vmatpush.bf16.msra.mxu0 0
    %2126 = vmatpush.bf16.msra.mxu0 0
    %2127 = vmatpush.bf16.msra.mxu0 0
    %2128 = vmatpush.bf16.msra.mxu0 0
    %2129 = vmatpush.bf16.msra.mxu0 0
    %2130 = vmatpush.bf16.msra.mxu0 %v741
    %2131 = vmatpush.bf16.msra.mxu0 %v740
    %2132 = vmatmul.bf16.gmra.mxu0 %v2122
    %v2133 = vpop.f32.mrf.mxu0
    %v2134 = vadd.f32 0.0, %v2133
    %v2135 = vpop.f32.mrf.mxu0
    %2136 = vdwg.mxu0
    %v2137 = vadd.f32 %v2002, %v2134
    %v2138 = vadd.f32 %v2137, %v762
    %v2139 = vmul.f32 %v2138, %v466
    %v2140 = vtanh.pop %v2139
    %v2141 = vmul.f32 %v2140, %v466
    %v2142 = vadd.f32 %v2141, %v467
    %v2143 = vmul.f32 %v2142, %v1924
    %2145 = vrot.lane.b32.xlu0 %v2142, 64
    %v2146 = vpop.permute.xlu0 %2145
    %v2148 = vmul.f32 %v2142, %v2146
    %2150 = vrot.lane.b32.xlu0 %v2148, 32
    %v2151 = vpop.permute.xlu0 %2150
    %v2153 = vadd.f32 %v2143, %v2151
    %v2154 = vtanh.pop %v2153
    %2156 = vrot.lane.b32.xlu0 %v2154, 64
    %v2157 = vpop.permute.xlu0 %2156
    %v2159 = vmul.f32 %v2142, %v2157
    %2161 = vrot.lane.b32.xlu0 %v2159, 32
    %v2162 = vpop.permute.xlu0 %2161
    %2164 = vrot.lane.b32.xlu0 %v1979, 64
    %v2165 = vpop.permute.xlu0 %2164
    %v2167 = vsel %vm235, %v2162, %v2165
    %v2168 = vpack.c.bf16 %v2167, %v2167
    %v2169 = vrot.slane %v400, 6
    %v2172 = vsel %vm493, %v2168, 0
    %2174 = vmatpush.bf16.msra.mxu0 0
    %2175 = vmatpush.bf16.msra.mxu0 0
    %2176 = vmatpush.bf16.msra.mxu0 0
    %2177 = vmatpush.bf16.msra.mxu0 0
    %2178 = vmatpush.bf16.msra.mxu0 %v488
    %2179 = vmatpush.bf16.msra.mxu0 %v487
    %2180 = vmatpush.bf16.msra.mxu0 %v486
    %2181 = vmatpush.bf16.msra.mxu0 %v485
    %2182 = vmatmul.bf16.gmra.mxu0 %v2172
    %v2183 = vpop.f32.mrf.mxu0
    %v2184 = vadd.f32 %v2169, %v2183
    %v2185 = vpop.f32.mrf.mxu0
    %2186 = vdwg.mxu0
    %v2187 = vadd.f32 %v2184, %v437
    %v2188 = vmul.f32 %v2187, %v466
    %v2189 = vtanh.pop %v2188
    %v2190 = vmul.f32 %v2189, %v466
    %v2191 = vadd.f32 %v2190, %v467
    %v2192 = vmul.f32 %v2191, %v1973
    %2194 = vrot.lane.b32.xlu0 %v2191, 64
    %v2195 = vpop.permute.xlu0 %2194
    %v2197 = vmul.f32 %v2191, %v2195
    %2199 = vrot.lane.b32.xlu0 %v2197, 32
    %v2200 = vpop.permute.xlu0 %2199
    %v2202 = vadd.f32 %v2192, %v2200
    %v2203 = vtanh.pop %v2202
    %2205 = vrot.lane.b32.xlu0 %v2203, 64
    %v2206 = vpop.permute.xlu0 %2205
    %v2208 = vmul.f32 %v2191, %v2206
    %2210 = vrot.lane.b32.xlu0 %v2208, 32
    %v2211 = vpop.permute.xlu0 %2210
    %2213 = vrot.lane.b32.xlu0 %v2159, 64
    %v2214 = vpop.permute.xlu0 %2213
    %v2216 = vsel %vm235, %v2211, %v2214
    %v2217 = vpack.c.bf16 %v2216, %v2216
    %v2219 = vsel %vm493, %v2217, 0
    %2221 = vmatpush.bf16.msra.mxu0 0
    %2222 = vmatpush.bf16.msra.mxu0 0
    %2223 = vmatpush.bf16.msra.mxu0 0
    %2224 = vmatpush.bf16.msra.mxu0 0
    %2225 = vmatpush.bf16.msra.mxu0 %v568
    %2226 = vmatpush.bf16.msra.mxu0 %v566
    %2227 = vmatpush.bf16.msra.mxu0 %v564
    %2228 = vmatpush.bf16.msra.mxu0 %v562
    %2229 = vmatmul.bf16.gmra.mxu0 %v2219
    %v2230 = vpop.f32.mrf.mxu0
    %v2231 = vadd.f32 0.0, %v2230
    %v2232 = vpop.f32.mrf.mxu0
    %2233 = vdwg.mxu0
    %2234 = vmatpush.bf16.msra.mxu0 0
    %2235 = vmatpush.bf16.msra.mxu0 0
    %2236 = vmatpush.bf16.msra.mxu0 0
    %2237 = vmatpush.bf16.msra.mxu0 0
    %2238 = vmatpush.bf16.msra.mxu0 %v569
    %2239 = vmatpush.bf16.msra.mxu0 %v567
    %2240 = vmatpush.bf16.msra.mxu0 %v565
    %2241 = vmatpush.bf16.msra.mxu0 %v563
    %2242 = vmatmul.bf16.gmra.mxu0 %v2219
    %v2243 = vpop.f32.mrf.mxu0
    %v2244 = vadd.f32 0.0, %v2243
    %v2245 = vpop.f32.mrf.mxu0
    %2246 = vdwg.mxu0
    %v2248 = vrot.slane %v2244, 1
    %v2249 = vperm.slane %v2244, 0
    %v2250 = vperm.slane %v2248, 0
    %v2253 = vadd.f32 %v2249, %v249
    %v2254 = vadd.f32 %v2250, %v251
    %v2255 = vtanh.pop %v2253
    %v2256 = vtanh.pop %v2254
    %v2257 = vmul.f32 %v2255, %v618
    %v2258 = vmul.f32 %v2256, %v618
    %v2259 = vsel %vm235, %v2257, 0.0
    %2260 = vadd.xlane.f32.xlu0 %v2259
    %v2261 = vpop.xlane.xlu0 %2260
    %v2262 = vsel %vm235, %v2258, 0.0
    %2263 = vadd.xlane.f32.xlu0 %v2262
    %v2264 = vpop.xlane.xlu0 %2263
    %v2265 = vadd.f32 %v2261, %v635
    %v2266 = vadd.f32 %v2264, %v642
    %2269 = vset.pattern.permute.xlu0 0
    %2270 = vperm.xlu0 %2269, %v2265
    %v2271 = vpop.permute.xlu0 %2270
    %2272 = vset.pattern.permute.xlu0 0
    %2273 = vperm.xlu0 %2272, %v2266
    %v2274 = vpop.permute.xlu0 %2273
    %v2275 = vperm.slane %v2271, %v462
    %v2276 = vperm.slane %v2274, %v462
    %v2277 = vsel %vm657, %v2276, %v2275
    %v2279 = vsel %vm660, %v2277, -inf
    %2280 = vmax.xlane.f32.xlu0 %v2279
    %v2281 = vpop.xlane.xlu0 %2280
    %v2283 = vperm.slane %v2281, 0
    %v2284 = vperm.slane %v2281, 1
    %v2287 = vsub.f32 %v2265, %v2283
    %v2288 = vsub.f32 %v2266, %v2284
    %v2289 = vmul.f32 %v2287, 1.442695
    %v2290 = vpow.pop %v2289
    %v2291 = vmul.f32 %v2288, 1.442695
    %v2292 = vpow.pop %v2291
    %2295 = vset.pattern.permute.xlu0 0
    %2296 = vperm.xlu0 %2295, %v2290
    %v2297 = vpop.permute.xlu0 %2296
    %2298 = vset.pattern.permute.xlu0 0
    %2299 = vperm.xlu0 %2298, %v2292
    %v2300 = vpop.permute.xlu0 %2299
    %v2301 = vperm.slane %v2297, %v462
    %v2302 = vperm.slane %v2300, %v462
    %v2303 = vsel %vm657, %v2302, %v2301
    %v2305 = vsel %vm660, %v2303, 0.0
    %2306 = vadd.xlane.f32.xlu0 %v2305
    %v2307 = vpop.xlane.xlu0 %2306
    %v2308 = vrcp.pop %v2307
    %v2310 = vperm.slane %v2308, 0
    %v2311 = vperm.slane %v2308, 1
    %v2314 = vmul.f32 %v2290, %v2310
    %v2315 = vmul.f32 %v2292, %v2311
    %2317 = vset.pattern.permute.xlu0 0
    %2318 = vperm.xlu0 %2317, %v2314
    %v2319 = vpop.permute.xlu0 %2318
    %2322 = vset.pattern.permute.xlu0 0
    %2323 = vperm.xlu0 %2322, %v2315
    %v2324 = vpop.permute.xlu0 %2323
    %v2326 = vmul.f32 %v2319, %v216
    %v2327 = vmul.f32 %v2324, %v217
    %v2328 = vsel %vm235, %v2326, 0.0
    %v2329 = vrot.slane %v2328, 4
    %v2330 = vadd.f32 %v2328, %v2329
    %v2331 = vrot.slane %v2330, 2
    %v2332 = vadd.f32 %v2330, %v2331
    %v2333 = vrot.slane %v2332, 1
    %v2334 = vadd.f32 %v2332, %v2333
    %v2335 = vsel %vm235, %v2327, 0.0
    %v2336 = vrot.slane %v2335, 4
    %v2337 = vadd.f32 %v2335, %v2336
    %v2338 = vrot.slane %v2337, 2
    %v2339 = vadd.f32 %v2337, %v2338
    %v2340 = vrot.slane %v2339, 1
    %v2341 = vadd.f32 %v2339, %v2340
    %v2342 = vpack.c.bf16 %v2334, %v2334
    %v2343 = vpack.c.bf16 %v2341, %v2341
    %v2346 = vunpack.c.l.b16 %v2342
    %v2347 = vunpack.c.l.b16 %v2343
    %v2348 = vsel %vm657, %v2347, %v2346
    %v2349 = vpack.c.b16 %v2348, %v2348
    %v2351 = vsel %vm235, %v2349, 0
    %2353 = vmatpush.bf16.msra.mxu0 0
    %2354 = vmatpush.bf16.msra.mxu0 0
    %2355 = vmatpush.bf16.msra.mxu0 0
    %2356 = vmatpush.bf16.msra.mxu0 0
    %2357 = vmatpush.bf16.msra.mxu0 0
    %2358 = vmatpush.bf16.msra.mxu0 0
    %2359 = vmatpush.bf16.msra.mxu0 %v741
    %2360 = vmatpush.bf16.msra.mxu0 %v740
    %2361 = vmatmul.bf16.gmra.mxu0 %v2351
    %v2362 = vpop.f32.mrf.mxu0
    %v2363 = vadd.f32 0.0, %v2362
    %v2364 = vpop.f32.mrf.mxu0
    %2365 = vdwg.mxu0
    %v2366 = vadd.f32 %v2231, %v2363
    %v2367 = vadd.f32 %v2366, %v762
    %v2368 = vmul.f32 %v2367, %v466
    %v2369 = vtanh.pop %v2368
    %v2370 = vmul.f32 %v2369, %v466
    %v2371 = vadd.f32 %v2370, %v467
    %v2372 = vmul.f32 %v2371, %v2153
    %2374 = vrot.lane.b32.xlu0 %v2371, 64
    %v2375 = vpop.permute.xlu0 %2374
    %v2377 = vmul.f32 %v2371, %v2375
    %2379 = vrot.lane.b32.xlu0 %v2377, 32
    %v2380 = vpop.permute.xlu0 %2379
    %v2382 = vadd.f32 %v2372, %v2380
    %v2383 = vtanh.pop %v2382
    %2385 = vrot.lane.b32.xlu0 %v2383, 64
    %v2386 = vpop.permute.xlu0 %2385
    %v2388 = vmul.f32 %v2371, %v2386
    %v2389 = vrot.slane %v1015, 7
    %v2391 = vrot.slane %v1244, 6
    %v2393 = vrot.slane %v1473, 5
    %v2395 = vrot.slane %v1700, 4
    %v2397 = vrot.slane %v1930, 3
    %v2399 = vrot.slane %v2159, 2
    %v2402 = vrot.slane %v2388, 1
    %v2404 = vsel %vm347, %v785, %v2389
    %v2405 = vsel %vm349, %v2404, %v2391
    %v2406 = vsel %vm351, %v2405, %v2393
    %v2407 = vsel %vm353, %v2406, %v2395
    %v2408 = vsel %vm355, %v2407, %v2397
    %v2409 = vsel %vm357, %v2408, %v2399
    %v2410 = vsel %vm359, %v2409, %v2402
    %v2411 = vrot.slane %v785, 1
    %v2413 = vrot.slane %v1244, 7
    %v2415 = vrot.slane %v1473, 6
    %v2417 = vrot.slane %v1700, 5
    %v2419 = vrot.slane %v1930, 4
    %v2421 = vrot.slane %v2159, 3
    %v2423 = vrot.slane %v2388, 2
    %v2425 = vsel %vm347, %v2411, %v1015
    %v2426 = vsel %vm349, %v2425, %v2413
    %v2427 = vsel %vm351, %v2426, %v2415
    %v2428 = vsel %vm353, %v2427, %v2417
    %v2429 = vsel %vm355, %v2428, %v2419
    %v2430 = vsel %vm357, %v2429, %v2421
    %v2431 = vsel %vm359, %v2430, %v2423
    %v2432 = vpack.c.bf16 %v2431, %v2410
    %v2433 = vld [vmem:[#allocation18] sm:$0xf]
    %v2434 = vld [vmem:[#allocation18 + $0x4] sm:$0xf]
    %v2435 = vld [vmem:[#allocation18 + $0x8] sm:$0xf]
    %v2436 = vld [vmem:[#allocation18 + $0xc] sm:$0xf]
    %v2437 = vld [vmem:[#allocation19] sm:$0x1]
    %v2439 = vperm.slane %v2437, 0
    %2442 = vrot.lane.b32.xlu0 %v2432, 32
    %v2443 = vpop.permute.xlu0 %2442
    %v2448 = vunpack.c.l.b16 %v2433
    %v2449 = vunpack.c.l.b16 %v2434
    %v2450 = vunpack.c.l.b16 %v2435
    %v2451 = vunpack.c.l.b16 %v2436
    %v2452 = vpack.c.b16 %v2449, %v2448
    %v2453 = vpack.c.b16 %v2451, %v2450
    %v2457 = vsel %vm235, %v2443, 0
    %2459 = vmatpush.bf16.msra.mxu0 0
    %2460 = vmatpush.bf16.msra.mxu0 0
    %2461 = vmatpush.bf16.msra.mxu0 0
    %2462 = vmatpush.bf16.msra.mxu0 0
    %2463 = vmatpush.bf16.msra.mxu0 0
    %2464 = vmatpush.bf16.msra.mxu0 0
    %2465 = vmatpush.bf16.msra.mxu0 %v2453
    %2466 = vmatpush.bf16.msra.mxu0 %v2452
    %2467 = vmatmul.bf16.gmra.mxu0 %v2457
    %v2468 = vpop.f32.mrf.mxu0
    %v2469 = vadd.f32 %v2439, %v2468
    %v2470 = vpop.f32.mrf.mxu0
    %v2471 = vadd.f32 %v2439, %v2470
    %2472 = vdwg.mxu0
    %2473 = vst.msk [vmem:[#allocation21] sm:$0xff] %vm493, %v2469
    %2474 = vst.msk [vmem:[#allocation21 + $0x8] sm:$0xff] %vm493, %v2471
    // Predicated region
    $region110: #{butd_forward.1} parent=1 // pred_check
      _
    $region111: #{butd_forward.1} parent=1 // pred_check_branch
      %2476 = sbr.rel (0) target = $region113
    $region112: #{butd_forward.1} parent=1 // pred_region
      %2478 = vsyncadd [#allocation4], 0
      %s2479 = sshll.u32 [#allocation21], 4
      %s2480 = int_to_ptr.vmem [resolvable:$true] %s2479
      %s2481 = sshll.u32 %s16, 4
      %s2482 = int_to_ptr.hbm [resolvable:$true] %s2481
      %2487 = dma.vmem_to_hbm [thread:$0]  %s2480, 256, %s2482, [#allocation4], 128, 128, 8
    $region113: #{butd_forward.1} parent=1 // pred_fallthru
      _
    // Predicated region
    $region114: #{butd_forward.1} parent=1 // pred_check
      _
    $region115: #{butd_forward.1} parent=1 // pred_check_branch
      %2489 = sbr.rel (0) target = $region117
    $region116: #{butd_forward.1} parent=1 // pred_region
      %2491 = dma.done [#allocation4], 256
    $region117: #{butd_forward.1} parent=1 // pred_fallthru
      _
    %2492 = vsyncpa [#allocation3], 1
    %2493 = vsyncpa [#allocation8], 1
    %2494 = vsyncpa [#allocation11], 1
    %2495 = vsyncpa [#allocation14], 1
    %2496 = vsyncpa [#allocation17], 1
    %2497 = vsyncpa [#allocation20], 1
    %2498 = vsyncpa [#allocation4], 1
    %2499 = vsyncpa [#allocation5], 1

</llo_original>
